<compile_context>
chip_gen: v6e
topology: v6e:2x2x1
jax: 0.10.0
libtpu: 0.0.40
codegen_flags: <defaults>
</compile_context>

<pallas_src>
import functools

import jax
import jax.numpy as jnp
from jax.experimental import pallas as pl
from jax.experimental.pallas import tpu as pltpu


_PAD_LEFT = 8  # left halo width of the conv scratch; 8 keeps the interior store sublane-aligned


def _gn_silu(x, gamma, beta, gmat, gmat_t, eps):
    """InflatedGroupNorm + SiLU on one (1, H, W, C) f32 frame.

    gamma/beta: (1, C).  gmat: (C, G) one-hot group membership, gmat_t: (G, C).
    Group statistics are combined with tiny matmuls so everything stays 2-D on TPU.
    """
    _, h, w, c = x.shape
    g = gmat.shape[1]
    cnt = float(h * w * (c // g))
    ch_sum = jnp.sum(x, axis=(1, 2))                                      # (1, C)
    ch_ssq = jnp.sum(x * x, axis=(1, 2))                                  # (1, C)
    g_sum = jnp.dot(ch_sum, gmat, preferred_element_type=jnp.float32)     # (1, G)
    g_ssq = jnp.dot(ch_ssq, gmat, preferred_element_type=jnp.float32)     # (1, G)
    g_mean = g_sum / cnt
    g_var = jnp.maximum(g_ssq / cnt - g_mean * g_mean, 0.0)
    g_rstd = 1.0 / jnp.sqrt(g_var + eps)
    mean_c = jnp.dot(g_mean, gmat_t, preferred_element_type=jnp.float32)  # (1, C)
    rstd_c = jnp.dot(g_rstd, gmat_t, preferred_element_type=jnp.float32)  # (1, C)
    scale_c = gamma * rstd_c
    shift_c = beta - mean_c * scale_c
    y = x * scale_c[:, None, None, :] + shift_c[:, None, None, :]
    return y * jax.nn.sigmoid(y)                                          # SiLU / swish


def _pad_activation(ypad_ref, y, h, w):
    """Zero the padded scratch and store the activated frame at the aligned interior."""
    ypad_ref[...] = jnp.zeros(ypad_ref.shape, ypad_ref.dtype)
    ypad_ref[1:h + 1, _PAD_LEFT:_PAD_LEFT + w, :] = y[0].astype(ypad_ref.dtype)


def _conv3x3_acc(ypad_ref, w_ref, h, w, cin, cout, mm_dtype):
    """3x3 conv over the padded activation scratch as 9 shifted MXU matmuls.

    ypad_ref: VMEM (h+2, _PAD_LEFT+w+1, cin), interior at [1:h+1, _PAD_LEFT:_PAD_LEFT+w].
    w_ref   : (9, cin, cout) with tap index k = kh*3 + kw.
    Returns (h*w, cout) f32 accumulator.
    """
    acc = jnp.zeros((h * w, cout), jnp.float32)
    for k in range(9):                                  # unrolled: static slices only
        kh, kw = k // 3, k % 3
        c0 = _PAD_LEFT - 1 + kw
        win = ypad_ref[kh:kh + h, c0:c0 + w, :]         # (h, w, cin), fused "im2col" in VMEM
        win2 = win.reshape(h * w, cin).astype(mm_dtype)
        acc = acc + jnp.dot(win2, w_ref[k].astype(mm_dtype),
                            preferred_element_type=jnp.float32)
    return acc


def _gn_silu_conv1_kernel(x_ref, g1_ref, b1_ref, gm_ref, gmt_ref, w_ref, brow_ref,
                          o_ref, ypad, *, eps):
    """Fused GroupNorm1 + SiLU + conv1(3x3) + (bias + time-embedding) for one frame."""
    _, h, w, cin = x_ref.shape
    cout = o_ref.shape[-1]
    x = x_ref[...].astype(jnp.float32)
    y = _gn_silu(x, g1_ref[...].astype(jnp.float32), b1_ref[...].astype(jnp.float32),
                 gm_ref[...], gmt_ref[...], eps)
    _pad_activation(ypad, y, h, w)
    acc = _conv3x3_acc(ypad, w_ref, h, w, cin, cout, w_ref.dtype)
    acc = acc + brow_ref[0].astype(jnp.float32)          # conv1 bias + temb projection row
    o_ref[...] = acc.reshape(1, h, w, cout).astype(o_ref.dtype)


def _gn_silu_conv2_res_kernel(h_ref, x_ref, g2_ref, b2_ref, gm_ref, gmt_ref, w2_ref,
                              cb2_ref, wsc_ref, bsc_ref, o_ref, ypad, *, eps, inv_scale):
    """Fused GroupNorm2 + SiLU + conv2(3x3) + 1x1 shortcut + residual/scale for one frame."""
    _, h, w, cmid = h_ref.shape
    cin = x_ref.shape[-1]
    cout = o_ref.shape[-1]
    hv = h_ref[...].astype(jnp.float32)
    y = _gn_silu(hv, g2_ref[...].astype(jnp.float32), b2_ref[...].astype(jnp.float32),
                 gm_ref[...], gmt_ref[...], eps)
    # TODO(synk): dropout is identity for the module default p=0.0; RNG dropout not implemented.
    _pad_activation(ypad, y, h, w)
    mm_dtype = w2_ref.dtype
    acc = _conv3x3_acc(ypad, w2_ref, h, w, cmid, cout, mm_dtype)
    acc = acc + cb2_ref[...].astype(jnp.float32)
    # Shortcut path: 1x1 conv (or identity weights when in_channels == out_channels).
    xs = x_ref[...].astype(mm_dtype).reshape(h * w, cin)
    sc = jnp.dot(xs, wsc_ref[...].astype(mm_dtype), preferred_element_type=jnp.float32)
    sc = sc + bsc_ref[...].astype(jnp.float32)
    o_ref[...] = ((sc + acc) * inv_scale).reshape(1, h, w, cout).astype(o_ref.dtype)


def _group_matrix(channels, groups, dtype=jnp.float32):
    cpg = channels // groups
    ch = jnp.arange(channels)[:, None]
    return (ch // cpg == jnp.arange(groups)[None, :]).astype(dtype)      # (C, G)


def resnet_block3d_forward(x, temb, params, *, groups, groups_out=None, eps=1e-6,
                           output_scale_factor=1.0):
    """ResnetBlock3D forward (use_inflated_groupnorm=True, swish, 'default' temb norm).

    x     : (b, in_channels, f, h, w)
    temb  : (b, temb_channels) or None
    params: dict of PyTorch-layout parameters (see __main__ for keys/shapes).
    Returns (b, out_channels, f, h, w).
    """
    b, cin, f, h, w = x.shape
    cout = params["conv1_w"].shape[0]
    if groups_out is None:
        groups_out = groups
    assert cin % groups == 0 and cout % groups_out == 0
    # TODO(synk): widths that are not multiples of 8 would need masked tails in-kernel.
    assert w % 8 == 0, "kernel assumes spatial width is a multiple of 8"
    n = b * f

    # (b, c, f, h, w) -> (b*f, h, w, c): frames folded into batch, channels on the lane dim.
    x_nhwc = jnp.transpose(x, (0, 2, 3, 4, 1)).reshape(n, h, w, cin)

    # time-embedding projection (tiny (b, T)@(T, cout) dense) folded into conv1's bias row.
    if temb is not None:
        t = jax.nn.silu(temb) @ params["time_w"].T + params["time_b"]    # (b, cout)
        brow = params["conv1_b"][None, :] + t
    else:
        brow = jnp.broadcast_to(params["conv1_b"][None, :], (b, cout))
    brow = jnp.repeat(brow, f, axis=0)[:, None, :]                       # (n, 1, cout)

    # conv weights: OIHW -> (tap, cin, cout)
    w1 = jnp.transpose(params["conv1_w"], (2, 3, 1, 0)).reshape(9, cin, cout)
    w2 = jnp.transpose(params["conv2_w"], (2, 3, 1, 0)).reshape(9, cout, cout)
    if params.get("shortcut_w") is not None:
        wsc = params["shortcut_w"][:, :, 0, 0].T                         # (cin, cout)
        bsc = params["shortcut_b"]
    else:
        assert cin == cout
        wsc = jnp.eye(cin, dtype=x.dtype)
        bsc = jnp.zeros((cout,), x.dtype)

    gm1 = _group_matrix(cin, groups)
    gm2 = _group_matrix(cout, groups_out)
    cparams = pltpu.CompilerParams(dimension_semantics=("parallel",))

    h1 = pl.pallas_call(
        functools.partial(_gn_silu_conv1_kernel, eps=eps),
        out_shape=jax.ShapeDtypeStruct((n, h, w, cout), x.dtype),
        grid_spec=pltpu.PrefetchScalarGridSpec(
            num_scalar_prefetch=0,
            grid=(n,),
            in_specs=[
                pl.BlockSpec((1, h, w, cin), lambda i: (i, 0, 0, 0)),
                pl.BlockSpec((1, cin), lambda i: (0, 0)),
                pl.BlockSpec((1, cin), lambda i: (0, 0)),
                pl.BlockSpec((cin, groups), lambda i: (0, 0)),
                pl.BlockSpec((groups, cin), lambda i: (0, 0)),
                pl.BlockSpec((9, cin, cout), lambda i: (0, 0, 0)),
                pl.BlockSpec((1, 1, cout), lambda i: (i, 0, 0)),
            ],
            out_specs=pl.BlockSpec((1, h, w, cout), lambda i: (i, 0, 0, 0)),
            scratch_shapes=[pltpu.VMEM((h + 2, w + _PAD_LEFT + 1, cin), jnp.float32)],
        ),
        compiler_params=cparams,
    )(x_nhwc,
      params["norm1_gamma"].reshape(1, cin), params["norm1_beta"].reshape(1, cin),
      gm1, gm1.T, w1, brow)

    out_nhwc = pl.pallas_call(
        functools.partial(_gn_silu_conv2_res_kernel, eps=eps,
                          inv_scale=1.0 / float(output_scale_factor)),
        out_shape=jax.ShapeDtypeStruct((n, h, w, cout), x.dtype),
        grid_spec=pltpu.PrefetchScalarGridSpec(
            num_scalar_prefetch=0,
            grid=(n,),
            in_specs=[
                pl.BlockSpec((1, h, w, cout), lambda i: (i, 0, 0, 0)),
                pl.BlockSpec((1, h, w, cin), lambda i: (i, 0, 0, 0)),
                pl.BlockSpec((1, cout), lambda i: (0, 0)),
                pl.BlockSpec((1, cout), lambda i: (0, 0)),
                pl.BlockSpec((cout, groups_out), lambda i: (0, 0)),
                pl.BlockSpec((groups_out, cout), lambda i: (0, 0)),
                pl.BlockSpec((9, cout, cout), lambda i: (0, 0, 0)),
                pl.BlockSpec((1, cout), lambda i: (0, 0)),
                pl.BlockSpec((cin, cout), lambda i: (0, 0)),
                pl.BlockSpec((1, cout), lambda i: (0, 0)),
            ],
            out_specs=pl.BlockSpec((1, h, w, cout), lambda i: (i, 0, 0, 0)),
            scratch_shapes=[pltpu.VMEM((h + 2, w + _PAD_LEFT + 1, cout), jnp.float32)],
        ),
        compiler_params=cparams,
    )(h1, x_nhwc,
      params["norm2_gamma"].reshape(1, cout), params["norm2_beta"].reshape(1, cout),
      gm2, gm2.T, w2, params["conv2_b"].reshape(1, cout),
      wsc, bsc.reshape(1, cout))

    out = out_nhwc.reshape(b, f, h, w, cout)
    return jnp.transpose(out, (0, 4, 1, 2, 3))                            # (b, cout, f, h, w)


def _reference(x, temb, params, *, groups, groups_out, eps, output_scale_factor):
    """Pure-JAX reference matching the PyTorch module (use_inflated_groupnorm=True)."""
    b, cin, f, h, w = x.shape
    cout = params["conv1_w"].shape[0]
    x2 = jnp.transpose(x, (0, 2, 1, 3, 4)).reshape(b * f, cin, h, w)

    def group_norm(v, gamma, beta, g):
        nn_, c, hh, ww = v.shape
        vg = v.reshape(nn_, g, (c // g) * hh * ww)
        mean = jnp.mean(vg, axis=-1, keepdims=True)
        var = jnp.var(vg, axis=-1, keepdims=True)
        vn = ((vg - mean) / jnp.sqrt(var + eps)).reshape(nn_, c, hh, ww)
        return vn * gamma.reshape(1, c, 1, 1) + beta.reshape(1, c, 1, 1)

    def conv(v, wgt, bias, pad):
        y = jax.lax.conv_general_dilated(
            v, wgt, (1, 1), ((pad, pad), (pad, pad)),
            dimension_numbers=("NCHW", "OIHW", "NCHW"))
        return y + bias.reshape(1, -1, 1, 1)

    hm = group_norm(x2, params["norm1_gamma"], params["norm1_beta"], groups)
    hm = jax.nn.silu(hm)
    hm = conv(hm, params["conv1_w"], params["conv1_b"], 1)
    if temb is not None:
        t = jax.nn.silu(temb) @ params["time_w"].T + params["time_b"]    # (b, cout)
        t = jnp.repeat(t, f, axis=0)
        hm = hm + t[:, :, None, None]
    hm = group_norm(hm, params["norm2_gamma"], params["norm2_beta"], groups_out)
    hm = jax.nn.silu(hm)
    hm = conv(hm, params["conv2_w"], params["conv2_b"], 1)
    if params.get("shortcut_w") is not None:
        xs = conv(x2, params["shortcut_w"], params["shortcut_b"], 0)
    else:
        xs = x2
    out = (xs + hm) / output_scale_factor
    return jnp.transpose(out.reshape(b, f, cout, h, w), (0, 2, 1, 3, 4))


if __name__ == "__main__":
    b, cin, cout, f, h, w = 2, 4, 8, 4, 16, 16
    groups, groups_out = 2, 2
    temb_channels = 32
    eps = 1e-6
    osf = 1.0

    ks = jax.random.split(jax.random.PRNGKey(0), 16)

    def conv_init(k, shape, fan_in):
        bound = 1.0 / (fan_in ** 0.5)
        return jax.random.uniform(k, shape, jnp.float32, -bound, bound)

    params = {
        "norm1_gamma": 1.0 + 0.1 * jax.random.normal(ks[0], (cin,), jnp.float32),
        "norm1_beta": 0.1 * jax.random.normal(ks[1], (cin,), jnp.float32),
        "conv1_w": conv_init(ks[2], (cout, cin, 3, 3), cin * 9),
        "conv1_b": conv_init(ks[3], (cout,), cin * 9),
        "time_w": conv_init(ks[4], (cout, temb_channels), temb_channels),
        "time_b": conv_init(ks[5], (cout,), temb_channels),
        "norm2_gamma": 1.0 + 0.1 * jax.random.normal(ks[6], (cout,), jnp.float32),
        "norm2_beta": 0.1 * jax.random.normal(ks[7], (cout,), jnp.float32),
        "conv2_w": conv_init(ks[8], (cout, cout, 3, 3), cout * 9),
        "conv2_b": conv_init(ks[9], (cout,), cout * 9),
        "shortcut_w": conv_init(ks[10], (cout, cin, 1, 1), cin),   # in != out -> 1x1 shortcut
        "shortcut_b": conv_init(ks[11], (cout,), cin),
    }
    x = jax.random.normal(ks[12], (b, cin, f, h, w), jnp.float32)
    temb = jax.random.normal(ks[13], (b, temb_channels), jnp.float32)

    y = resnet_block3d_forward(x, temb, params, groups=groups, groups_out=groups_out,
                               eps=eps, output_scale_factor=osf)
    y = jax.block_until_ready(y)

    y_ref = _reference(x, temb, params, groups=groups, groups_out=groups_out,
                       eps=eps, output_scale_factor=osf)
    assert y.shape == (b, cout, f, h, w), y.shape
    max_err = float(jnp.max(jnp.abs(y - y_ref)))
    assert jnp.allclose(y, y_ref, rtol=2e-3, atol=2e-3), f"mismatch vs reference: {max_err}"

    print("KERNEL_OK")
</pallas_src>

<mosaic_0001>
module attributes {stable_mosaic.version = 11 : i64} {
  func.func @_gn_silu_conv1_kernel(%arg0: i32, %arg1: memref<1x16x16x4xf32, #tpu.memory_space<vmem>>, %arg2: memref<1x4xf32, #tpu.memory_space<vmem>>, %arg3: memref<1x4xf32, #tpu.memory_space<vmem>>, %arg4: memref<4x2xf32, #tpu.memory_space<vmem>>, %arg5: memref<2x4xf32, #tpu.memory_space<vmem>>, %arg6: memref<9x4x8xf32, #tpu.memory_space<vmem>>, %arg7: memref<1x1x8xf32, #tpu.memory_space<vmem>>, %arg8: memref<1x16x16x8xf32, #tpu.memory_space<vmem>>, %arg9: memref<18x25x4xf32, #tpu.memory_space<vmem>>) attributes {dimension_semantics = [#tpu.dimension_semantics<parallel>], iteration_bounds = array<i64: 8>, scalar_prefetch = 0 : i64, scratch_operands = 1 : i64, tpu.core_type = #tpu.core_type<tc>, window_params = [{transform_indices = @transform_0, window_bounds = array<i64: 1, 16, 16, 4>}, {pipeline_mode = #tpu.pipeline_mode<synchronous>, transform_indices = @transform_1, window_bounds = array<i64: 1, 4>}, {pipeline_mode = #tpu.pipeline_mode<synchronous>, transform_indices = @transform_2, window_bounds = array<i64: 1, 4>}, {pipeline_mode = #tpu.pipeline_mode<synchronous>, transform_indices = @transform_3, window_bounds = array<i64: 4, 2>}, {pipeline_mode = #tpu.pipeline_mode<synchronous>, transform_indices = @transform_4, window_bounds = array<i64: 2, 4>}, {pipeline_mode = #tpu.pipeline_mode<synchronous>, transform_indices = @transform_5, window_bounds = array<i64: 9, 4, 8>}, {transform_indices = @transform_6, window_bounds = array<i64: 1, 1, 8>}, {transform_indices = @transform_7, window_bounds = array<i64: 1, 16, 16, 8>}]} {
    %c0 = arith.constant 0 : index
    %c0_0 = arith.constant 0 : index
    %c0_1 = arith.constant 0 : index
    %c0_2 = arith.constant 0 : index
    %0 = vector.load %arg1[%c0, %c0_0, %c0_1, %c0_2] : memref<1x16x16x4xf32, #tpu.memory_space<vmem>>, vector<1x16x16x4xf32>
    %c0_3 = arith.constant 0 : index
    %c0_4 = arith.constant 0 : index
    %1 = vector.load %arg2[%c0_3, %c0_4] : memref<1x4xf32, #tpu.memory_space<vmem>>, vector<1x4xf32>
    %c0_5 = arith.constant 0 : index
    %c0_6 = arith.constant 0 : index
    %2 = vector.load %arg3[%c0_5, %c0_6] : memref<1x4xf32, #tpu.memory_space<vmem>>, vector<1x4xf32>
    %c0_7 = arith.constant 0 : index
    %c0_8 = arith.constant 0 : index
    %3 = vector.load %arg4[%c0_7, %c0_8] : memref<4x2xf32, #tpu.memory_space<vmem>>, vector<4x2xf32>
    %c0_9 = arith.constant 0 : index
    %c0_10 = arith.constant 0 : index
    %4 = vector.load %arg5[%c0_9, %c0_10] : memref<2x4xf32, #tpu.memory_space<vmem>>, vector<2x4xf32>
    %cst = arith.constant dense<0.000000e+00> : vector<1x4xf32>
    %5 = vector.multi_reduction <add>, %0, %cst [1, 2] : vector<1x16x16x4xf32> to vector<1x4xf32>
    %6 = arith.mulf %0, %0 : vector<1x16x16x4xf32>
    %cst_11 = arith.constant dense<0.000000e+00> : vector<1x4xf32>
    %7 = vector.multi_reduction <add>, %6, %cst_11 [1, 2] : vector<1x16x16x4xf32> to vector<1x4xf32>
    %cst_12 = arith.constant dense<0.000000e+00> : vector<1x2xf32>
    %8 = tpu.matmul %5, %3, %cst_12 {dimension_numbers = #tpu.dot_dimension_numbers<[1], [0], [0], [1], [0, 0, 1, 1], [], []>} : vector<1x4xf32>, vector<4x2xf32>, vector<1x2xf32> -> vector<1x2xf32>
    %cst_13 = arith.constant dense<0.000000e+00> : vector<1x2xf32>
    %9 = tpu.matmul %7, %3, %cst_13 {dimension_numbers = #tpu.dot_dimension_numbers<[1], [0], [0], [1], [0, 0, 1, 1], [], []>} : vector<1x4xf32>, vector<4x2xf32>, vector<1x2xf32> -> vector<1x2xf32>
    %cst_14 = arith.constant 5.120000e+02 : f32
    %10 = vector.broadcast %cst_14 : f32 to vector<1x2xf32>
    %11 = arith.divf %8, %10 : vector<1x2xf32>
    %cst_15 = arith.constant 5.120000e+02 : f32
    %12 = vector.broadcast %cst_15 : f32 to vector<1x2xf32>
    %13 = arith.divf %9, %12 : vector<1x2xf32>
    %14 = arith.mulf %11, %11 : vector<1x2xf32>
    %15 = arith.subf %13, %14 : vector<1x2xf32>
    %cst_16 = arith.constant 0.000000e+00 : f32
    %16 = vector.broadcast %cst_16 : f32 to vector<1x2xf32>
    %17 = arith.maximumf %15, %16 : vector<1x2xf32>
    %cst_17 = arith.constant 9.99999997E-7 : f32
    %18 = vector.broadcast %cst_17 : f32 to vector<1x2xf32>
    %19 = arith.addf %17, %18 : vector<1x2xf32>
    %20 = math.sqrt %19 : vector<1x2xf32>
    %cst_18 = arith.constant 1.000000e+00 : f32
    %21 = vector.broadcast %cst_18 : f32 to vector<1x2xf32>
    %22 = arith.divf %21, %20 : vector<1x2xf32>
    %cst_19 = arith.constant dense<0.000000e+00> : vector<1x4xf32>
    %23 = tpu.matmul %11, %4, %cst_19 {dimension_numbers = #tpu.dot_dimension_numbers<[1], [0], [0], [1], [0, 0, 1, 1], [], []>} : vector<1x2xf32>, vector<2x4xf32>, vector<1x4xf32> -> vector<1x4xf32>
    %cst_20 = arith.constant dense<0.000000e+00> : vector<1x4xf32>
    %24 = tpu.matmul %22, %4, %cst_20 {dimension_numbers = #tpu.dot_dimension_numbers<[1], [0], [0], [1], [0, 0, 1, 1], [], []>} : vector<1x2xf32>, vector<2x4xf32>, vector<1x4xf32> -> vector<1x4xf32>
    %25 = arith.mulf %1, %24 : vector<1x4xf32>
    %26 = arith.mulf %23, %25 : vector<1x4xf32>
    %27 = arith.subf %2, %26 : vector<1x4xf32>
    %28 = vector.shape_cast %25 : vector<1x4xf32> to vector<1x1x1x4xf32>
    %29 = vector.broadcast %28 : vector<1x1x1x4xf32> to vector<1x16x16x4xf32>
    %30 = arith.mulf %0, %29 : vector<1x16x16x4xf32>
    %31 = vector.shape_cast %27 : vector<1x4xf32> to vector<1x1x1x4xf32>
    %32 = vector.broadcast %31 : vector<1x1x1x4xf32> to vector<1x16x16x4xf32>
    %33 = arith.addf %30, %32 : vector<1x16x16x4xf32>
    %34 = arith.negf %33 : vector<1x16x16x4xf32>
    %35 = math.exp %34 : vector<1x16x16x4xf32>
    %cst_21 = arith.constant 1.000000e+00 : f32
    %36 = vector.broadcast %cst_21 : f32 to vector<1x16x16x4xf32>
    %37 = arith.addf %36, %35 : vector<1x16x16x4xf32>
    %38 = arith.divf %36, %37 : vector<1x16x16x4xf32>
    %39 = arith.mulf %33, %38 : vector<1x16x16x4xf32>
    %cst_22 = arith.constant 0.000000e+00 : f32
    %40 = vector.broadcast %cst_22 : f32 to vector<18x25x4xf32>
    %c0_23 = arith.constant 0 : index
    %c0_24 = arith.constant 0 : index
    %c0_25 = arith.constant 0 : index
    %41 = vector.load %arg9[%c0_23, %c0_24, %c0_25] : memref<18x25x4xf32, #tpu.memory_space<vmem>>, vector<18x25x4xf32>
    tpu.vector_store %arg9[%c0_23, %c0_24, %c0_25], %40 {strides = array<i32>} : memref<18x25x4xf32, #tpu.memory_space<vmem>>, vector<18x25x4xf32>,
    %42 = vector.shape_cast %39 : vector<1x16x16x4xf32> to vector<16x16x4xf32>
    %c1 = arith.constant 1 : index
    %c8 = arith.constant 8 : index
    %c0_26 = arith.constant 0 : index
    %43 = vector.load %arg9[%c1, %c8, %c0_26] : memref<18x25x4xf32, #tpu.memory_space<vmem>>, vector<16x16x4xf32>
    tpu.vector_store %arg9[%c1, %c8, %c0_26], %42 {strides = array<i32>} : memref<18x25x4xf32, #tpu.memory_space<vmem>>, vector<16x16x4xf32>,
    %cst_27 = arith.constant 0.000000e+00 : f32
    %44 = vector.broadcast %cst_27 : f32 to vector<256x8xf32>
    %c0_28 = arith.constant 0 : index
    %c7 = arith.constant 7 : index
    %c0_29 = arith.constant 0 : index
    %45 = vector.load %arg9[%c0_28, %c7, %c0_29] : memref<18x25x4xf32, #tpu.memory_space<vmem>>, vector<16x16x4xf32>
    %46 = vector.shape_cast %45 : vector<16x16x4xf32> to vector<256x4xf32>
    %c0_30 = arith.constant 0 : index
    %c0_31 = arith.constant 0 : index
    %c0_32 = arith.constant 0 : index
    %47 = vector.load %arg6[%c0_30, %c0_31, %c0_32] : memref<9x4x8xf32, #tpu.memory_space<vmem>>, vector<1x4x8xf32>
    %48 = vector.shape_cast %47 : vector<1x4x8xf32> to vector<4x8xf32>
    %cst_33 = arith.constant dense<0.000000e+00> : vector<256x8xf32>
    %49 = tpu.matmul %46, %48, %cst_33 {dimension_numbers = #tpu.dot_dimension_numbers<[1], [0], [0], [1], [0, 0, 1, 1], [], []>} : vector<256x4xf32>, vector<4x8xf32>, vector<256x8xf32> -> vector<256x8xf32>
    %50 = arith.addf %44, %49 : vector<256x8xf32>
    %c0_34 = arith.constant 0 : index
    %c8_35 = arith.constant 8 : index
    %c0_36 = arith.constant 0 : index
    %51 = vector.load %arg9[%c0_34, %c8_35, %c0_36] : memref<18x25x4xf32, #tpu.memory_space<vmem>>, vector<16x16x4xf32>
    %52 = vector.shape_cast %51 : vector<16x16x4xf32> to vector<256x4xf32>
    %c1_37 = arith.constant 1 : index
    %c0_38 = arith.constant 0 : index
    %c0_39 = arith.constant 0 : index
    %53 = vector.load %arg6[%c1_37, %c0_38, %c0_39] : memref<9x4x8xf32, #tpu.memory_space<vmem>>, vector<1x4x8xf32>
    %54 = vector.shape_cast %53 : vector<1x4x8xf32> to vector<4x8xf32>
    %cst_40 = arith.constant dense<0.000000e+00> : vector<256x8xf32>
    %55 = tpu.matmul %52, %54, %cst_40 {dimension_numbers = #tpu.dot_dimension_numbers<[1], [0], [0], [1], [0, 0, 1, 1], [], []>} : vector<256x4xf32>, vector<4x8xf32>, vector<256x8xf32> -> vector<256x8xf32>
    %56 = arith.addf %50, %55 : vector<256x8xf32>
    %c0_41 = arith.constant 0 : index
    %c9 = arith.constant 9 : index
    %c0_42 = arith.constant 0 : index
    %57 = vector.load %arg9[%c0_41, %c9, %c0_42] : memref<18x25x4xf32, #tpu.memory_space<vmem>>, vector<16x16x4xf32>
    %58 = vector.shape_cast %57 : vector<16x16x4xf32> to vector<256x4xf32>
    %c2 = arith.constant 2 : index
    %c0_43 = arith.constant 0 : index
    %c0_44 = arith.constant 0 : index
    %59 = vector.load %arg6[%c2, %c0_43, %c0_44] : memref<9x4x8xf32, #tpu.memory_space<vmem>>, vector<1x4x8xf32>
    %60 = vector.shape_cast %59 : vector<1x4x8xf32> to vector<4x8xf32>
    %cst_45 = arith.constant dense<0.000000e+00> : vector<256x8xf32>
    %61 = tpu.matmul %58, %60, %cst_45 {dimension_numbers = #tpu.dot_dimension_numbers<[1], [0], [0], [1], [0, 0, 1, 1], [], []>} : vector<256x4xf32>, vector<4x8xf32>, vector<256x8xf32> -> vector<256x8xf32>
    %62 = arith.addf %56, %61 : vector<256x8xf32>
    %c1_46 = arith.constant 1 : index
    %c7_47 = arith.constant 7 : index
    %c0_48 = arith.constant 0 : index
    %63 = vector.load %arg9[%c1_46, %c7_47, %c0_48] : memref<18x25x4xf32, #tpu.memory_space<vmem>>, vector<16x16x4xf32>
    %64 = vector.shape_cast %63 : vector<16x16x4xf32> to vector<256x4xf32>
    %c3 = arith.constant 3 : index
    %c0_49 = arith.constant 0 : index
    %c0_50 = arith.constant 0 : index
    %65 = vector.load %arg6[%c3, %c0_49, %c0_50] : memref<9x4x8xf32, #tpu.memory_space<vmem>>, vector<1x4x8xf32>
    %66 = vector.shape_cast %65 : vector<1x4x8xf32> to vector<4x8xf32>
    %cst_51 = arith.constant dense<0.000000e+00> : vector<256x8xf32>
    %67 = tpu.matmul %64, %66, %cst_51 {dimension_numbers = #tpu.dot_dimension_numbers<[1], [0], [0], [1], [0, 0, 1, 1], [], []>} : vector<256x4xf32>, vector<4x8xf32>, vector<256x8xf32> -> vector<256x8xf32>
    %68 = arith.addf %62, %67 : vector<256x8xf32>
    %c1_52 = arith.constant 1 : index
    %c8_53 = arith.constant 8 : index
    %c0_54 = arith.constant 0 : index
    %69 = vector.load %arg9[%c1_52, %c8_53, %c0_54] : memref<18x25x4xf32, #tpu.memory_space<vmem>>, vector<16x16x4xf32>
    %70 = vector.shape_cast %69 : vector<16x16x4xf32> to vector<256x4xf32>
    %c4 = arith.constant 4 : index
    %c0_55 = arith.constant 0 : index
    %c0_56 = arith.constant 0 : index
    %71 = vector.load %arg6[%c4, %c0_55, %c0_56] : memref<9x4x8xf32, #tpu.memory_space<vmem>>, vector<1x4x8xf32>
    %72 = vector.shape_cast %71 : vector<1x4x8xf32> to vector<4x8xf32>
    %cst_57 = arith.constant dense<0.000000e+00> : vector<256x8xf32>
    %73 = tpu.matmul %70, %72, %cst_57 {dimension_numbers = #tpu.dot_dimension_numbers<[1], [0], [0], [1], [0, 0, 1, 1], [], []>} : vector<256x4xf32>, vector<4x8xf32>, vector<256x8xf32> -> vector<256x8xf32>
    %74 = arith.addf %68, %73 : vector<256x8xf32>
    %c1_58 = arith.constant 1 : index
    %c9_59 = arith.constant 9 : index
    %c0_60 = arith.constant 0 : index
    %75 = vector.load %arg9[%c1_58, %c9_59, %c0_60] : memref<18x25x4xf32, #tpu.memory_space<vmem>>, vector<16x16x4xf32>
    %76 = vector.shape_cast %75 : vector<16x16x4xf32> to vector<256x4xf32>
    %c5 = arith.constant 5 : index
    %c0_61 = arith.constant 0 : index
    %c0_62 = arith.constant 0 : index
    %77 = vector.load %arg6[%c5, %c0_61, %c0_62] : memref<9x4x8xf32, #tpu.memory_space<vmem>>, vector<1x4x8xf32>
    %78 = vector.shape_cast %77 : vector<1x4x8xf32> to vector<4x8xf32>
    %cst_63 = arith.constant dense<0.000000e+00> : vector<256x8xf32>
    %79 = tpu.matmul %76, %78, %cst_63 {dimension_numbers = #tpu.dot_dimension_numbers<[1], [0], [0], [1], [0, 0, 1, 1], [], []>} : vector<256x4xf32>, vector<4x8xf32>, vector<256x8xf32> -> vector<256x8xf32>
    %80 = arith.addf %74, %79 : vector<256x8xf32>
    %c2_64 = arith.constant 2 : index
    %c7_65 = arith.constant 7 : index
    %c0_66 = arith.constant 0 : index
    %81 = vector.load %arg9[%c2_64, %c7_65, %c0_66] : memref<18x25x4xf32, #tpu.memory_space<vmem>>, vector<16x16x4xf32>
    %82 = vector.shape_cast %81 : vector<16x16x4xf32> to vector<256x4xf32>
    %c6 = arith.constant 6 : index
    %c0_67 = arith.constant 0 : index
    %c0_68 = arith.constant 0 : index
    %83 = vector.load %arg6[%c6, %c0_67, %c0_68] : memref<9x4x8xf32, #tpu.memory_space<vmem>>, vector<1x4x8xf32>
    %84 = vector.shape_cast %83 : vector<1x4x8xf32> to vector<4x8xf32>
    %cst_69 = arith.constant dense<0.000000e+00> : vector<256x8xf32>
    %85 = tpu.matmul %82, %84, %cst_69 {dimension_numbers = #tpu.dot_dimension_numbers<[1], [0], [0], [1], [0, 0, 1, 1], [], []>} : vector<256x4xf32>, vector<4x8xf32>, vector<256x8xf32> -> vector<256x8xf32>
    %86 = arith.addf %80, %85 : vector<256x8xf32>
    %c2_70 = arith.constant 2 : index
    %c8_71 = arith.constant 8 : index
    %c0_72 = arith.constant 0 : index
    %87 = vector.load %arg9[%c2_70, %c8_71, %c0_72] : memref<18x25x4xf32, #tpu.memory_space<vmem>>, vector<16x16x4xf32>
    %88 = vector.shape_cast %87 : vector<16x16x4xf32> to vector<256x4xf32>
    %c7_73 = arith.constant 7 : index
    %c0_74 = arith.constant 0 : index
    %c0_75 = arith.constant 0 : index
    %89 = vector.load %arg6[%c7_73, %c0_74, %c0_75] : memref<9x4x8xf32, #tpu.memory_space<vmem>>, vector<1x4x8xf32>
    %90 = vector.shape_cast %89 : vector<1x4x8xf32> to vector<4x8xf32>
    %cst_76 = arith.constant dense<0.000000e+00> : vector<256x8xf32>
    %91 = tpu.matmul %88, %90, %cst_76 {dimension_numbers = #tpu.dot_dimension_numbers<[1], [0], [0], [1], [0, 0, 1, 1], [], []>} : vector<256x4xf32>, vector<4x8xf32>, vector<256x8xf32> -> vector<256x8xf32>
    %92 = arith.addf %86, %91 : vector<256x8xf32>
    %c2_77 = arith.constant 2 : index
    %c9_78 = arith.constant 9 : index
    %c0_79 = arith.constant 0 : index
    %93 = vector.load %arg9[%c2_77, %c9_78, %c0_79] : memref<18x25x4xf32, #tpu.memory_space<vmem>>, vector<16x16x4xf32>
    %94 = vector.shape_cast %93 : vector<16x16x4xf32> to vector<256x4xf32>
    %c8_80 = arith.constant 8 : index
    %c0_81 = arith.constant 0 : index
    %c0_82 = arith.constant 0 : index
    %95 = vector.load %arg6[%c8_80, %c0_81, %c0_82] : memref<9x4x8xf32, #tpu.memory_space<vmem>>, vector<1x4x8xf32>
    %96 = vector.shape_cast %95 : vector<1x4x8xf32> to vector<4x8xf32>
    %cst_83 = arith.constant dense<0.000000e+00> : vector<256x8xf32>
    %97 = tpu.matmul %94, %96, %cst_83 {dimension_numbers = #tpu.dot_dimension_numbers<[1], [0], [0], [1], [0, 0, 1, 1], [], []>} : vector<256x4xf32>, vector<4x8xf32>, vector<256x8xf32> -> vector<256x8xf32>
    %98 = arith.addf %92, %97 : vector<256x8xf32>
    %c0_84 = arith.constant 0 : index
    %c0_85 = arith.constant 0 : index
    %c0_86 = arith.constant 0 : index
    %99 = vector.load %arg7[%c0_84, %c0_85, %c0_86] : memref<1x1x8xf32, #tpu.memory_space<vmem>>, vector<1x1x8xf32>
    %100 = vector.shape_cast %99 : vector<1x1x8xf32> to vector<1x8xf32>
    %101 = vector.broadcast %100 : vector<1x8xf32> to vector<256x8xf32>
    %102 = arith.addf %98, %101 : vector<256x8xf32>
    %103 = vector.shape_cast %102 : vector<256x8xf32> to vector<1x16x16x8xf32>
    %c0_87 = arith.constant 0 : index
    %c0_88 = arith.constant 0 : index
    %c0_89 = arith.constant 0 : index
    %c0_90 = arith.constant 0 : index
    %104 = vector.load %arg8[%c0_87, %c0_88, %c0_89, %c0_90] : memref<1x16x16x8xf32, #tpu.memory_space<vmem>>, vector<1x16x16x8xf32>
    tpu.vector_store %arg8[%c0_87, %c0_88, %c0_89, %c0_90], %103 {strides = array<i32>} : memref<1x16x16x8xf32, #tpu.memory_space<vmem>>, vector<1x16x16x8xf32>,
    return
  }
  func.func @transform_0(%arg0: i32) -> (i32, i32, i32, i32) {
    %c0_i32 = arith.constant 0 : i32
    %c0_i32_0 = arith.constant 0 : i32
    %c0_i32_1 = arith.constant 0 : i32
    %c0_i32_2 = arith.constant 0 : i32
    return %arg0, %c0_i32, %c0_i32_0, %c0_i32_1 : i32, i32, i32, i32
  }
  func.func @transform_1(%arg0: i32) -> (i32, i32) {
    %c0_i32 = arith.constant 0 : i32
    %c0_i32_0 = arith.constant 0 : i32
    %c0_i32_1 = arith.constant 0 : i32
    return %c0_i32, %c0_i32_0 : i32, i32
  }
  func.func @transform_2(%arg0: i32) -> (i32, i32) {
    %c0_i32 = arith.constant 0 : i32
    %c0_i32_0 = arith.constant 0 : i32
    %c0_i32_1 = arith.constant 0 : i32
    return %c0_i32, %c0_i32_0 : i32, i32
  }
  func.func @transform_3(%arg0: i32) -> (i32, i32) {
    %c0_i32 = arith.constant 0 : i32
    %c0_i32_0 = arith.constant 0 : i32
    %c0_i32_1 = arith.constant 0 : i32
    return %c0_i32, %c0_i32_0 : i32, i32
  }
  func.func @transform_4(%arg0: i32) -> (i32, i32) {
    %c0_i32 = arith.constant 0 : i32
    %c0_i32_0 = arith.constant 0 : i32
    %c0_i32_1 = arith.constant 0 : i32
    return %c0_i32, %c0_i32_0 : i32, i32
  }
  func.func @transform_5(%arg0: i32) -> (i32, i32, i32) {
    %c0_i32 = arith.constant 0 : i32
    %c0_i32_0 = arith.constant 0 : i32
    %c0_i32_1 = arith.constant 0 : i32
    %c0_i32_2 = arith.constant 0 : i32
    return %c0_i32, %c0_i32_0, %c0_i32_1 : i32, i32, i32
  }
  func.func @transform_6(%arg0: i32) -> (i32, i32, i32) {
    %c0_i32 = arith.constant 0 : i32
    %c0_i32_0 = arith.constant 0 : i32
    %c0_i32_1 = arith.constant 0 : i32
    return %arg0, %c0_i32, %c0_i32_0 : i32, i32, i32
  }
  func.func @transform_7(%arg0: i32) -> (i32, i32, i32, i32) {
    %c0_i32 = arith.constant 0 : i32
    %c0_i32_0 = arith.constant 0 : i32
    %c0_i32_1 = arith.constant 0 : i32
    %c0_i32_2 = arith.constant 0 : i32
    return %arg0, %c0_i32, %c0_i32_0, %c0_i32_1 : i32, i32, i32, i32
  }
}

</mosaic_0001>

<llo_original>
// kernel: tpu_custom_call.1
$region0: #{tpu_custom_call.1}
  #allocation0 [shape = 'u32[]', space=smem, size = 0x4, offset = 0x4, fixed_abs, tag = 'smem constant byte address 0x4 - core index']
  #allocation1 [shape = 'u32[144,128]{1,0:T(1,128)}', space=vmem, size = 0x12000, scoped, tag = 'internal scratch']
  #allocation2 [shape = 'f32[18,25,4]{2,1,0:T(8,128)}', space=vmem, size = 0x48000, scoped, tag = 'scratch operand']
  %s0 = inlined_call_operand.vmem [shape: f32[8,16,16,4], index: 0, kind: input, shape index: {}]
  %s1 = inlined_call_operand.vmem [shape: f32[1,4], index: 1, kind: input, shape index: {}]
  %s2 = inlined_call_operand.vmem [shape: f32[1,4], index: 2, kind: input, shape index: {}]
  %s3 = inlined_call_operand.vmem [shape: f32[4,2], index: 3, kind: input, shape index: {}]
  %s4 = inlined_call_operand.vmem [shape: f32[2,4], index: 4, kind: input, shape index: {}]
  %s5 = inlined_call_operand.vmem [shape: f32[9,4,8], index: 5, kind: input, shape index: {}]
  %s6 = inlined_call_operand.vmem [shape: f32[8,1,8], index: 6, kind: input, shape index: {}]
  %s7 = inlined_call_operand.vmem [shape: f32[8,16,16,8], index: 7, kind: output, shape index: {}]
  %s8 = sld [smem:[#allocation0]]
  $region61: #{tpu_custom_call.1} parent=0
    _
  %s10 = ssub.s32 1, %s8
  %s11 = scalar_select 0, %s10, %s8
  loop: start=0, step=1, limit=10
  $region2: #{tpu_custom_call.1} parent=0 // loop_pre_header
    _
  $region3: #{tpu_custom_call.1} parent=0 // loop_header
    %s13 = sphi 0, %s17
    %p14 = scmp.ge.s32.totalorder %s13, 10
    %s23 = sphi 0, %s25
    %s26 = sphi 0, %s23
    %s27 = sphi 0, %s26
    %s43 = sphi 0, %s27
    %s47 = sphi 0, %s47
    %s49 = sphi 0, %s47
    %s50 = sphi 0, %s49
    %s64 = sphi 0, %s50
    %s68 = sphi 0, %s68
    %s70 = sphi 0, %s68
    %s71 = sphi 0, %s70
    %s85 = sphi 0, %s71
    %s89 = sphi 0, %s89
    %s91 = sphi 0, %s89
    %s92 = sphi 0, %s91
    %s106 = sphi 0, %s92
    %s110 = sphi 0, %s110
    %s112 = sphi 0, %s110
    %s113 = sphi 0, %s112
    %s127 = sphi 0, %s113
    %s131 = sphi 0, %s131
    %s133 = sphi 0, %s131
    %s134 = sphi 0, %s133
    %s148 = sphi 0, %s134
    %s154 = sphi 0, %s156
    %s157 = sphi 0, %s154
    %s158 = sphi 0, %s157
    %s174 = sphi 0, %s158
    %s180 = sphi 0, %s182
    %s183 = sphi 0, %s180
    %s184 = sphi 0, %s183
    %s200 = sphi 0, %s184
  $region4: #{tpu_custom_call.1} parent=0 // loop_header_branch
    %16 = sbr.rel (%p14) target = $region8
  $region5: #{tpu_custom_call.1} parent=0 // loop_body
    %s18 = ssub.s32 %s13, 1
    %s19 = ssub.s32 %s13, 2
    %s20 = sadd.s32 %s13, 1
    %s21 = ssub.s32 %s13, %s20
    %p22 = scmp.eq.s32.totalorder %s21, 0
    %s24 = sadd.s32 %s23, 1
    %s25 = scalar_select %p22, %s23, %s24
    %p28 = pneg %p22
    %p29 = scmp.eq.s32.totalorder %s13, 7
    %p30 = por %p28, %p29
    %p31 = scmp.ne.s32.totalorder %s23, %s26
    %p32 = scmp.eq.s32.totalorder %s13, 0
    %p33 = por %p31, %p32
    %p34 = scmp.ne.s32.totalorder %s23, %s26
    %p35 = scmp.eq.s32.totalorder %s18, 7
    %p36 = por %p34, %p35
    %p37 = scmp.ne.s32.totalorder %s26, %s27
    %p38 = scmp.eq.s32.totalorder %s18, 0
    %p39 = por %p37, %p38
    %p40 = scmp.ne.s32.totalorder %s26, %s27
    %p41 = scmp.eq.s32.totalorder %s19, 7
    %p42 = por %p40, %p41
    %p44 = scmp.ne.s32.totalorder %s27, %s43
    %p45 = scmp.eq.s32.totalorder %s19, 0
    %p46 = por %p44, %p45
    %s48 = sadd.s32 %s47, 1
    %p51 = scmp.eq.s32.totalorder %s13, 7
    %p52 = scmp.ne.s32.totalorder %s47, %s49
    %p53 = scmp.eq.s32.totalorder %s13, 0
    %p54 = por %p52, %p53
    %p55 = scmp.ne.s32.totalorder %s47, %s49
    %p56 = scmp.eq.s32.totalorder %s18, 7
    %p57 = por %p55, %p56
    %p58 = scmp.ne.s32.totalorder %s49, %s50
    %p59 = scmp.eq.s32.totalorder %s18, 0
    %p60 = por %p58, %p59
    %p61 = scmp.ne.s32.totalorder %s49, %s50
    %p62 = scmp.eq.s32.totalorder %s19, 7
    %p63 = por %p61, %p62
    %p65 = scmp.ne.s32.totalorder %s50, %s64
    %p66 = scmp.eq.s32.totalorder %s19, 0
    %p67 = por %p65, %p66
    %s69 = sadd.s32 %s68, 1
    %p72 = scmp.eq.s32.totalorder %s13, 7
    %p73 = scmp.ne.s32.totalorder %s68, %s70
    %p74 = scmp.eq.s32.totalorder %s13, 0
    %p75 = por %p73, %p74
    %p76 = scmp.ne.s32.totalorder %s68, %s70
    %p77 = scmp.eq.s32.totalorder %s18, 7
    %p78 = por %p76, %p77
    %p79 = scmp.ne.s32.totalorder %s70, %s71
    %p80 = scmp.eq.s32.totalorder %s18, 0
    %p81 = por %p79, %p80
    %p82 = scmp.ne.s32.totalorder %s70, %s71
    %p83 = scmp.eq.s32.totalorder %s19, 7
    %p84 = por %p82, %p83
    %p86 = scmp.ne.s32.totalorder %s71, %s85
    %p87 = scmp.eq.s32.totalorder %s19, 0
    %p88 = por %p86, %p87
    %s90 = sadd.s32 %s89, 1
    %p93 = scmp.eq.s32.totalorder %s13, 7
    %p94 = scmp.ne.s32.totalorder %s89, %s91
    %p95 = scmp.eq.s32.totalorder %s13, 0
    %p96 = por %p94, %p95
    %p97 = scmp.ne.s32.totalorder %s89, %s91
    %p98 = scmp.eq.s32.totalorder %s18, 7
    %p99 = por %p97, %p98
    %p100 = scmp.ne.s32.totalorder %s91, %s92
    %p101 = scmp.eq.s32.totalorder %s18, 0
    %p102 = por %p100, %p101
    %p103 = scmp.ne.s32.totalorder %s91, %s92
    %p104 = scmp.eq.s32.totalorder %s19, 7
    %p105 = por %p103, %p104
    %p107 = scmp.ne.s32.totalorder %s92, %s106
    %p108 = scmp.eq.s32.totalorder %s19, 0
    %p109 = por %p107, %p108
    %s111 = sadd.s32 %s110, 1
    %p114 = scmp.eq.s32.totalorder %s13, 7
    %p115 = scmp.ne.s32.totalorder %s110, %s112
    %p116 = scmp.eq.s32.totalorder %s13, 0
    %p117 = por %p115, %p116
    %p118 = scmp.ne.s32.totalorder %s110, %s112
    %p119 = scmp.eq.s32.totalorder %s18, 7
    %p120 = por %p118, %p119
    %p121 = scmp.ne.s32.totalorder %s112, %s113
    %p122 = scmp.eq.s32.totalorder %s18, 0
    %p123 = por %p121, %p122
    %p124 = scmp.ne.s32.totalorder %s112, %s113
    %p125 = scmp.eq.s32.totalorder %s19, 7
    %p126 = por %p124, %p125
    %p128 = scmp.ne.s32.totalorder %s113, %s127
    %p129 = scmp.eq.s32.totalorder %s19, 0
    %p130 = por %p128, %p129
    %s132 = sadd.s32 %s131, 1
    %p135 = scmp.eq.s32.totalorder %s13, 7
    %p136 = scmp.ne.s32.totalorder %s131, %s133
    %p137 = scmp.eq.s32.totalorder %s13, 0
    %p138 = por %p136, %p137
    %p139 = scmp.ne.s32.totalorder %s131, %s133
    %p140 = scmp.eq.s32.totalorder %s18, 7
    %p141 = por %p139, %p140
    %p142 = scmp.ne.s32.totalorder %s133, %s134
    %p143 = scmp.eq.s32.totalorder %s18, 0
    %p144 = por %p142, %p143
    %p145 = scmp.ne.s32.totalorder %s133, %s134
    %p146 = scmp.eq.s32.totalorder %s19, 7
    %p147 = por %p145, %p146
    %p149 = scmp.ne.s32.totalorder %s134, %s148
    %p150 = scmp.eq.s32.totalorder %s19, 0
    %p151 = por %p149, %p150
    %s152 = ssub.s32 %s13, %s20
    %p153 = scmp.eq.s32.totalorder %s152, 0
    %s155 = sadd.s32 %s154, 1
    %s156 = scalar_select %p153, %s154, %s155
    %p159 = pneg %p153
    %p160 = scmp.eq.s32.totalorder %s13, 7
    %p161 = por %p159, %p160
    %p162 = scmp.ne.s32.totalorder %s154, %s157
    %p163 = scmp.eq.s32.totalorder %s13, 0
    %p164 = por %p162, %p163
    %p165 = scmp.ne.s32.totalorder %s154, %s157
    %p166 = scmp.eq.s32.totalorder %s18, 7
    %p167 = por %p165, %p166
    %p168 = scmp.ne.s32.totalorder %s157, %s158
    %p169 = scmp.eq.s32.totalorder %s18, 0
    %p170 = por %p168, %p169
    %p171 = scmp.ne.s32.totalorder %s157, %s158
    %p172 = scmp.eq.s32.totalorder %s19, 7
    %p173 = por %p171, %p172
    %p175 = scmp.ne.s32.totalorder %s158, %s174
    %p176 = scmp.eq.s32.totalorder %s19, 0
    %p177 = por %p175, %p176
    %s178 = ssub.s32 %s13, %s20
    %p179 = scmp.eq.s32.totalorder %s178, 0
    %s181 = sadd.s32 %s180, 1
    %s182 = scalar_select %p179, %s180, %s181
    %p185 = pneg %p179
    %p186 = scmp.eq.s32.totalorder %s13, 7
    %p187 = por %p185, %p186
    %p188 = scmp.ne.s32.totalorder %s180, %s183
    %p189 = scmp.eq.s32.totalorder %s13, 0
    %p190 = por %p188, %p189
    %p191 = scmp.ne.s32.totalorder %s180, %s183
    %p192 = scmp.eq.s32.totalorder %s18, 7
    %p193 = por %p191, %p192
    %p194 = scmp.ne.s32.totalorder %s183, %s184
    %p195 = scmp.eq.s32.totalorder %s18, 0
    %p196 = por %p194, %p195
    %p197 = scmp.ne.s32.totalorder %s183, %s184
    %p198 = scmp.eq.s32.totalorder %s19, 7
    %p199 = por %p197, %p198
    %p201 = scmp.ne.s32.totalorder %s184, %s200
    %p202 = scmp.eq.s32.totalorder %s19, 0
    %p203 = por %p201, %p202
    %p204 = scmp.le.s32.totalorder 1, %s13
    %p205 = scmp.lt.s32.totalorder %s13, 9
    %p206 = pnand %p204, %p205
    %p207 = pneg %p206
    // Predicated region
    $region9: #{tpu_custom_call.1} parent=5 // pred_check
      _
    $region10: #{tpu_custom_call.1} parent=5 // pred_check_branch
      %209 = sbr.rel (%p206) target = $region12
    $region11: #{tpu_custom_call.1} parent=5 // pred_region
      %s210 = ssub.s32 %s13, 1
      // Predicated region
      $region13: #{tpu_custom_call.1} parent=11 // pred_check
        %p211 = pneg %p60
      $region14: #{tpu_custom_call.1} parent=11 // pred_check_branch
        %213 = sbr.rel (%p211) target = $region16
      $region15: #{tpu_custom_call.1} parent=11 // pred_region
        _
      $region16: #{tpu_custom_call.1} parent=11 // pred_fallthru
        _
      // Predicated region
      $region17: #{tpu_custom_call.1} parent=11 // pred_check
        %p214 = pneg %p81
      $region18: #{tpu_custom_call.1} parent=11 // pred_check_branch
        %216 = sbr.rel (%p214) target = $region20
      $region19: #{tpu_custom_call.1} parent=11 // pred_region
        _
      $region20: #{tpu_custom_call.1} parent=11 // pred_fallthru
        _
      // Predicated region
      $region21: #{tpu_custom_call.1} parent=11 // pred_check
        %p217 = pneg %p102
      $region22: #{tpu_custom_call.1} parent=11 // pred_check_branch
        %219 = sbr.rel (%p217) target = $region24
      $region23: #{tpu_custom_call.1} parent=11 // pred_region
        _
      $region24: #{tpu_custom_call.1} parent=11 // pred_fallthru
        _
      // Predicated region
      $region25: #{tpu_custom_call.1} parent=11 // pred_check
        %p220 = pneg %p123
      $region26: #{tpu_custom_call.1} parent=11 // pred_check_branch
        %222 = sbr.rel (%p220) target = $region28
      $region27: #{tpu_custom_call.1} parent=11 // pred_region
        _
      $region28: #{tpu_custom_call.1} parent=11 // pred_fallthru
        _
      // Predicated region
      $region29: #{tpu_custom_call.1} parent=11 // pred_check
        %p223 = pneg %p144
      $region30: #{tpu_custom_call.1} parent=11 // pred_check_branch
        %225 = sbr.rel (%p223) target = $region32
      $region31: #{tpu_custom_call.1} parent=11 // pred_region
        _
      $region32: #{tpu_custom_call.1} parent=11 // pred_fallthru
        _
    $region12: #{tpu_custom_call.1} parent=5 // pred_fallthru
      _
    %p226 = scmp.lt.s32.totalorder %s13, 8
    // Predicated region
    $region33: #{tpu_custom_call.1} parent=5 // pred_check
      %p227 = pneg %p226
    $region34: #{tpu_custom_call.1} parent=5 // pred_check_branch
      %229 = sbr.rel (%p227) target = $region36
    $region35: #{tpu_custom_call.1} parent=5 // pred_region
      // Predicated region
      $region37: #{tpu_custom_call.1} parent=35 // pred_check
        %p230 = pneg %p33
      $region38: #{tpu_custom_call.1} parent=35 // pred_check_branch
        %232 = sbr.rel (%p230) target = $region40
      $region39: #{tpu_custom_call.1} parent=35 // pred_region
        %p233 = scmp.lt.s32.totalorder %s13, 7
        %s234 = scalar_select %p233, %s13, 7
        %s235 = smul.addr %s234, 32
        %s236 = smul.addr %s235, 8
        %s237 = scalar_lea.vmem %s0, %s236
      $region40: #{tpu_custom_call.1} parent=35 // pred_fallthru
        _
      // Predicated region
      $region41: #{tpu_custom_call.1} parent=35 // pred_check
        %p238 = pneg %p164
      $region42: #{tpu_custom_call.1} parent=35 // pred_check_branch
        %240 = sbr.rel (%p238) target = $region44
      $region43: #{tpu_custom_call.1} parent=35 // pred_region
        %p241 = scmp.lt.s32.totalorder %s13, 7
        %s242 = scalar_select %p241, %s13, 7
        %s243 = scalar_lea.vmem %s6, %s242
      $region44: #{tpu_custom_call.1} parent=35 // pred_fallthru
        _
    $region36: #{tpu_custom_call.1} parent=5 // pred_fallthru
      _
    %p244 = scmp.le.s32.totalorder 1, %s13
    %p245 = scmp.lt.s32.totalorder %s13, 9
    %p246 = pnand %p244, %p245
    %p247 = pneg %p246
    // Predicated region
    $region45: #{tpu_custom_call.1} parent=5 // pred_check
      _
    $region46: #{tpu_custom_call.1} parent=5 // pred_check_branch
      %249 = sbr.rel (%p246) target = $region48
    $region47: #{tpu_custom_call.1} parent=5 // pred_region
      %s250 = ssub.s32 %s13, 1
      %p251 = scmp.lt.s32.totalorder %s18, 7
      %s252 = scalar_select %p251, %s18, 7
      %s253 = smul.addr %s252, 32
      %s254 = smul.addr %s253, 8
      %s255 = scalar_lea.vmem %s0, %s254
      %p256 = pneg %p39
      %p257 = pneg %p36
      %p258 = pneg %p60
      %p259 = pneg %p57
      %p260 = pneg %p81
      %p261 = pneg %p78
      %p262 = pneg %p102
      %p263 = pneg %p99
      %p264 = pneg %p123
      %p265 = pneg %p120
      %p266 = pneg %p144
      %p267 = pneg %p141
      %p268 = scmp.lt.s32.totalorder %s18, 7
      %s269 = scalar_select %p268, %s18, 7
      %s270 = scalar_lea.vmem %s6, %s269
      %p271 = pneg %p170
      %p272 = pneg %p167
      %p273 = pneg %p196
      %p274 = pneg %p193
      %p275 = scmp.lt.s32.totalorder %s18, 7
      %s276 = scalar_select %p275, %s18, 7
      %s277 = smul.addr %s276, 32
      %s278 = smul.addr %s277, 8
      %s279 = scalar_lea.vmem %s7, %s278
      %p280 = scmp.lt.s32.totalorder %s18, 7
      %s281 = scalar_select %p280, %s18, 7
      %s282 = smul.addr %s281, 32
      %s283 = smul.addr %s282, 8
      %s284 = scalar_lea.vmem %s0, %s283
      %p285 = scmp.lt.s32.totalorder %s18, 7
      %s286 = scalar_select %p285, %s18, 7
      %s287 = scalar_lea.vmem %s6, %s286
      %p288 = scmp.lt.s32.totalorder %s18, 7
      %s289 = scalar_select %p288, %s18, 7
      %s290 = smul.addr %s289, 32
      %s291 = smul.addr %s290, 8
      %s292 = scalar_lea.vmem %s7, %s291
      %v293 = vld [vmem:[%s284] sm:$0xff]
      %v294 = vld [vmem:[%s284 + $0x8] sm:$0xff]
      %v295 = vld [vmem:[%s284 + $0x10] sm:$0xff]
      %v296 = vld [vmem:[%s284 + $0x18] sm:$0xff]
      %v297 = vld [vmem:[%s284 + $0x20] sm:$0xff]
      %v298 = vld [vmem:[%s284 + $0x28] sm:$0xff]
      %v299 = vld [vmem:[%s284 + $0x30] sm:$0xff]
      %v300 = vld [vmem:[%s284 + $0x38] sm:$0xff]
      %v301 = vld [vmem:[%s284 + $0x40] sm:$0xff]
      %v302 = vld [vmem:[%s284 + $0x48] sm:$0xff]
      %v303 = vld [vmem:[%s284 + $0x50] sm:$0xff]
      %v304 = vld [vmem:[%s284 + $0x58] sm:$0xff]
      %v305 = vld [vmem:[%s284 + $0x60] sm:$0xff]
      %v306 = vld [vmem:[%s284 + $0x68] sm:$0xff]
      %v307 = vld [vmem:[%s284 + $0x70] sm:$0xff]
      %v308 = vld [vmem:[%s284 + $0x78] sm:$0xff]
      %v309 = vld [vmem:[%s284 + $0x80] sm:$0xff]
      %v310 = vld [vmem:[%s284 + $0x88] sm:$0xff]
      %v311 = vld [vmem:[%s284 + $0x90] sm:$0xff]
      %v312 = vld [vmem:[%s284 + $0x98] sm:$0xff]
      %v313 = vld [vmem:[%s284 + $0xa0] sm:$0xff]
      %v314 = vld [vmem:[%s284 + $0xa8] sm:$0xff]
      %v315 = vld [vmem:[%s284 + $0xb0] sm:$0xff]
      %v316 = vld [vmem:[%s284 + $0xb8] sm:$0xff]
      %v317 = vld [vmem:[%s284 + $0xc0] sm:$0xff]
      %v318 = vld [vmem:[%s284 + $0xc8] sm:$0xff]
      %v319 = vld [vmem:[%s284 + $0xd0] sm:$0xff]
      %v320 = vld [vmem:[%s284 + $0xd8] sm:$0xff]
      %v321 = vld [vmem:[%s284 + $0xe0] sm:$0xff]
      %v322 = vld [vmem:[%s284 + $0xe8] sm:$0xff]
      %v323 = vld [vmem:[%s284 + $0xf0] sm:$0xff]
      %v324 = vld [vmem:[%s284 + $0xf8] sm:$0xff]
      %v325 = vld [vmem:[%s1] sm:$0x1]
      %v326 = vld [vmem:[%s2] sm:$0x1]
      %v327 = vld [vmem:[%s3] sm:$0xf]
      %v328 = vld [vmem:[%s4] sm:$0x3]
      %vm329 = vcmask 31744
      %v330 = vsel %vm329, %v293, 0.0
      %v331 = vsel %vm329, %v294, 0.0
      %v332 = vadd.f32 %v330, %v331
      %v333 = vsel %vm329, %v295, 0.0
      %v334 = vadd.f32 %v332, %v333
      %v335 = vsel %vm329, %v296, 0.0
      %v336 = vadd.f32 %v334, %v335
      %v337 = vsel %vm329, %v297, 0.0
      %v338 = vadd.f32 %v336, %v337
      %v339 = vsel %vm329, %v298, 0.0
      %v340 = vadd.f32 %v338, %v339
      %v341 = vsel %vm329, %v299, 0.0
      %v342 = vadd.f32 %v340, %v341
      %v343 = vsel %vm329, %v300, 0.0
      %v344 = vadd.f32 %v342, %v343
      %v345 = vsel %vm329, %v301, 0.0
      %v346 = vadd.f32 %v344, %v345
      %v347 = vsel %vm329, %v302, 0.0
      %v348 = vadd.f32 %v346, %v347
      %v349 = vsel %vm329, %v303, 0.0
      %v350 = vadd.f32 %v348, %v349
      %v351 = vsel %vm329, %v304, 0.0
      %v352 = vadd.f32 %v350, %v351
      %v353 = vsel %vm329, %v305, 0.0
      %v354 = vadd.f32 %v352, %v353
      %v355 = vsel %vm329, %v306, 0.0
      %v356 = vadd.f32 %v354, %v355
      %v357 = vsel %vm329, %v307, 0.0
      %v358 = vadd.f32 %v356, %v357
      %v359 = vsel %vm329, %v308, 0.0
      %v360 = vadd.f32 %v358, %v359
      %v361 = vsel %vm329, %v309, 0.0
      %v362 = vadd.f32 %v360, %v361
      %v363 = vsel %vm329, %v310, 0.0
      %v364 = vadd.f32 %v362, %v363
      %v365 = vsel %vm329, %v311, 0.0
      %v366 = vadd.f32 %v364, %v365
      %v367 = vsel %vm329, %v312, 0.0
      %v368 = vadd.f32 %v366, %v367
      %v369 = vsel %vm329, %v313, 0.0
      %v370 = vadd.f32 %v368, %v369
      %v371 = vsel %vm329, %v314, 0.0
      %v372 = vadd.f32 %v370, %v371
      %v373 = vsel %vm329, %v315, 0.0
      %v374 = vadd.f32 %v372, %v373
      %v375 = vsel %vm329, %v316, 0.0
      %v376 = vadd.f32 %v374, %v375
      %v377 = vsel %vm329, %v317, 0.0
      %v378 = vadd.f32 %v376, %v377
      %v379 = vsel %vm329, %v318, 0.0
      %v380 = vadd.f32 %v378, %v379
      %v381 = vsel %vm329, %v319, 0.0
      %v382 = vadd.f32 %v380, %v381
      %v383 = vsel %vm329, %v320, 0.0
      %v384 = vadd.f32 %v382, %v383
      %v385 = vsel %vm329, %v321, 0.0
      %v386 = vadd.f32 %v384, %v385
      %v387 = vsel %vm329, %v322, 0.0
      %v388 = vadd.f32 %v386, %v387
      %v389 = vsel %vm329, %v323, 0.0
      %v390 = vadd.f32 %v388, %v389
      %v391 = vsel %vm329, %v324, 0.0
      %v392 = vadd.f32 %v390, %v391
      %v393 = vrot.slane %v392, 4
      %v394 = vadd.f32 %v392, %v393
      %v395 = vrot.slane %v394, 2
      %v396 = vadd.f32 %v394, %v395
      %v397 = vrot.slane %v396, 1
      %v398 = vadd.f32 %v396, %v397
      %v399 = vmul.f32 %v293, %v293
      %v400 = vmul.f32 %v294, %v294
      %v401 = vmul.f32 %v295, %v295
      %v402 = vmul.f32 %v296, %v296
      %v403 = vmul.f32 %v297, %v297
      %v404 = vmul.f32 %v298, %v298
      %v405 = vmul.f32 %v299, %v299
      %v406 = vmul.f32 %v300, %v300
      %v407 = vmul.f32 %v301, %v301
      %v408 = vmul.f32 %v302, %v302
      %v409 = vmul.f32 %v303, %v303
      %v410 = vmul.f32 %v304, %v304
      %v411 = vmul.f32 %v305, %v305
      %v412 = vmul.f32 %v306, %v306
      %v413 = vmul.f32 %v307, %v307
      %v414 = vmul.f32 %v308, %v308
      %v415 = vmul.f32 %v309, %v309
      %v416 = vmul.f32 %v310, %v310
      %v417 = vmul.f32 %v311, %v311
      %v418 = vmul.f32 %v312, %v312
      %v419 = vmul.f32 %v313, %v313
      %v420 = vmul.f32 %v314, %v314
      %v421 = vmul.f32 %v315, %v315
      %v422 = vmul.f32 %v316, %v316
      %v423 = vmul.f32 %v317, %v317
      %v424 = vmul.f32 %v318, %v318
      %v425 = vmul.f32 %v319, %v319
      %v426 = vmul.f32 %v320, %v320
      %v427 = vmul.f32 %v321, %v321
      %v428 = vmul.f32 %v322, %v322
      %v429 = vmul.f32 %v323, %v323
      %v430 = vmul.f32 %v324, %v324
      %v431 = vsel %vm329, %v399, 0.0
      %v432 = vsel %vm329, %v400, 0.0
      %v433 = vadd.f32 %v431, %v432
      %v434 = vsel %vm329, %v401, 0.0
      %v435 = vadd.f32 %v433, %v434
      %v436 = vsel %vm329, %v402, 0.0
      %v437 = vadd.f32 %v435, %v436
      %v438 = vsel %vm329, %v403, 0.0
      %v439 = vadd.f32 %v437, %v438
      %v440 = vsel %vm329, %v404, 0.0
      %v441 = vadd.f32 %v439, %v440
      %v442 = vsel %vm329, %v405, 0.0
      %v443 = vadd.f32 %v441, %v442
      %v444 = vsel %vm329, %v406, 0.0
      %v445 = vadd.f32 %v443, %v444
      %v446 = vsel %vm329, %v407, 0.0
      %v447 = vadd.f32 %v445, %v446
      %v448 = vsel %vm329, %v408, 0.0
      %v449 = vadd.f32 %v447, %v448
      %v450 = vsel %vm329, %v409, 0.0
      %v451 = vadd.f32 %v449, %v450
      %v452 = vsel %vm329, %v410, 0.0
      %v453 = vadd.f32 %v451, %v452
      %v454 = vsel %vm329, %v411, 0.0
      %v455 = vadd.f32 %v453, %v454
      %v456 = vsel %vm329, %v412, 0.0
      %v457 = vadd.f32 %v455, %v456
      %v458 = vsel %vm329, %v413, 0.0
      %v459 = vadd.f32 %v457, %v458
      %v460 = vsel %vm329, %v414, 0.0
      %v461 = vadd.f32 %v459, %v460
      %v462 = vsel %vm329, %v415, 0.0
      %v463 = vadd.f32 %v461, %v462
      %v464 = vsel %vm329, %v416, 0.0
      %v465 = vadd.f32 %v463, %v464
      %v466 = vsel %vm329, %v417, 0.0
      %v467 = vadd.f32 %v465, %v466
      %v468 = vsel %vm329, %v418, 0.0
      %v469 = vadd.f32 %v467, %v468
      %v470 = vsel %vm329, %v419, 0.0
      %v471 = vadd.f32 %v469, %v470
      %v472 = vsel %vm329, %v420, 0.0
      %v473 = vadd.f32 %v471, %v472
      %v474 = vsel %vm329, %v421, 0.0
      %v475 = vadd.f32 %v473, %v474
      %v476 = vsel %vm329, %v422, 0.0
      %v477 = vadd.f32 %v475, %v476
      %v478 = vsel %vm329, %v423, 0.0
      %v479 = vadd.f32 %v477, %v478
      %v480 = vsel %vm329, %v424, 0.0
      %v481 = vadd.f32 %v479, %v480
      %v482 = vsel %vm329, %v425, 0.0
      %v483 = vadd.f32 %v481, %v482
      %v484 = vsel %vm329, %v426, 0.0
      %v485 = vadd.f32 %v483, %v484
      %v486 = vsel %vm329, %v427, 0.0
      %v487 = vadd.f32 %v485, %v486
      %v488 = vsel %vm329, %v428, 0.0
      %v489 = vadd.f32 %v487, %v488
      %v490 = vsel %vm329, %v429, 0.0
      %v491 = vadd.f32 %v489, %v490
      %v492 = vsel %vm329, %v430, 0.0
      %v493 = vadd.f32 %v491, %v492
      %v494 = vrot.slane %v493, 4
      %v495 = vadd.f32 %v493, %v494
      %v496 = vrot.slane %v495, 2
      %v497 = vadd.f32 %v495, %v496
      %v498 = vrot.slane %v497, 1
      %v499 = vadd.f32 %v497, %v498
      %v501 = vsel %vm329, %v398, 0
      %vm503 = vcmask 1043456
      %v505 = vsel %vm503, %v327, 0
      %507 = vmatprep.subr.mxu0 0.0
      %508 = vmatpush1.msra.mxu0 0.0
      %509 = vmatprep.subr.mxu0 0.0
      %510 = vmatpush1.msra.mxu0 0.0
      %511 = vmatprep.subr.mxu0 0.0
      %512 = vmatpush1.msra.mxu0 0.0
      %513 = vmatprep.subr.mxu0 0.0
      %514 = vmatpush1.msra.mxu0 0.0
      %515 = vmatprep.subr.mxu0 0.0
      %516 = vmatpush1.msra.mxu0 0.0
      %517 = vmatprep.subr.mxu0 0.0
      %518 = vmatpush1.msra.mxu0 0.0
      %519 = vmatprep.subr.mxu0 0.0
      %520 = vmatpush1.msra.mxu0 0.0
      %521 = vmatprep.subr.mxu0 0.0
      %522 = vmatpush1.msra.mxu0 0.0
      %523 = vmatprep.subr.mxu0 0.0
      %524 = vmatpush1.msra.mxu0 0.0
      %525 = vmatprep.subr.mxu0 0.0
      %526 = vmatpush1.msra.mxu0 0.0
      %527 = vmatprep.subr.mxu0 0.0
      %528 = vmatpush1.msra.mxu0 0.0
      %529 = vmatprep.subr.mxu0 0.0
      %530 = vmatpush1.msra.mxu0 0.0
      %531 = vmatprep.subr.mxu0 0.0
      %532 = vmatpush1.msra.mxu0 0.0
      %533 = vmatprep.subr.mxu0 0.0
      %534 = vmatpush1.msra.mxu0 0.0
      %535 = vmatprep.subr.mxu0 0.0
      %536 = vmatpush1.msra.mxu0 0.0
      %537 = vmatprep.subr.mxu0 0.0
      %538 = vmatpush1.msra.mxu0 %v505
      %539 = vmatprep.subr.mxu0 0.0
      %540 = vmatpush2.msra.mxu0 0.0
      %541 = vmatprep.subr.mxu0 0.0
      %542 = vmatpush2.msra.mxu0 0.0
      %543 = vmatprep.subr.mxu0 0.0
      %544 = vmatpush2.msra.mxu0 0.0
      %545 = vmatprep.subr.mxu0 0.0
      %546 = vmatpush2.msra.mxu0 0.0
      %547 = vmatprep.subr.mxu0 0.0
      %548 = vmatpush2.msra.mxu0 0.0
      %549 = vmatprep.subr.mxu0 0.0
      %550 = vmatpush2.msra.mxu0 0.0
      %551 = vmatprep.subr.mxu0 0.0
      %552 = vmatpush2.msra.mxu0 0.0
      %553 = vmatprep.subr.mxu0 0.0
      %554 = vmatpush2.msra.mxu0 0.0
      %555 = vmatprep.subr.mxu0 0.0
      %556 = vmatpush2.msra.mxu0 0.0
      %557 = vmatprep.subr.mxu0 0.0
      %558 = vmatpush2.msra.mxu0 0.0
      %559 = vmatprep.subr.mxu0 0.0
      %560 = vmatpush2.msra.mxu0 0.0
      %561 = vmatprep.subr.mxu0 0.0
      %562 = vmatpush2.msra.mxu0 0.0
      %563 = vmatprep.subr.mxu0 0.0
      %564 = vmatpush2.msra.mxu0 0.0
      %565 = vmatprep.subr.mxu0 0.0
      %566 = vmatpush2.msra.mxu0 0.0
      %567 = vmatprep.subr.mxu0 0.0
      %568 = vmatpush2.msra.mxu0 0.0
      %569 = vmatprep.subr.mxu0 0.0
      %570 = vmatpush2.msra.mxu0 0.0
      %571 = vmatprep.mubr.f32.mxu0 0.0
      %572 = vmatmul.mubr.f32.gmra.mxu0 %v501
      %v573 = vpop.f32.mrf.mxu0
      %v574 = vadd.f32 0.0, %v573
      %v575 = vpop.f32.mrf.mxu0
      %576 = vdwg.mxu0
      %v578 = vsel %vm329, %v499, 0
      %580 = vmatprep.subr.mxu0 0.0
      %581 = vmatpush1.msra.mxu0 0.0
      %582 = vmatprep.subr.mxu0 0.0
      %583 = vmatpush1.msra.mxu0 0.0
      %584 = vmatprep.subr.mxu0 0.0
      %585 = vmatpush1.msra.mxu0 0.0
      %586 = vmatprep.subr.mxu0 0.0
      %587 = vmatpush1.msra.mxu0 0.0
      %588 = vmatprep.subr.mxu0 0.0
      %589 = vmatpush1.msra.mxu0 0.0
      %590 = vmatprep.subr.mxu0 0.0
      %591 = vmatpush1.msra.mxu0 0.0
      %592 = vmatprep.subr.mxu0 0.0
      %593 = vmatpush1.msra.mxu0 0.0
      %594 = vmatprep.subr.mxu0 0.0
      %595 = vmatpush1.msra.mxu0 0.0
      %596 = vmatprep.subr.mxu0 0.0
      %597 = vmatpush1.msra.mxu0 0.0
      %598 = vmatprep.subr.mxu0 0.0
      %599 = vmatpush1.msra.mxu0 0.0
      %600 = vmatprep.subr.mxu0 0.0
      %601 = vmatpush1.msra.mxu0 0.0
      %602 = vmatprep.subr.mxu0 0.0
      %603 = vmatpush1.msra.mxu0 0.0
      %604 = vmatprep.subr.mxu0 0.0
      %605 = vmatpush1.msra.mxu0 0.0
      %606 = vmatprep.subr.mxu0 0.0
      %607 = vmatpush1.msra.mxu0 0.0
      %608 = vmatprep.subr.mxu0 0.0
      %609 = vmatpush1.msra.mxu0 0.0
      %610 = vmatprep.subr.mxu0 0.0
      %611 = vmatpush1.msra.mxu0 %v505
      %612 = vmatprep.subr.mxu0 0.0
      %613 = vmatpush2.msra.mxu0 0.0
      %614 = vmatprep.subr.mxu0 0.0
      %615 = vmatpush2.msra.mxu0 0.0
      %616 = vmatprep.subr.mxu0 0.0
      %617 = vmatpush2.msra.mxu0 0.0
      %618 = vmatprep.subr.mxu0 0.0
      %619 = vmatpush2.msra.mxu0 0.0
      %620 = vmatprep.subr.mxu0 0.0
      %621 = vmatpush2.msra.mxu0 0.0
      %622 = vmatprep.subr.mxu0 0.0
      %623 = vmatpush2.msra.mxu0 0.0
      %624 = vmatprep.subr.mxu0 0.0
      %625 = vmatpush2.msra.mxu0 0.0
      %626 = vmatprep.subr.mxu0 0.0
      %627 = vmatpush2.msra.mxu0 0.0
      %628 = vmatprep.subr.mxu0 0.0
      %629 = vmatpush2.msra.mxu0 0.0
      %630 = vmatprep.subr.mxu0 0.0
      %631 = vmatpush2.msra.mxu0 0.0
      %632 = vmatprep.subr.mxu0 0.0
      %633 = vmatpush2.msra.mxu0 0.0
      %634 = vmatprep.subr.mxu0 0.0
      %635 = vmatpush2.msra.mxu0 0.0
      %636 = vmatprep.subr.mxu0 0.0
      %637 = vmatpush2.msra.mxu0 0.0
      %638 = vmatprep.subr.mxu0 0.0
      %639 = vmatpush2.msra.mxu0 0.0
      %640 = vmatprep.subr.mxu0 0.0
      %641 = vmatpush2.msra.mxu0 0.0
      %642 = vmatprep.subr.mxu0 0.0
      %643 = vmatpush2.msra.mxu0 0.0
      %644 = vmatprep.mubr.f32.mxu0 0.0
      %645 = vmatmul.mubr.f32.gmra.mxu0 %v578
      %v646 = vpop.f32.mrf.mxu0
      %v647 = vadd.f32 0.0, %v646
      %v648 = vpop.f32.mrf.mxu0
      %649 = vdwg.mxu0
      %v650 = vrcp.pop 512.0
      %v651 = vmul.f32 %v574, %v650
      %v652 = vmul.f32 %v647, %v650
      %v653 = vmul.f32 %v651, %v651
      %v654 = vsub.f32 %v652, %v653
      %v655 = vmax.f32 %v654, 0.0
      %v656 = vadd.f32 %v655, 1e-06
      %v657 = vrsqrt.pop %v656
      %v658 = vmul.f32 %v656, %v657
      %vm659 = vcmp.eq.f32.partialorder %v656, inf
      %v660 = vsel %vm659, %v656, %v658
      %vm661 = vcmp.eq.f32.partialorder %v656, 0.0
      %v662 = vand.u32 %v656, 2147483648
      %v663 = vsel %vm661, %v662, %v660
      %v664 = vrcp.pop %v663
      %v665 = vmul.f32 1.0, %v664
      %vm666 = vcmask 15360
      %v668 = vsel %vm666, %v651, 0
      %vm670 = vcmask 1041408
      %v672 = vsel %vm670, %v328, 0
      %674 = vmatprep.subr.mxu0 0.0
      %675 = vmatpush1.msra.mxu0 0.0
      %676 = vmatprep.subr.mxu0 0.0
      %677 = vmatpush1.msra.mxu0 0.0
      %678 = vmatprep.subr.mxu0 0.0
      %679 = vmatpush1.msra.mxu0 0.0
      %680 = vmatprep.subr.mxu0 0.0
      %681 = vmatpush1.msra.mxu0 0.0
      %682 = vmatprep.subr.mxu0 0.0
      %683 = vmatpush1.msra.mxu0 0.0
      %684 = vmatprep.subr.mxu0 0.0
      %685 = vmatpush1.msra.mxu0 0.0
      %686 = vmatprep.subr.mxu0 0.0
      %687 = vmatpush1.msra.mxu0 0.0
      %688 = vmatprep.subr.mxu0 0.0
      %689 = vmatpush1.msra.mxu0 0.0
      %690 = vmatprep.subr.mxu0 0.0
      %691 = vmatpush1.msra.mxu0 0.0
      %692 = vmatprep.subr.mxu0 0.0
      %693 = vmatpush1.msra.mxu0 0.0
      %694 = vmatprep.subr.mxu0 0.0
      %695 = vmatpush1.msra.mxu0 0.0
      %696 = vmatprep.subr.mxu0 0.0
      %697 = vmatpush1.msra.mxu0 0.0
      %698 = vmatprep.subr.mxu0 0.0
      %699 = vmatpush1.msra.mxu0 0.0
      %700 = vmatprep.subr.mxu0 0.0
      %701 = vmatpush1.msra.mxu0 0.0
      %702 = vmatprep.subr.mxu0 0.0
      %703 = vmatpush1.msra.mxu0 0.0
      %704 = vmatprep.subr.mxu0 0.0
      %705 = vmatpush1.msra.mxu0 %v672
      %706 = vmatprep.subr.mxu0 0.0
      %707 = vmatpush2.msra.mxu0 0.0
      %708 = vmatprep.subr.mxu0 0.0
      %709 = vmatpush2.msra.mxu0 0.0
      %710 = vmatprep.subr.mxu0 0.0
      %711 = vmatpush2.msra.mxu0 0.0
      %712 = vmatprep.subr.mxu0 0.0
      %713 = vmatpush2.msra.mxu0 0.0
      %714 = vmatprep.subr.mxu0 0.0
      %715 = vmatpush2.msra.mxu0 0.0
      %716 = vmatprep.subr.mxu0 0.0
      %717 = vmatpush2.msra.mxu0 0.0
      %718 = vmatprep.subr.mxu0 0.0
      %719 = vmatpush2.msra.mxu0 0.0
      %720 = vmatprep.subr.mxu0 0.0
      %721 = vmatpush2.msra.mxu0 0.0
      %722 = vmatprep.subr.mxu0 0.0
      %723 = vmatpush2.msra.mxu0 0.0
      %724 = vmatprep.subr.mxu0 0.0
      %725 = vmatpush2.msra.mxu0 0.0
      %726 = vmatprep.subr.mxu0 0.0
      %727 = vmatpush2.msra.mxu0 0.0
      %728 = vmatprep.subr.mxu0 0.0
      %729 = vmatpush2.msra.mxu0 0.0
      %730 = vmatprep.subr.mxu0 0.0
      %731 = vmatpush2.msra.mxu0 0.0
      %732 = vmatprep.subr.mxu0 0.0
      %733 = vmatpush2.msra.mxu0 0.0
      %734 = vmatprep.subr.mxu0 0.0
      %735 = vmatpush2.msra.mxu0 0.0
      %736 = vmatprep.subr.mxu0 0.0
      %737 = vmatpush2.msra.mxu0 0.0
      %738 = vmatprep.mubr.f32.mxu0 0.0
      %739 = vmatmul.mubr.f32.gmra.mxu0 %v668
      %v740 = vpop.f32.mrf.mxu0
      %v741 = vadd.f32 0.0, %v740
      %v742 = vpop.f32.mrf.mxu0
      %743 = vdwg.mxu0
      %v745 = vsel %vm666, %v665, 0
      %747 = vmatprep.subr.mxu0 0.0
      %748 = vmatpush1.msra.mxu0 0.0
      %749 = vmatprep.subr.mxu0 0.0
      %750 = vmatpush1.msra.mxu0 0.0
      %751 = vmatprep.subr.mxu0 0.0
      %752 = vmatpush1.msra.mxu0 0.0
      %753 = vmatprep.subr.mxu0 0.0
      %754 = vmatpush1.msra.mxu0 0.0
      %755 = vmatprep.subr.mxu0 0.0
      %756 = vmatpush1.msra.mxu0 0.0
      %757 = vmatprep.subr.mxu0 0.0
      %758 = vmatpush1.msra.mxu0 0.0
      %759 = vmatprep.subr.mxu0 0.0
      %760 = vmatpush1.msra.mxu0 0.0
      %761 = vmatprep.subr.mxu0 0.0
      %762 = vmatpush1.msra.mxu0 0.0
      %763 = vmatprep.subr.mxu0 0.0
      %764 = vmatpush1.msra.mxu0 0.0
      %765 = vmatprep.subr.mxu0 0.0
      %766 = vmatpush1.msra.mxu0 0.0
      %767 = vmatprep.subr.mxu0 0.0
      %768 = vmatpush1.msra.mxu0 0.0
      %769 = vmatprep.subr.mxu0 0.0
      %770 = vmatpush1.msra.mxu0 0.0
      %771 = vmatprep.subr.mxu0 0.0
      %772 = vmatpush1.msra.mxu0 0.0
      %773 = vmatprep.subr.mxu0 0.0
      %774 = vmatpush1.msra.mxu0 0.0
      %775 = vmatprep.subr.mxu0 0.0
      %776 = vmatpush1.msra.mxu0 0.0
      %777 = vmatprep.subr.mxu0 0.0
      %778 = vmatpush1.msra.mxu0 %v672
      %779 = vmatprep.subr.mxu0 0.0
      %780 = vmatpush2.msra.mxu0 0.0
      %781 = vmatprep.subr.mxu0 0.0
      %782 = vmatpush2.msra.mxu0 0.0
      %783 = vmatprep.subr.mxu0 0.0
      %784 = vmatpush2.msra.mxu0 0.0
      %785 = vmatprep.subr.mxu0 0.0
      %786 = vmatpush2.msra.mxu0 0.0
      %787 = vmatprep.subr.mxu0 0.0
      %788 = vmatpush2.msra.mxu0 0.0
      %789 = vmatprep.subr.mxu0 0.0
      %790 = vmatpush2.msra.mxu0 0.0
      %791 = vmatprep.subr.mxu0 0.0
      %792 = vmatpush2.msra.mxu0 0.0
      %793 = vmatprep.subr.mxu0 0.0
      %794 = vmatpush2.msra.mxu0 0.0
      %795 = vmatprep.subr.mxu0 0.0
      %796 = vmatpush2.msra.mxu0 0.0
      %797 = vmatprep.subr.mxu0 0.0
      %798 = vmatpush2.msra.mxu0 0.0
      %799 = vmatprep.subr.mxu0 0.0
      %800 = vmatpush2.msra.mxu0 0.0
      %801 = vmatprep.subr.mxu0 0.0
      %802 = vmatpush2.msra.mxu0 0.0
      %803 = vmatprep.subr.mxu0 0.0
      %804 = vmatpush2.msra.mxu0 0.0
      %805 = vmatprep.subr.mxu0 0.0
      %806 = vmatpush2.msra.mxu0 0.0
      %807 = vmatprep.subr.mxu0 0.0
      %808 = vmatpush2.msra.mxu0 0.0
      %809 = vmatprep.subr.mxu0 0.0
      %810 = vmatpush2.msra.mxu0 0.0
      %811 = vmatprep.mubr.f32.mxu0 0.0
      %812 = vmatmul.mubr.f32.gmra.mxu0 %v745
      %v813 = vpop.f32.mrf.mxu0
      %v814 = vadd.f32 0.0, %v813
      %v815 = vpop.f32.mrf.mxu0
      %816 = vdwg.mxu0
      %v817 = vmul.f32 %v325, %v814
      %v818 = vmul.f32 %v741, %v817
      %v819 = vsub.f32 %v326, %v818
      %v821 = vlaneseq
      %v822 = vshrl.u32 %v821, 7
      %v823 = vsub.s32 0, %v822
      %v824 = vrot.slane %v817, %v823
      %v826 = vmul.f32 %v293, %v824
      %v827 = vmul.f32 %v294, %v824
      %v828 = vmul.f32 %v295, %v824
      %v829 = vmul.f32 %v296, %v824
      %v830 = vmul.f32 %v297, %v824
      %v831 = vmul.f32 %v298, %v824
      %v832 = vmul.f32 %v299, %v824
      %v833 = vmul.f32 %v300, %v824
      %v834 = vmul.f32 %v301, %v824
      %v835 = vmul.f32 %v302, %v824
      %v836 = vmul.f32 %v303, %v824
      %v837 = vmul.f32 %v304, %v824
      %v838 = vmul.f32 %v305, %v824
      %v839 = vmul.f32 %v306, %v824
      %v840 = vmul.f32 %v307, %v824
      %v841 = vmul.f32 %v308, %v824
      %v842 = vmul.f32 %v309, %v824
      %v843 = vmul.f32 %v310, %v824
      %v844 = vmul.f32 %v311, %v824
      %v845 = vmul.f32 %v312, %v824
      %v846 = vmul.f32 %v313, %v824
      %v847 = vmul.f32 %v314, %v824
      %v848 = vmul.f32 %v315, %v824
      %v849 = vmul.f32 %v316, %v824
      %v850 = vmul.f32 %v317, %v824
      %v851 = vmul.f32 %v318, %v824
      %v852 = vmul.f32 %v319, %v824
      %v853 = vmul.f32 %v320, %v824
      %v854 = vmul.f32 %v321, %v824
      %v855 = vmul.f32 %v322, %v824
      %v856 = vmul.f32 %v323, %v824
      %v857 = vmul.f32 %v324, %v824
      %v859 = vlaneseq
      %v860 = vshrl.u32 %v859, 7
      %v861 = vsub.s32 0, %v860
      %v862 = vrot.slane %v819, %v861
      %v864 = vadd.f32 %v826, %v862
      %v865 = vadd.f32 %v827, %v862
      %v866 = vadd.f32 %v828, %v862
      %v867 = vadd.f32 %v829, %v862
      %v868 = vadd.f32 %v830, %v862
      %v869 = vadd.f32 %v831, %v862
      %v870 = vadd.f32 %v832, %v862
      %v871 = vadd.f32 %v833, %v862
      %v872 = vadd.f32 %v834, %v862
      %v873 = vadd.f32 %v835, %v862
      %v874 = vadd.f32 %v836, %v862
      %v875 = vadd.f32 %v837, %v862
      %v876 = vadd.f32 %v838, %v862
      %v877 = vadd.f32 %v839, %v862
      %v878 = vadd.f32 %v840, %v862
      %v879 = vadd.f32 %v841, %v862
      %v880 = vadd.f32 %v842, %v862
      %v881 = vadd.f32 %v843, %v862
      %v882 = vadd.f32 %v844, %v862
      %v883 = vadd.f32 %v845, %v862
      %v884 = vadd.f32 %v846, %v862
      %v885 = vadd.f32 %v847, %v862
      %v886 = vadd.f32 %v848, %v862
      %v887 = vadd.f32 %v849, %v862
      %v888 = vadd.f32 %v850, %v862
      %v889 = vadd.f32 %v851, %v862
      %v890 = vadd.f32 %v852, %v862
      %v891 = vadd.f32 %v853, %v862
      %v892 = vadd.f32 %v854, %v862
      %v893 = vadd.f32 %v855, %v862
      %v894 = vadd.f32 %v856, %v862
      %v895 = vadd.f32 %v857, %v862
      %v896 = vxor.u32 %v864, 2147483648
      %v897 = vxor.u32 %v865, 2147483648
      %v898 = vxor.u32 %v866, 2147483648
      %v899 = vxor.u32 %v867, 2147483648
      %v900 = vxor.u32 %v868, 2147483648
      %v901 = vxor.u32 %v869, 2147483648
      %v902 = vxor.u32 %v870, 2147483648
      %v903 = vxor.u32 %v871, 2147483648
      %v904 = vxor.u32 %v872, 2147483648
      %v905 = vxor.u32 %v873, 2147483648
      %v906 = vxor.u32 %v874, 2147483648
      %v907 = vxor.u32 %v875, 2147483648
      %v908 = vxor.u32 %v876, 2147483648
      %v909 = vxor.u32 %v877, 2147483648
      %v910 = vxor.u32 %v878, 2147483648
      %v911 = vxor.u32 %v879, 2147483648
      %v912 = vxor.u32 %v880, 2147483648
      %v913 = vxor.u32 %v881, 2147483648
      %v914 = vxor.u32 %v882, 2147483648
      %v915 = vxor.u32 %v883, 2147483648
      %v916 = vxor.u32 %v884, 2147483648
      %v917 = vxor.u32 %v885, 2147483648
      %v918 = vxor.u32 %v886, 2147483648
      %v919 = vxor.u32 %v887, 2147483648
      %v920 = vxor.u32 %v888, 2147483648
      %v921 = vxor.u32 %v889, 2147483648
      %v922 = vxor.u32 %v890, 2147483648
      %v923 = vxor.u32 %v891, 2147483648
      %v924 = vxor.u32 %v892, 2147483648
      %v925 = vxor.u32 %v893, 2147483648
      %v926 = vxor.u32 %v894, 2147483648
      %v927 = vxor.u32 %v895, 2147483648
      %v928 = vmul.f32 %v896, 1.442695
      %v929 = vpow.pop %v928
      %v930 = vmul.f32 %v897, 1.442695
      %v931 = vpow.pop %v930
      %v932 = vmul.f32 %v898, 1.442695
      %v933 = vpow.pop %v932
      %v934 = vmul.f32 %v899, 1.442695
      %v935 = vpow.pop %v934
      %v936 = vmul.f32 %v900, 1.442695
      %v937 = vpow.pop %v936
      %v938 = vmul.f32 %v901, 1.442695
      %v939 = vpow.pop %v938
      %v940 = vmul.f32 %v902, 1.442695
      %v941 = vpow.pop %v940
      %v942 = vmul.f32 %v903, 1.442695
      %v943 = vpow.pop %v942
      %v944 = vmul.f32 %v904, 1.442695
      %v945 = vpow.pop %v944
      %v946 = vmul.f32 %v905, 1.442695
      %v947 = vpow.pop %v946
      %v948 = vmul.f32 %v906, 1.442695
      %v949 = vpow.pop %v948
      %v950 = vmul.f32 %v907, 1.442695
      %v951 = vpow.pop %v950
      %v952 = vmul.f32 %v908, 1.442695
      %v953 = vpow.pop %v952
      %v954 = vmul.f32 %v909, 1.442695
      %v955 = vpow.pop %v954
      %v956 = vmul.f32 %v910, 1.442695
      %v957 = vpow.pop %v956
      %v958 = vmul.f32 %v911, 1.442695
      %v959 = vpow.pop %v958
      %v960 = vmul.f32 %v912, 1.442695
      %v961 = vpow.pop %v960
      %v962 = vmul.f32 %v913, 1.442695
      %v963 = vpow.pop %v962
      %v964 = vmul.f32 %v914, 1.442695
      %v965 = vpow.pop %v964
      %v966 = vmul.f32 %v915, 1.442695
      %v967 = vpow.pop %v966
      %v968 = vmul.f32 %v916, 1.442695
      %v969 = vpow.pop %v968
      %v970 = vmul.f32 %v917, 1.442695
      %v971 = vpow.pop %v970
      %v972 = vmul.f32 %v918, 1.442695
      %v973 = vpow.pop %v972
      %v974 = vmul.f32 %v919, 1.442695
      %v975 = vpow.pop %v974
      %v976 = vmul.f32 %v920, 1.442695
      %v977 = vpow.pop %v976
      %v978 = vmul.f32 %v921, 1.442695
      %v979 = vpow.pop %v978
      %v980 = vmul.f32 %v922, 1.442695
      %v981 = vpow.pop %v980
      %v982 = vmul.f32 %v923, 1.442695
      %v983 = vpow.pop %v982
      %v984 = vmul.f32 %v924, 1.442695
      %v985 = vpow.pop %v984
      %v986 = vmul.f32 %v925, 1.442695
      %v987 = vpow.pop %v986
      %v988 = vmul.f32 %v926, 1.442695
      %v989 = vpow.pop %v988
      %v990 = vmul.f32 %v927, 1.442695
      %v991 = vpow.pop %v990
      %v992 = vadd.f32 %v929, 1.0
      %v993 = vadd.f32 %v931, 1.0
      %v994 = vadd.f32 %v933, 1.0
      %v995 = vadd.f32 %v935, 1.0
      %v996 = vadd.f32 %v937, 1.0
      %v997 = vadd.f32 %v939, 1.0
      %v998 = vadd.f32 %v941, 1.0
      %v999 = vadd.f32 %v943, 1.0
      %v1000 = vadd.f32 %v945, 1.0
      %v1001 = vadd.f32 %v947, 1.0
      %v1002 = vadd.f32 %v949, 1.0
      %v1003 = vadd.f32 %v951, 1.0
      %v1004 = vadd.f32 %v953, 1.0
      %v1005 = vadd.f32 %v955, 1.0
      %v1006 = vadd.f32 %v957, 1.0
      %v1007 = vadd.f32 %v959, 1.0
      %v1008 = vadd.f32 %v961, 1.0
      %v1009 = vadd.f32 %v963, 1.0
      %v1010 = vadd.f32 %v965, 1.0
      %v1011 = vadd.f32 %v967, 1.0
      %v1012 = vadd.f32 %v969, 1.0
      %v1013 = vadd.f32 %v971, 1.0
      %v1014 = vadd.f32 %v973, 1.0
      %v1015 = vadd.f32 %v975, 1.0
      %v1016 = vadd.f32 %v977, 1.0
      %v1017 = vadd.f32 %v979, 1.0
      %v1018 = vadd.f32 %v981, 1.0
      %v1019 = vadd.f32 %v983, 1.0
      %v1020 = vadd.f32 %v985, 1.0
      %v1021 = vadd.f32 %v987, 1.0
      %v1022 = vadd.f32 %v989, 1.0
      %v1023 = vadd.f32 %v991, 1.0
      %v1024 = vrcp.pop %v992
      %v1025 = vmul.f32 1.0, %v1024
      %v1026 = vrcp.pop %v993
      %v1027 = vmul.f32 1.0, %v1026
      %v1028 = vrcp.pop %v994
      %v1029 = vmul.f32 1.0, %v1028
      %v1030 = vrcp.pop %v995
      %v1031 = vmul.f32 1.0, %v1030
      %v1032 = vrcp.pop %v996
      %v1033 = vmul.f32 1.0, %v1032
      %v1034 = vrcp.pop %v997
      %v1035 = vmul.f32 1.0, %v1034
      %v1036 = vrcp.pop %v998
      %v1037 = vmul.f32 1.0, %v1036
      %v1038 = vrcp.pop %v999
      %v1039 = vmul.f32 1.0, %v1038
      %v1040 = vrcp.pop %v1000
      %v1041 = vmul.f32 1.0, %v1040
      %v1042 = vrcp.pop %v1001
      %v1043 = vmul.f32 1.0, %v1042
      %v1044 = vrcp.pop %v1002
      %v1045 = vmul.f32 1.0, %v1044
      %v1046 = vrcp.pop %v1003
      %v1047 = vmul.f32 1.0, %v1046
      %v1048 = vrcp.pop %v1004
      %v1049 = vmul.f32 1.0, %v1048
      %v1050 = vrcp.pop %v1005
      %v1051 = vmul.f32 1.0, %v1050
      %v1052 = vrcp.pop %v1006
      %v1053 = vmul.f32 1.0, %v1052
      %v1054 = vrcp.pop %v1007
      %v1055 = vmul.f32 1.0, %v1054
      %v1056 = vrcp.pop %v1008
      %v1057 = vmul.f32 1.0, %v1056
      %v1058 = vrcp.pop %v1009
      %v1059 = vmul.f32 1.0, %v1058
      %v1060 = vrcp.pop %v1010
      %v1061 = vmul.f32 1.0, %v1060
      %v1062 = vrcp.pop %v1011
      %v1063 = vmul.f32 1.0, %v1062
      %v1064 = vrcp.pop %v1012
      %v1065 = vmul.f32 1.0, %v1064
      %v1066 = vrcp.pop %v1013
      %v1067 = vmul.f32 1.0, %v1066
      %v1068 = vrcp.pop %v1014
      %v1069 = vmul.f32 1.0, %v1068
      %v1070 = vrcp.pop %v1015
      %v1071 = vmul.f32 1.0, %v1070
      %v1072 = vrcp.pop %v1016
      %v1073 = vmul.f32 1.0, %v1072
      %v1074 = vrcp.pop %v1017
      %v1075 = vmul.f32 1.0, %v1074
      %v1076 = vrcp.pop %v1018
      %v1077 = vmul.f32 1.0, %v1076
      %v1078 = vrcp.pop %v1019
      %v1079 = vmul.f32 1.0, %v1078
      %v1080 = vrcp.pop %v1020
      %v1081 = vmul.f32 1.0, %v1080
      %v1082 = vrcp.pop %v1021
      %v1083 = vmul.f32 1.0, %v1082
      %v1084 = vrcp.pop %v1022
      %v1085 = vmul.f32 1.0, %v1084
      %v1086 = vrcp.pop %v1023
      %v1087 = vmul.f32 1.0, %v1086
      %v1088 = vmul.f32 %v864, %v1025
      %v1089 = vmul.f32 %v865, %v1027
      %v1090 = vmul.f32 %v866, %v1029
      %v1091 = vmul.f32 %v867, %v1031
      %v1092 = vmul.f32 %v868, %v1033
      %v1093 = vmul.f32 %v869, %v1035
      %v1094 = vmul.f32 %v870, %v1037
      %v1095 = vmul.f32 %v871, %v1039
      %v1096 = vmul.f32 %v872, %v1041
      %v1097 = vmul.f32 %v873, %v1043
      %v1098 = vmul.f32 %v874, %v1045
      %v1099 = vmul.f32 %v875, %v1047
      %v1100 = vmul.f32 %v876, %v1049
      %v1101 = vmul.f32 %v877, %v1051
      %v1102 = vmul.f32 %v878, %v1053
      %v1103 = vmul.f32 %v879, %v1055
      %v1104 = vmul.f32 %v880, %v1057
      %v1105 = vmul.f32 %v881, %v1059
      %v1106 = vmul.f32 %v882, %v1061
      %v1107 = vmul.f32 %v883, %v1063
      %v1108 = vmul.f32 %v884, %v1065
      %v1109 = vmul.f32 %v885, %v1067
      %v1110 = vmul.f32 %v886, %v1069
      %v1111 = vmul.f32 %v887, %v1071
      %v1112 = vmul.f32 %v888, %v1073
      %v1113 = vmul.f32 %v889, %v1075
      %v1114 = vmul.f32 %v890, %v1077
      %v1115 = vmul.f32 %v891, %v1079
      %v1116 = vmul.f32 %v892, %v1081
      %v1117 = vmul.f32 %v893, %v1083
      %v1118 = vmul.f32 %v894, %v1085
      %v1119 = vmul.f32 %v895, %v1087
      %1120 = vst.msk [vmem:[#allocation2] sm:$0xff] %vm329, 0.0
      %1121 = vst.msk [vmem:[#allocation2 + $0x8] sm:$0xff] %vm329, 0.0
      %1122 = vst.msk [vmem:[#allocation2 + $0x10] sm:$0xff] %vm329, 0.0
      %vm1123 = vcmask 24576
      %1124 = vst.msk [vmem:[#allocation2 + $0x18] sm:$0x1] %vm1123, 0.0
      %1125 = vst.msk [vmem:[#allocation2 + $0x20] sm:$0xff] %vm329, 0.0
      %1126 = vst.msk [vmem:[#allocation2 + $0x28] sm:$0xff] %vm329, 0.0
      %1127 = vst.msk [vmem:[#allocation2 + $0x30] sm:$0xff] %vm329, 0.0
      %1128 = vst.msk [vmem:[#allocation2 + $0x38] sm:$0x1] %vm1123, 0.0
      %1129 = vst.msk [vmem:[#allocation2 + $0x40] sm:$0xff] %vm329, 0.0
      %1130 = vst.msk [vmem:[#allocation2 + $0x48] sm:$0xff] %vm329, 0.0
      %1131 = vst.msk [vmem:[#allocation2 + $0x50] sm:$0xff] %vm329, 0.0
      %1132 = vst.msk [vmem:[#allocation2 + $0x58] sm:$0x1] %vm1123, 0.0
      %1133 = vst.msk [vmem:[#allocation2 + $0x60] sm:$0xff] %vm329, 0.0
      %1134 = vst.msk [vmem:[#allocation2 + $0x68] sm:$0xff] %vm329, 0.0
      %1135 = vst.msk [vmem:[#allocation2 + $0x70] sm:$0xff] %vm329, 0.0
      %1136 = vst.msk [vmem:[#allocation2 + $0x78] sm:$0x1] %vm1123, 0.0
      %1137 = vst.msk [vmem:[#allocation2 + $0x80] sm:$0xff] %vm329, 0.0
      %1138 = vst.msk [vmem:[#allocation2 + $0x88] sm:$0xff] %vm329, 0.0
      %1139 = vst.msk [vmem:[#allocation2 + $0x90] sm:$0xff] %vm329, 0.0
      %1140 = vst.msk [vmem:[#allocation2 + $0x98] sm:$0x1] %vm1123, 0.0
      %1141 = vst.msk [vmem:[#allocation2 + $0xa0] sm:$0xff] %vm329, 0.0
      %1142 = vst.msk [vmem:[#allocation2 + $0xa8] sm:$0xff] %vm329, 0.0
      %1143 = vst.msk [vmem:[#allocation2 + $0xb0] sm:$0xff] %vm329, 0.0
      %1144 = vst.msk [vmem:[#allocation2 + $0xb8] sm:$0x1] %vm1123, 0.0
      %1145 = vst.msk [vmem:[#allocation2 + $0xc0] sm:$0xff] %vm329, 0.0
      %1146 = vst.msk [vmem:[#allocation2 + $0xc8] sm:$0xff] %vm329, 0.0
      %1147 = vst.msk [vmem:[#allocation2 + $0xd0] sm:$0xff] %vm329, 0.0
      %1148 = vst.msk [vmem:[#allocation2 + $0xd8] sm:$0x1] %vm1123, 0.0
      %1149 = vst.msk [vmem:[#allocation2 + $0xe0] sm:$0xff] %vm329, 0.0
      %1150 = vst.msk [vmem:[#allocation2 + $0xe8] sm:$0xff] %vm329, 0.0
      %1151 = vst.msk [vmem:[#allocation2 + $0xf0] sm:$0xff] %vm329, 0.0
      %1152 = vst.msk [vmem:[#allocation2 + $0xf8] sm:$0x1] %vm1123, 0.0
      %1153 = vst.msk [vmem:[#allocation2 + $0x100] sm:$0xff] %vm329, 0.0
      %1154 = vst.msk [vmem:[#allocation2 + $0x108] sm:$0xff] %vm329, 0.0
      %1155 = vst.msk [vmem:[#allocation2 + $0x110] sm:$0xff] %vm329, 0.0
      %1156 = vst.msk [vmem:[#allocation2 + $0x118] sm:$0x1] %vm1123, 0.0
      %1157 = vst.msk [vmem:[#allocation2 + $0x120] sm:$0xff] %vm329, 0.0
      %1158 = vst.msk [vmem:[#allocation2 + $0x128] sm:$0xff] %vm329, 0.0
      %1159 = vst.msk [vmem:[#allocation2 + $0x130] sm:$0xff] %vm329, 0.0
      %1160 = vst.msk [vmem:[#allocation2 + $0x138] sm:$0x1] %vm1123, 0.0
      %1161 = vst.msk [vmem:[#allocation2 + $0x140] sm:$0xff] %vm329, 0.0
      %1162 = vst.msk [vmem:[#allocation2 + $0x148] sm:$0xff] %vm329, 0.0
      %1163 = vst.msk [vmem:[#allocation2 + $0x150] sm:$0xff] %vm329, 0.0
      %1164 = vst.msk [vmem:[#allocation2 + $0x158] sm:$0x1] %vm1123, 0.0
      %1165 = vst.msk [vmem:[#allocation2 + $0x160] sm:$0xff] %vm329, 0.0
      %1166 = vst.msk [vmem:[#allocation2 + $0x168] sm:$0xff] %vm329, 0.0
      %1167 = vst.msk [vmem:[#allocation2 + $0x170] sm:$0xff] %vm329, 0.0
      %1168 = vst.msk [vmem:[#allocation2 + $0x178] sm:$0x1] %vm1123, 0.0
      %1169 = vst.msk [vmem:[#allocation2 + $0x180] sm:$0xff] %vm329, 0.0
      %1170 = vst.msk [vmem:[#allocation2 + $0x188] sm:$0xff] %vm329, 0.0
      %1171 = vst.msk [vmem:[#allocation2 + $0x190] sm:$0xff] %vm329, 0.0
      %1172 = vst.msk [vmem:[#allocation2 + $0x198] sm:$0x1] %vm1123, 0.0
      %1173 = vst.msk [vmem:[#allocation2 + $0x1a0] sm:$0xff] %vm329, 0.0
      %1174 = vst.msk [vmem:[#allocation2 + $0x1a8] sm:$0xff] %vm329, 0.0
      %1175 = vst.msk [vmem:[#allocation2 + $0x1b0] sm:$0xff] %vm329, 0.0
      %1176 = vst.msk [vmem:[#allocation2 + $0x1b8] sm:$0x1] %vm1123, 0.0
      %1177 = vst.msk [vmem:[#allocation2 + $0x1c0] sm:$0xff] %vm329, 0.0
      %1178 = vst.msk [vmem:[#allocation2 + $0x1c8] sm:$0xff] %vm329, 0.0
      %1179 = vst.msk [vmem:[#allocation2 + $0x1d0] sm:$0xff] %vm329, 0.0
      %1180 = vst.msk [vmem:[#allocation2 + $0x1d8] sm:$0x1] %vm1123, 0.0
      %1181 = vst.msk [vmem:[#allocation2 + $0x1e0] sm:$0xff] %vm329, 0.0
      %1182 = vst.msk [vmem:[#allocation2 + $0x1e8] sm:$0xff] %vm329, 0.0
      %1183 = vst.msk [vmem:[#allocation2 + $0x1f0] sm:$0xff] %vm329, 0.0
      %1184 = vst.msk [vmem:[#allocation2 + $0x1f8] sm:$0x1] %vm1123, 0.0
      %1185 = vst.msk [vmem:[#allocation2 + $0x200] sm:$0xff] %vm329, 0.0
      %1186 = vst.msk [vmem:[#allocation2 + $0x208] sm:$0xff] %vm329, 0.0
      %1187 = vst.msk [vmem:[#allocation2 + $0x210] sm:$0xff] %vm329, 0.0
      %1188 = vst.msk [vmem:[#allocation2 + $0x218] sm:$0x1] %vm1123, 0.0
      %1189 = vst.msk [vmem:[#allocation2 + $0x220] sm:$0xff] %vm329, 0.0
      %1190 = vst.msk [vmem:[#allocation2 + $0x228] sm:$0xff] %vm329, 0.0
      %1191 = vst.msk [vmem:[#allocation2 + $0x230] sm:$0xff] %vm329, 0.0
      %1192 = vst.msk [vmem:[#allocation2 + $0x238] sm:$0x1] %vm1123, 0.0
      %s1193 = scalar_lea.vmem [#allocation2], 32
      %1194 = vst.msk [vmem:[%s1193 + $0x8] sm:$0xff] %vm329, %v1088
      %1195 = vst.msk [vmem:[%s1193 + $0x10] sm:$0xff] %vm329, %v1089
      %1196 = vst.msk [vmem:[%s1193 + $0x28] sm:$0xff] %vm329, %v1090
      %1197 = vst.msk [vmem:[%s1193 + $0x30] sm:$0xff] %vm329, %v1091
      %1198 = vst.msk [vmem:[%s1193 + $0x48] sm:$0xff] %vm329, %v1092
      %1199 = vst.msk [vmem:[%s1193 + $0x50] sm:$0xff] %vm329, %v1093
      %1200 = vst.msk [vmem:[%s1193 + $0x68] sm:$0xff] %vm329, %v1094
      %1201 = vst.msk [vmem:[%s1193 + $0x70] sm:$0xff] %vm329, %v1095
      %1202 = vst.msk [vmem:[%s1193 + $0x88] sm:$0xff] %vm329, %v1096
      %1203 = vst.msk [vmem:[%s1193 + $0x90] sm:$0xff] %vm329, %v1097
      %1204 = vst.msk [vmem:[%s1193 + $0xa8] sm:$0xff] %vm329, %v1098
      %1205 = vst.msk [vmem:[%s1193 + $0xb0] sm:$0xff] %vm329, %v1099
      %1206 = vst.msk [vmem:[%s1193 + $0xc8] sm:$0xff] %vm329, %v1100
      %1207 = vst.msk [vmem:[%s1193 + $0xd0] sm:$0xff] %vm329, %v1101
      %1208 = vst.msk [vmem:[%s1193 + $0xe8] sm:$0xff] %vm329, %v1102
      %1209 = vst.msk [vmem:[%s1193 + $0xf0] sm:$0xff] %vm329, %v1103
      %1210 = vst.msk [vmem:[%s1193 + $0x108] sm:$0xff] %vm329, %v1104
      %1211 = vst.msk [vmem:[%s1193 + $0x110] sm:$0xff] %vm329, %v1105
      %1212 = vst.msk [vmem:[%s1193 + $0x128] sm:$0xff] %vm329, %v1106
      %1213 = vst.msk [vmem:[%s1193 + $0x130] sm:$0xff] %vm329, %v1107
      %1214 = vst.msk [vmem:[%s1193 + $0x148] sm:$0xff] %vm329, %v1108
      %1215 = vst.msk [vmem:[%s1193 + $0x150] sm:$0xff] %vm329, %v1109
      %1216 = vst.msk [vmem:[%s1193 + $0x168] sm:$0xff] %vm329, %v1110
      %1217 = vst.msk [vmem:[%s1193 + $0x170] sm:$0xff] %vm329, %v1111
      %1218 = vst.msk [vmem:[%s1193 + $0x188] sm:$0xff] %vm329, %v1112
      %1219 = vst.msk [vmem:[%s1193 + $0x190] sm:$0xff] %vm329, %v1113
      %1220 = vst.msk [vmem:[%s1193 + $0x1a8] sm:$0xff] %vm329, %v1114
      %1221 = vst.msk [vmem:[%s1193 + $0x1b0] sm:$0xff] %vm329, %v1115
      %1222 = vst.msk [vmem:[%s1193 + $0x1c8] sm:$0xff] %vm329, %v1116
      %1223 = vst.msk [vmem:[%s1193 + $0x1d0] sm:$0xff] %vm329, %v1117
      %1224 = vst.msk [vmem:[%s1193 + $0x1e8] sm:$0xff] %vm329, %v1118
      %1225 = vst.msk [vmem:[%s1193 + $0x1f0] sm:$0xff] %vm329, %v1119
      %v1226 = vld [vmem:[#allocation2 + $0x7] sm:$0xff]
      %v1227 = vld [vmem:[#allocation2 + $0xf] sm:$0xff]
      %v1228 = vld [vmem:[#allocation2 + $0x27] sm:$0xff]
      %v1229 = vld [vmem:[#allocation2 + $0x2f] sm:$0xff]
      %v1230 = vld [vmem:[#allocation2 + $0x47] sm:$0xff]
      %v1231 = vld [vmem:[#allocation2 + $0x4f] sm:$0xff]
      %v1232 = vld [vmem:[#allocation2 + $0x67] sm:$0xff]
      %v1233 = vld [vmem:[#allocation2 + $0x6f] sm:$0xff]
      %v1234 = vld [vmem:[#allocation2 + $0x87] sm:$0xff]
      %v1235 = vld [vmem:[#allocation2 + $0x8f] sm:$0xff]
      %v1236 = vld [vmem:[#allocation2 + $0xa7] sm:$0xff]
      %v1237 = vld [vmem:[#allocation2 + $0xaf] sm:$0xff]
      %v1238 = vld [vmem:[#allocation2 + $0xc7] sm:$0xff]
      %v1239 = vld [vmem:[#allocation2 + $0xcf] sm:$0xff]
      %v1240 = vld [vmem:[#allocation2 + $0xe7] sm:$0xff]
      %v1241 = vld [vmem:[#allocation2 + $0xef] sm:$0xff]
      %v1242 = vld [vmem:[#allocation2 + $0x107] sm:$0xff]
      %v1243 = vld [vmem:[#allocation2 + $0x10f] sm:$0xff]
      %v1244 = vld [vmem:[#allocation2 + $0x127] sm:$0xff]
      %v1245 = vld [vmem:[#allocation2 + $0x12f] sm:$0xff]
      %v1246 = vld [vmem:[#allocation2 + $0x147] sm:$0xff]
      %v1247 = vld [vmem:[#allocation2 + $0x14f] sm:$0xff]
      %v1248 = vld [vmem:[#allocation2 + $0x167] sm:$0xff]
      %v1249 = vld [vmem:[#allocation2 + $0x16f] sm:$0xff]
      %v1250 = vld [vmem:[#allocation2 + $0x187] sm:$0xff]
      %v1251 = vld [vmem:[#allocation2 + $0x18f] sm:$0xff]
      %v1252 = vld [vmem:[#allocation2 + $0x1a7] sm:$0xff]
      %v1253 = vld [vmem:[#allocation2 + $0x1af] sm:$0xff]
      %v1254 = vld [vmem:[#allocation2 + $0x1c7] sm:$0xff]
      %v1255 = vld [vmem:[#allocation2 + $0x1cf] sm:$0xff]
      %v1256 = vld [vmem:[#allocation2 + $0x1e7] sm:$0xff]
      %v1257 = vld [vmem:[#allocation2 + $0x1ef] sm:$0xff]
      %v1258 = vld [vmem:[%s5] sm:$0xf]
      %v1259 = vld [vmem:[#allocation2 + $0x8] sm:$0xff]
      %v1260 = vld [vmem:[#allocation2 + $0x10] sm:$0xff]
      %v1261 = vld [vmem:[#allocation2 + $0x28] sm:$0xff]
      %v1262 = vld [vmem:[#allocation2 + $0x30] sm:$0xff]
      %v1263 = vld [vmem:[#allocation2 + $0x48] sm:$0xff]
      %v1264 = vld [vmem:[#allocation2 + $0x50] sm:$0xff]
      %v1265 = vld [vmem:[#allocation2 + $0x68] sm:$0xff]
      %v1266 = vld [vmem:[#allocation2 + $0x70] sm:$0xff]
      %v1267 = vld [vmem:[#allocation2 + $0x88] sm:$0xff]
      %v1268 = vld [vmem:[#allocation2 + $0x90] sm:$0xff]
      %v1269 = vld [vmem:[#allocation2 + $0xa8] sm:$0xff]
      %v1270 = vld [vmem:[#allocation2 + $0xb0] sm:$0xff]
      %v1271 = vld [vmem:[#allocation2 + $0xc8] sm:$0xff]
      %v1272 = vld [vmem:[#allocation2 + $0xd0] sm:$0xff]
      %v1273 = vld [vmem:[#allocation2 + $0xe8] sm:$0xff]
      %v1274 = vld [vmem:[#allocation2 + $0xf0] sm:$0xff]
      %v1275 = vld [vmem:[#allocation2 + $0x108] sm:$0xff]
      %v1276 = vld [vmem:[#allocation2 + $0x110] sm:$0xff]
      %v1277 = vld [vmem:[#allocation2 + $0x128] sm:$0xff]
      %v1278 = vld [vmem:[#allocation2 + $0x130] sm:$0xff]
      %v1279 = vld [vmem:[#allocation2 + $0x148] sm:$0xff]
      %v1280 = vld [vmem:[#allocation2 + $0x150] sm:$0xff]
      %v1281 = vld [vmem:[#allocation2 + $0x168] sm:$0xff]
      %v1282 = vld [vmem:[#allocation2 + $0x170] sm:$0xff]
      %v1283 = vld [vmem:[#allocation2 + $0x188] sm:$0xff]
      %v1284 = vld [vmem:[#allocation2 + $0x190] sm:$0xff]
      %v1285 = vld [vmem:[#allocation2 + $0x1a8] sm:$0xff]
      %v1286 = vld [vmem:[#allocation2 + $0x1b0] sm:$0xff]
      %v1287 = vld [vmem:[#allocation2 + $0x1c8] sm:$0xff]
      %v1288 = vld [vmem:[#allocation2 + $0x1d0] sm:$0xff]
      %v1289 = vld [vmem:[#allocation2 + $0x1e8] sm:$0xff]
      %v1290 = vld [vmem:[#allocation2 + $0x1f0] sm:$0xff]
      %s1291 = scalar_lea.vmem %s5, 4
      %v1292 = vld [vmem:[%s1291] sm:$0xf]
      %v1294 = vsel %vm329, %v1259, 0
      %v1297 = vsel %vm329, %v1260, 0
      %v1300 = vsel %vm329, %v1261, 0
      %v1303 = vsel %vm329, %v1262, 0
      %v1306 = vsel %vm329, %v1263, 0
      %v1309 = vsel %vm329, %v1264, 0
      %v1312 = vsel %vm329, %v1265, 0
      %v1315 = vsel %vm329, %v1266, 0
      %v1318 = vsel %vm329, %v1267, 0
      %v1321 = vsel %vm329, %v1268, 0
      %v1324 = vsel %vm329, %v1269, 0
      %v1327 = vsel %vm329, %v1270, 0
      %v1330 = vsel %vm329, %v1271, 0
      %v1333 = vsel %vm329, %v1272, 0
      %v1336 = vsel %vm329, %v1273, 0
      %v1339 = vsel %vm329, %v1274, 0
      %v1342 = vsel %vm329, %v1275, 0
      %v1345 = vsel %vm329, %v1276, 0
      %v1348 = vsel %vm329, %v1277, 0
      %v1351 = vsel %vm329, %v1278, 0
      %v1354 = vsel %vm329, %v1279, 0
      %v1357 = vsel %vm329, %v1280, 0
      %v1360 = vsel %vm329, %v1281, 0
      %v1363 = vsel %vm329, %v1282, 0
      %v1366 = vsel %vm329, %v1283, 0
      %v1369 = vsel %vm329, %v1284, 0
      %v1372 = vsel %vm329, %v1285, 0
      %v1375 = vsel %vm329, %v1286, 0
      %v1378 = vsel %vm329, %v1287, 0
      %v1381 = vsel %vm329, %v1288, 0
      %v1384 = vsel %vm329, %v1289, 0
      %v1387 = vsel %vm329, %v1290, 0
      %v1390 = vsel %vm503, %v1292, 0
      %1392 = vmatprep.subr.mxu0 0.0
      %1393 = vmatpush1.msra.mxu0 0.0
      %1394 = vmatprep.subr.mxu0 0.0
      %1395 = vmatpush1.msra.mxu0 0.0
      %1396 = vmatprep.subr.mxu0 0.0
      %1397 = vmatpush1.msra.mxu0 0.0
      %1398 = vmatprep.subr.mxu0 0.0
      %1399 = vmatpush1.msra.mxu0 0.0
      %1400 = vmatprep.subr.mxu0 0.0
      %1401 = vmatpush1.msra.mxu0 0.0
      %1402 = vmatprep.subr.mxu0 0.0
      %1403 = vmatpush1.msra.mxu0 0.0
      %1404 = vmatprep.subr.mxu0 0.0
      %1405 = vmatpush1.msra.mxu0 0.0
      %1406 = vmatprep.subr.mxu0 0.0
      %1407 = vmatpush1.msra.mxu0 0.0
      %1408 = vmatprep.subr.mxu0 0.0
      %1409 = vmatpush1.msra.mxu0 0.0
      %1410 = vmatprep.subr.mxu0 0.0
      %1411 = vmatpush1.msra.mxu0 0.0
      %1412 = vmatprep.subr.mxu0 0.0
      %1413 = vmatpush1.msra.mxu0 0.0
      %1414 = vmatprep.subr.mxu0 0.0
      %1415 = vmatpush1.msra.mxu0 0.0
      %1416 = vmatprep.subr.mxu0 0.0
      %1417 = vmatpush1.msra.mxu0 0.0
      %1418 = vmatprep.subr.mxu0 0.0
      %1419 = vmatpush1.msra.mxu0 0.0
      %1420 = vmatprep.subr.mxu0 0.0
      %1421 = vmatpush1.msra.mxu0 0.0
      %1422 = vmatprep.subr.mxu0 0.0
      %1423 = vmatpush1.msra.mxu0 %v1390
      %1424 = vmatprep.subr.mxu0 0.0
      %1425 = vmatpush2.msra.mxu0 0.0
      %1426 = vmatprep.subr.mxu0 0.0
      %1427 = vmatpush2.msra.mxu0 0.0
      %1428 = vmatprep.subr.mxu0 0.0
      %1429 = vmatpush2.msra.mxu0 0.0
      %1430 = vmatprep.subr.mxu0 0.0
      %1431 = vmatpush2.msra.mxu0 0.0
      %1432 = vmatprep.subr.mxu0 0.0
      %1433 = vmatpush2.msra.mxu0 0.0
      %1434 = vmatprep.subr.mxu0 0.0
      %1435 = vmatpush2.msra.mxu0 0.0
      %1436 = vmatprep.subr.mxu0 0.0
      %1437 = vmatpush2.msra.mxu0 0.0
      %1438 = vmatprep.subr.mxu0 0.0
      %1439 = vmatpush2.msra.mxu0 0.0
      %1440 = vmatprep.subr.mxu0 0.0
      %1441 = vmatpush2.msra.mxu0 0.0
      %1442 = vmatprep.subr.mxu0 0.0
      %1443 = vmatpush2.msra.mxu0 0.0
      %1444 = vmatprep.subr.mxu0 0.0
      %1445 = vmatpush2.msra.mxu0 0.0
      %1446 = vmatprep.subr.mxu0 0.0
      %1447 = vmatpush2.msra.mxu0 0.0
      %1448 = vmatprep.subr.mxu0 0.0
      %1449 = vmatpush2.msra.mxu0 0.0
      %1450 = vmatprep.subr.mxu0 0.0
      %1451 = vmatpush2.msra.mxu0 0.0
      %1452 = vmatprep.subr.mxu0 0.0
      %1453 = vmatpush2.msra.mxu0 0.0
      %1454 = vmatprep.subr.mxu0 0.0
      %1455 = vmatpush2.msra.mxu0 0.0
      %1456 = vmatprep.mubr.f32.mxu0 0.0
      %1457 = vmatmul.mubr.f32.gmra.mxu0 %v1294
      %v1458 = vpop.f32.mrf.mxu0
      %v1459 = vadd.f32 0.0, %v1458
      %v1460 = vpop.f32.mrf.mxu0
      %1461 = vmatprep.mubr.f32.mxu0 0.0
      %1462 = vmatmul.mubr.f32.gmra.mxu0 %v1297
      %v1463 = vpop.f32.mrf.mxu0
      %v1464 = vadd.f32 0.0, %v1463
      %v1465 = vpop.f32.mrf.mxu0
      %1466 = vmatprep.mubr.f32.mxu0 0.0
      %1467 = vmatmul.mubr.f32.gmra.mxu0 %v1300
      %v1468 = vpop.f32.mrf.mxu0
      %v1469 = vadd.f32 0.0, %v1468
      %v1470 = vpop.f32.mrf.mxu0
      %1471 = vmatprep.mubr.f32.mxu0 0.0
      %1472 = vmatmul.mubr.f32.gmra.mxu0 %v1303
      %v1473 = vpop.f32.mrf.mxu0
      %v1474 = vadd.f32 0.0, %v1473
      %v1475 = vpop.f32.mrf.mxu0
      %1476 = vmatprep.mubr.f32.mxu0 0.0
      %1477 = vmatmul.mubr.f32.gmra.mxu0 %v1306
      %v1478 = vpop.f32.mrf.mxu0
      %v1479 = vadd.f32 0.0, %v1478
      %v1480 = vpop.f32.mrf.mxu0
      %1481 = vmatprep.mubr.f32.mxu0 0.0
      %1482 = vmatmul.mubr.f32.gmra.mxu0 %v1309
      %v1483 = vpop.f32.mrf.mxu0
      %v1484 = vadd.f32 0.0, %v1483
      %v1485 = vpop.f32.mrf.mxu0
      %1486 = vmatprep.mubr.f32.mxu0 0.0
      %1487 = vmatmul.mubr.f32.gmra.mxu0 %v1312
      %v1488 = vpop.f32.mrf.mxu0
      %v1489 = vadd.f32 0.0, %v1488
      %v1490 = vpop.f32.mrf.mxu0
      %1491 = vmatprep.mubr.f32.mxu0 0.0
      %1492 = vmatmul.mubr.f32.gmra.mxu0 %v1315
      %v1493 = vpop.f32.mrf.mxu0
      %v1494 = vadd.f32 0.0, %v1493
      %v1495 = vpop.f32.mrf.mxu0
      %1496 = vmatprep.mubr.f32.mxu0 0.0
      %1497 = vmatmul.mubr.f32.gmra.mxu0 %v1318
      %v1498 = vpop.f32.mrf.mxu0
      %v1499 = vadd.f32 0.0, %v1498
      %v1500 = vpop.f32.mrf.mxu0
      %1501 = vmatprep.mubr.f32.mxu0 0.0
      %1502 = vmatmul.mubr.f32.gmra.mxu0 %v1321
      %v1503 = vpop.f32.mrf.mxu0
      %v1504 = vadd.f32 0.0, %v1503
      %v1505 = vpop.f32.mrf.mxu0
      %1506 = vmatprep.mubr.f32.mxu0 0.0
      %1507 = vmatmul.mubr.f32.gmra.mxu0 %v1324
      %v1508 = vpop.f32.mrf.mxu0
      %v1509 = vadd.f32 0.0, %v1508
      %v1510 = vpop.f32.mrf.mxu0
      %1511 = vmatprep.mubr.f32.mxu0 0.0
      %1512 = vmatmul.mubr.f32.gmra.mxu0 %v1327
      %v1513 = vpop.f32.mrf.mxu0
      %v1514 = vadd.f32 0.0, %v1513
      %v1515 = vpop.f32.mrf.mxu0
      %1516 = vmatprep.mubr.f32.mxu0 0.0
      %1517 = vmatmul.mubr.f32.gmra.mxu0 %v1330
      %v1518 = vpop.f32.mrf.mxu0
      %v1519 = vadd.f32 0.0, %v1518
      %v1520 = vpop.f32.mrf.mxu0
      %1521 = vmatprep.mubr.f32.mxu0 0.0
      %1522 = vmatmul.mubr.f32.gmra.mxu0 %v1333
      %v1523 = vpop.f32.mrf.mxu0
      %v1524 = vadd.f32 0.0, %v1523
      %v1525 = vpop.f32.mrf.mxu0
      %1526 = vmatprep.mubr.f32.mxu0 0.0
      %1527 = vmatmul.mubr.f32.gmra.mxu0 %v1336
      %v1528 = vpop.f32.mrf.mxu0
      %v1529 = vadd.f32 0.0, %v1528
      %v1530 = vpop.f32.mrf.mxu0
      %1531 = vmatprep.mubr.f32.mxu0 0.0
      %1532 = vmatmul.mubr.f32.gmra.mxu0 %v1339
      %v1533 = vpop.f32.mrf.mxu0
      %v1534 = vadd.f32 0.0, %v1533
      %v1535 = vpop.f32.mrf.mxu0
      %1536 = vmatprep.mubr.f32.mxu0 0.0
      %1537 = vmatmul.mubr.f32.gmra.mxu0 %v1342
      %v1538 = vpop.f32.mrf.mxu0
      %v1539 = vadd.f32 0.0, %v1538
      %v1540 = vpop.f32.mrf.mxu0
      %1541 = vmatprep.mubr.f32.mxu0 0.0
      %1542 = vmatmul.mubr.f32.gmra.mxu0 %v1345
      %v1543 = vpop.f32.mrf.mxu0
      %v1544 = vadd.f32 0.0, %v1543
      %v1545 = vpop.f32.mrf.mxu0
      %1546 = vmatprep.mubr.f32.mxu0 0.0
      %1547 = vmatmul.mubr.f32.gmra.mxu0 %v1348
      %v1548 = vpop.f32.mrf.mxu0
      %v1549 = vadd.f32 0.0, %v1548
      %v1550 = vpop.f32.mrf.mxu0
      %1551 = vmatprep.mubr.f32.mxu0 0.0
      %1552 = vmatmul.mubr.f32.gmra.mxu0 %v1351
      %v1553 = vpop.f32.mrf.mxu0
      %v1554 = vadd.f32 0.0, %v1553
      %v1555 = vpop.f32.mrf.mxu0
      %1556 = vmatprep.mubr.f32.mxu0 0.0
      %1557 = vmatmul.mubr.f32.gmra.mxu0 %v1354
      %v1558 = vpop.f32.mrf.mxu0
      %v1559 = vadd.f32 0.0, %v1558
      %v1560 = vpop.f32.mrf.mxu0
      %1561 = vmatprep.mubr.f32.mxu0 0.0
      %1562 = vmatmul.mubr.f32.gmra.mxu0 %v1357
      %v1563 = vpop.f32.mrf.mxu0
      %v1564 = vadd.f32 0.0, %v1563
      %v1565 = vpop.f32.mrf.mxu0
      %1566 = vmatprep.mubr.f32.mxu0 0.0
      %1567 = vmatmul.mubr.f32.gmra.mxu0 %v1360
      %v1568 = vpop.f32.mrf.mxu0
      %v1569 = vadd.f32 0.0, %v1568
      %v1570 = vpop.f32.mrf.mxu0
      %1571 = vmatprep.mubr.f32.mxu0 0.0
      %1572 = vmatmul.mubr.f32.gmra.mxu0 %v1363
      %v1573 = vpop.f32.mrf.mxu0
      %v1574 = vadd.f32 0.0, %v1573
      %v1575 = vpop.f32.mrf.mxu0
      %1576 = vmatprep.mubr.f32.mxu0 0.0
      %1577 = vmatmul.mubr.f32.gmra.mxu0 %v1366
      %v1578 = vpop.f32.mrf.mxu0
      %v1579 = vadd.f32 0.0, %v1578
      %v1580 = vpop.f32.mrf.mxu0
      %1581 = vmatprep.mubr.f32.mxu0 0.0
      %1582 = vmatmul.mubr.f32.gmra.mxu0 %v1369
      %v1583 = vpop.f32.mrf.mxu0
      %v1584 = vadd.f32 0.0, %v1583
      %v1585 = vpop.f32.mrf.mxu0
      %1586 = vmatprep.mubr.f32.mxu0 0.0
      %1587 = vmatmul.mubr.f32.gmra.mxu0 %v1372
      %v1588 = vpop.f32.mrf.mxu0
      %v1589 = vadd.f32 0.0, %v1588
      %v1590 = vpop.f32.mrf.mxu0
      %1591 = vmatprep.mubr.f32.mxu0 0.0
      %1592 = vmatmul.mubr.f32.gmra.mxu0 %v1375
      %v1593 = vpop.f32.mrf.mxu0
      %v1594 = vadd.f32 0.0, %v1593
      %v1595 = vpop.f32.mrf.mxu0
      %1596 = vmatprep.mubr.f32.mxu0 0.0
      %1597 = vmatmul.mubr.f32.gmra.mxu0 %v1378
      %v1598 = vpop.f32.mrf.mxu0
      %v1599 = vadd.f32 0.0, %v1598
      %v1600 = vpop.f32.mrf.mxu0
      %1601 = vmatprep.mubr.f32.mxu0 0.0
      %1602 = vmatmul.mubr.f32.gmra.mxu0 %v1381
      %v1603 = vpop.f32.mrf.mxu0
      %v1604 = vadd.f32 0.0, %v1603
      %v1605 = vpop.f32.mrf.mxu0
      %1606 = vmatprep.mubr.f32.mxu0 0.0
      %1607 = vmatmul.mubr.f32.gmra.mxu0 %v1384
      %v1608 = vpop.f32.mrf.mxu0
      %v1609 = vadd.f32 0.0, %v1608
      %v1610 = vpop.f32.mrf.mxu0
      %1611 = vmatprep.mubr.f32.mxu0 0.0
      %1612 = vmatmul.mubr.f32.gmra.mxu0 %v1387
      %v1613 = vpop.f32.mrf.mxu0
      %v1614 = vadd.f32 0.0, %v1613
      %v1615 = vpop.f32.mrf.mxu0
      %1616 = vdwg.mxu0
      %v1618 = vsel %vm329, %v1226, 0
      %v1621 = vsel %vm329, %v1227, 0
      %v1624 = vsel %vm329, %v1228, 0
      %v1627 = vsel %vm329, %v1229, 0
      %v1630 = vsel %vm329, %v1230, 0
      %v1633 = vsel %vm329, %v1231, 0
      %v1636 = vsel %vm329, %v1232, 0
      %v1639 = vsel %vm329, %v1233, 0
      %v1642 = vsel %vm329, %v1234, 0
      %v1645 = vsel %vm329, %v1235, 0
      %v1648 = vsel %vm329, %v1236, 0
      %v1651 = vsel %vm329, %v1237, 0
      %v1654 = vsel %vm329, %v1238, 0
      %v1657 = vsel %vm329, %v1239, 0
      %v1660 = vsel %vm329, %v1240, 0
      %v1663 = vsel %vm329, %v1241, 0
      %v1666 = vsel %vm329, %v1242, 0
      %v1669 = vsel %vm329, %v1243, 0
      %v1672 = vsel %vm329, %v1244, 0
      %v1675 = vsel %vm329, %v1245, 0
      %v1678 = vsel %vm329, %v1246, 0
      %v1681 = vsel %vm329, %v1247, 0
      %v1684 = vsel %vm329, %v1248, 0
      %v1687 = vsel %vm329, %v1249, 0
      %v1690 = vsel %vm329, %v1250, 0
      %v1693 = vsel %vm329, %v1251, 0
      %v1696 = vsel %vm329, %v1252, 0
      %v1699 = vsel %vm329, %v1253, 0
      %v1702 = vsel %vm329, %v1254, 0
      %v1705 = vsel %vm329, %v1255, 0
      %v1708 = vsel %vm329, %v1256, 0
      %v1711 = vsel %vm329, %v1257, 0
      %v1714 = vsel %vm503, %v1258, 0
      %1716 = vmatprep.subr.mxu0 0.0
      %1717 = vmatpush1.msra.mxu0 0.0
      %1718 = vmatprep.subr.mxu0 0.0
      %1719 = vmatpush1.msra.mxu0 0.0
      %1720 = vmatprep.subr.mxu0 0.0
      %1721 = vmatpush1.msra.mxu0 0.0
      %1722 = vmatprep.subr.mxu0 0.0
      %1723 = vmatpush1.msra.mxu0 0.0
      %1724 = vmatprep.subr.mxu0 0.0
      %1725 = vmatpush1.msra.mxu0 0.0
      %1726 = vmatprep.subr.mxu0 0.0
      %1727 = vmatpush1.msra.mxu0 0.0
      %1728 = vmatprep.subr.mxu0 0.0
      %1729 = vmatpush1.msra.mxu0 0.0
      %1730 = vmatprep.subr.mxu0 0.0
      %1731 = vmatpush1.msra.mxu0 0.0
      %1732 = vmatprep.subr.mxu0 0.0
      %1733 = vmatpush1.msra.mxu0 0.0
      %1734 = vmatprep.subr.mxu0 0.0
      %1735 = vmatpush1.msra.mxu0 0.0
      %1736 = vmatprep.subr.mxu0 0.0
      %1737 = vmatpush1.msra.mxu0 0.0
      %1738 = vmatprep.subr.mxu0 0.0
      %1739 = vmatpush1.msra.mxu0 0.0
      %1740 = vmatprep.subr.mxu0 0.0
      %1741 = vmatpush1.msra.mxu0 0.0
      %1742 = vmatprep.subr.mxu0 0.0
      %1743 = vmatpush1.msra.mxu0 0.0
      %1744 = vmatprep.subr.mxu0 0.0
      %1745 = vmatpush1.msra.mxu0 0.0
      %1746 = vmatprep.subr.mxu0 0.0
      %1747 = vmatpush1.msra.mxu0 %v1714
      %1748 = vmatprep.subr.mxu0 0.0
      %1749 = vmatpush2.msra.mxu0 0.0
      %1750 = vmatprep.subr.mxu0 0.0
      %1751 = vmatpush2.msra.mxu0 0.0
      %1752 = vmatprep.subr.mxu0 0.0
      %1753 = vmatpush2.msra.mxu0 0.0
      %1754 = vmatprep.subr.mxu0 0.0
      %1755 = vmatpush2.msra.mxu0 0.0
      %1756 = vmatprep.subr.mxu0 0.0
      %1757 = vmatpush2.msra.mxu0 0.0
      %1758 = vmatprep.subr.mxu0 0.0
      %1759 = vmatpush2.msra.mxu0 0.0
      %1760 = vmatprep.subr.mxu0 0.0
      %1761 = vmatpush2.msra.mxu0 0.0
      %1762 = vmatprep.subr.mxu0 0.0
      %1763 = vmatpush2.msra.mxu0 0.0
      %1764 = vmatprep.subr.mxu0 0.0
      %1765 = vmatpush2.msra.mxu0 0.0
      %1766 = vmatprep.subr.mxu0 0.0
      %1767 = vmatpush2.msra.mxu0 0.0
      %1768 = vmatprep.subr.mxu0 0.0
      %1769 = vmatpush2.msra.mxu0 0.0
      %1770 = vmatprep.subr.mxu0 0.0
      %1771 = vmatpush2.msra.mxu0 0.0
      %1772 = vmatprep.subr.mxu0 0.0
      %1773 = vmatpush2.msra.mxu0 0.0
      %1774 = vmatprep.subr.mxu0 0.0
      %1775 = vmatpush2.msra.mxu0 0.0
      %1776 = vmatprep.subr.mxu0 0.0
      %1777 = vmatpush2.msra.mxu0 0.0
      %1778 = vmatprep.subr.mxu0 0.0
      %1779 = vmatpush2.msra.mxu0 0.0
      %1780 = vmatprep.mubr.f32.mxu0 0.0
      %1781 = vmatmul.mubr.f32.gmra.mxu0 %v1618
      %v1782 = vpop.f32.mrf.mxu0
      %v1783 = vadd.f32 %v1459, %v1782
      %v1784 = vpop.f32.mrf.mxu0
      %1785 = vmatprep.mubr.f32.mxu0 0.0
      %1786 = vmatmul.mubr.f32.gmra.mxu0 %v1621
      %v1787 = vpop.f32.mrf.mxu0
      %v1788 = vadd.f32 %v1464, %v1787
      %v1789 = vpop.f32.mrf.mxu0
      %1790 = vmatprep.mubr.f32.mxu0 0.0
      %1791 = vmatmul.mubr.f32.gmra.mxu0 %v1624
      %v1792 = vpop.f32.mrf.mxu0
      %v1793 = vadd.f32 %v1469, %v1792
      %v1794 = vpop.f32.mrf.mxu0
      %1795 = vmatprep.mubr.f32.mxu0 0.0
      %1796 = vmatmul.mubr.f32.gmra.mxu0 %v1627
      %v1797 = vpop.f32.mrf.mxu0
      %v1798 = vadd.f32 %v1474, %v1797
      %v1799 = vpop.f32.mrf.mxu0
      %1800 = vmatprep.mubr.f32.mxu0 0.0
      %1801 = vmatmul.mubr.f32.gmra.mxu0 %v1630
      %v1802 = vpop.f32.mrf.mxu0
      %v1803 = vadd.f32 %v1479, %v1802
      %v1804 = vpop.f32.mrf.mxu0
      %1805 = vmatprep.mubr.f32.mxu0 0.0
      %1806 = vmatmul.mubr.f32.gmra.mxu0 %v1633
      %v1807 = vpop.f32.mrf.mxu0
      %v1808 = vadd.f32 %v1484, %v1807
      %v1809 = vpop.f32.mrf.mxu0
      %1810 = vmatprep.mubr.f32.mxu0 0.0
      %1811 = vmatmul.mubr.f32.gmra.mxu0 %v1636
      %v1812 = vpop.f32.mrf.mxu0
      %v1813 = vadd.f32 %v1489, %v1812
      %v1814 = vpop.f32.mrf.mxu0
      %1815 = vmatprep.mubr.f32.mxu0 0.0
      %1816 = vmatmul.mubr.f32.gmra.mxu0 %v1639
      %v1817 = vpop.f32.mrf.mxu0
      %v1818 = vadd.f32 %v1494, %v1817
      %v1819 = vpop.f32.mrf.mxu0
      %1820 = vmatprep.mubr.f32.mxu0 0.0
      %1821 = vmatmul.mubr.f32.gmra.mxu0 %v1642
      %v1822 = vpop.f32.mrf.mxu0
      %v1823 = vadd.f32 %v1499, %v1822
      %v1824 = vpop.f32.mrf.mxu0
      %1825 = vmatprep.mubr.f32.mxu0 0.0
      %1826 = vmatmul.mubr.f32.gmra.mxu0 %v1645
      %v1827 = vpop.f32.mrf.mxu0
      %v1828 = vadd.f32 %v1504, %v1827
      %v1829 = vpop.f32.mrf.mxu0
      %1830 = vmatprep.mubr.f32.mxu0 0.0
      %1831 = vmatmul.mubr.f32.gmra.mxu0 %v1648
      %v1832 = vpop.f32.mrf.mxu0
      %v1833 = vadd.f32 %v1509, %v1832
      %v1834 = vpop.f32.mrf.mxu0
      %1835 = vmatprep.mubr.f32.mxu0 0.0
      %1836 = vmatmul.mubr.f32.gmra.mxu0 %v1651
      %v1837 = vpop.f32.mrf.mxu0
      %v1838 = vadd.f32 %v1514, %v1837
      %v1839 = vpop.f32.mrf.mxu0
      %1840 = vmatprep.mubr.f32.mxu0 0.0
      %1841 = vmatmul.mubr.f32.gmra.mxu0 %v1654
      %v1842 = vpop.f32.mrf.mxu0
      %v1843 = vadd.f32 %v1519, %v1842
      %v1844 = vpop.f32.mrf.mxu0
      %1845 = vmatprep.mubr.f32.mxu0 0.0
      %1846 = vmatmul.mubr.f32.gmra.mxu0 %v1657
      %v1847 = vpop.f32.mrf.mxu0
      %v1848 = vadd.f32 %v1524, %v1847
      %v1849 = vpop.f32.mrf.mxu0
      %1850 = vmatprep.mubr.f32.mxu0 0.0
      %1851 = vmatmul.mubr.f32.gmra.mxu0 %v1660
      %v1852 = vpop.f32.mrf.mxu0
      %v1853 = vadd.f32 %v1529, %v1852
      %v1854 = vpop.f32.mrf.mxu0
      %1855 = vmatprep.mubr.f32.mxu0 0.0
      %1856 = vmatmul.mubr.f32.gmra.mxu0 %v1663
      %v1857 = vpop.f32.mrf.mxu0
      %v1858 = vadd.f32 %v1534, %v1857
      %v1859 = vpop.f32.mrf.mxu0
      %1860 = vmatprep.mubr.f32.mxu0 0.0
      %1861 = vmatmul.mubr.f32.gmra.mxu0 %v1666
      %v1862 = vpop.f32.mrf.mxu0
      %v1863 = vadd.f32 %v1539, %v1862
      %v1864 = vpop.f32.mrf.mxu0
      %1865 = vmatprep.mubr.f32.mxu0 0.0
      %1866 = vmatmul.mubr.f32.gmra.mxu0 %v1669
      %v1867 = vpop.f32.mrf.mxu0
      %v1868 = vadd.f32 %v1544, %v1867
      %v1869 = vpop.f32.mrf.mxu0
      %1870 = vmatprep.mubr.f32.mxu0 0.0
      %1871 = vmatmul.mubr.f32.gmra.mxu0 %v1672
      %v1872 = vpop.f32.mrf.mxu0
      %v1873 = vadd.f32 %v1549, %v1872
      %v1874 = vpop.f32.mrf.mxu0
      %1875 = vmatprep.mubr.f32.mxu0 0.0
      %1876 = vmatmul.mubr.f32.gmra.mxu0 %v1675
      %v1877 = vpop.f32.mrf.mxu0
      %v1878 = vadd.f32 %v1554, %v1877
      %v1879 = vpop.f32.mrf.mxu0
      %1880 = vmatprep.mubr.f32.mxu0 0.0
      %1881 = vmatmul.mubr.f32.gmra.mxu0 %v1678
      %v1882 = vpop.f32.mrf.mxu0
      %v1883 = vadd.f32 %v1559, %v1882
      %v1884 = vpop.f32.mrf.mxu0
      %1885 = vmatprep.mubr.f32.mxu0 0.0
      %1886 = vmatmul.mubr.f32.gmra.mxu0 %v1681
      %v1887 = vpop.f32.mrf.mxu0
      %v1888 = vadd.f32 %v1564, %v1887
      %v1889 = vpop.f32.mrf.mxu0
      %1890 = vmatprep.mubr.f32.mxu0 0.0
      %1891 = vmatmul.mubr.f32.gmra.mxu0 %v1684
      %v1892 = vpop.f32.mrf.mxu0
      %v1893 = vadd.f32 %v1569, %v1892
      %v1894 = vpop.f32.mrf.mxu0
      %1895 = vmatprep.mubr.f32.mxu0 0.0
      %1896 = vmatmul.mubr.f32.gmra.mxu0 %v1687
      %v1897 = vpop.f32.mrf.mxu0
      %v1898 = vadd.f32 %v1574, %v1897
      %v1899 = vpop.f32.mrf.mxu0
      %1900 = vmatprep.mubr.f32.mxu0 0.0
      %1901 = vmatmul.mubr.f32.gmra.mxu0 %v1690
      %v1902 = vpop.f32.mrf.mxu0
      %v1903 = vadd.f32 %v1579, %v1902
      %v1904 = vpop.f32.mrf.mxu0
      %1905 = vmatprep.mubr.f32.mxu0 0.0
      %1906 = vmatmul.mubr.f32.gmra.mxu0 %v1693
      %v1907 = vpop.f32.mrf.mxu0
      %v1908 = vadd.f32 %v1584, %v1907
      %v1909 = vpop.f32.mrf.mxu0
      %1910 = vmatprep.mubr.f32.mxu0 0.0
      %1911 = vmatmul.mubr.f32.gmra.mxu0 %v1696
      %v1912 = vpop.f32.mrf.mxu0
      %v1913 = vadd.f32 %v1589, %v1912
      %v1914 = vpop.f32.mrf.mxu0
      %1915 = vmatprep.mubr.f32.mxu0 0.0
      %1916 = vmatmul.mubr.f32.gmra.mxu0 %v1699
      %v1917 = vpop.f32.mrf.mxu0
      %v1918 = vadd.f32 %v1594, %v1917
      %v1919 = vpop.f32.mrf.mxu0
      %1920 = vmatprep.mubr.f32.mxu0 0.0
      %1921 = vmatmul.mubr.f32.gmra.mxu0 %v1702
      %v1922 = vpop.f32.mrf.mxu0
      %v1923 = vadd.f32 %v1599, %v1922
      %v1924 = vpop.f32.mrf.mxu0
      %1925 = vmatprep.mubr.f32.mxu0 0.0
      %1926 = vmatmul.mubr.f32.gmra.mxu0 %v1705
      %v1927 = vpop.f32.mrf.mxu0
      %v1928 = vadd.f32 %v1604, %v1927
      %v1929 = vpop.f32.mrf.mxu0
      %1930 = vmatprep.mubr.f32.mxu0 0.0
      %1931 = vmatmul.mubr.f32.gmra.mxu0 %v1708
      %v1932 = vpop.f32.mrf.mxu0
      %v1933 = vadd.f32 %v1609, %v1932
      %v1934 = vpop.f32.mrf.mxu0
      %1935 = vmatprep.mubr.f32.mxu0 0.0
      %1936 = vmatmul.mubr.f32.gmra.mxu0 %v1711
      %v1937 = vpop.f32.mrf.mxu0
      %v1938 = vadd.f32 %v1614, %v1937
      %v1939 = vpop.f32.mrf.mxu0
      %1940 = vdwg.mxu0
      %v1941 = vld [vmem:[#allocation2 + $0x9] sm:$0xff]
      %v1942 = vld [vmem:[#allocation2 + $0x11] sm:$0xff]
      %v1943 = vld [vmem:[#allocation2 + $0x29] sm:$0xff]
      %v1944 = vld [vmem:[#allocation2 + $0x31] sm:$0xff]
      %v1945 = vld [vmem:[#allocation2 + $0x49] sm:$0xff]
      %v1946 = vld [vmem:[#allocation2 + $0x51] sm:$0xff]
      %v1947 = vld [vmem:[#allocation2 + $0x69] sm:$0xff]
      %v1948 = vld [vmem:[#allocation2 + $0x71] sm:$0xff]
      %v1949 = vld [vmem:[#allocation2 + $0x89] sm:$0xff]
      %v1950 = vld [vmem:[#allocation2 + $0x91] sm:$0xff]
      %v1951 = vld [vmem:[#allocation2 + $0xa9] sm:$0xff]
      %v1952 = vld [vmem:[#allocation2 + $0xb1] sm:$0xff]
      %v1953 = vld [vmem:[#allocation2 + $0xc9] sm:$0xff]
      %v1954 = vld [vmem:[#allocation2 + $0xd1] sm:$0xff]
      %v1955 = vld [vmem:[#allocation2 + $0xe9] sm:$0xff]
      %v1956 = vld [vmem:[#allocation2 + $0xf1] sm:$0xff]
      %v1957 = vld [vmem:[#allocation2 + $0x109] sm:$0xff]
      %v1958 = vld [vmem:[#allocation2 + $0x111] sm:$0xff]
      %v1959 = vld [vmem:[#allocation2 + $0x129] sm:$0xff]
      %v1960 = vld [vmem:[#allocation2 + $0x131] sm:$0xff]
      %v1961 = vld [vmem:[#allocation2 + $0x149] sm:$0xff]
      %v1962 = vld [vmem:[#allocation2 + $0x151] sm:$0xff]
      %v1963 = vld [vmem:[#allocation2 + $0x169] sm:$0xff]
      %v1964 = vld [vmem:[#allocation2 + $0x171] sm:$0xff]
      %v1965 = vld [vmem:[#allocation2 + $0x189] sm:$0xff]
      %v1966 = vld [vmem:[#allocation2 + $0x191] sm:$0xff]
      %v1967 = vld [vmem:[#allocation2 + $0x1a9] sm:$0xff]
      %v1968 = vld [vmem:[#allocation2 + $0x1b1] sm:$0xff]
      %v1969 = vld [vmem:[#allocation2 + $0x1c9] sm:$0xff]
      %v1970 = vld [vmem:[#allocation2 + $0x1d1] sm:$0xff]
      %v1971 = vld [vmem:[#allocation2 + $0x1e9] sm:$0xff]
      %v1972 = vld [vmem:[#allocation2 + $0x1f1] sm:$0xff]
      %s1973 = scalar_lea.vmem %s5, 8
      %v1974 = vld [vmem:[%s1973] sm:$0xf]
      %v1976 = vsel %vm329, %v1941, 0
      %v1979 = vsel %vm329, %v1942, 0
      %v1982 = vsel %vm329, %v1943, 0
      %v1985 = vsel %vm329, %v1944, 0
      %v1988 = vsel %vm329, %v1945, 0
      %v1991 = vsel %vm329, %v1946, 0
      %v1994 = vsel %vm329, %v1947, 0
      %v1997 = vsel %vm329, %v1948, 0
      %v2000 = vsel %vm329, %v1949, 0
      %v2003 = vsel %vm329, %v1950, 0
      %v2006 = vsel %vm329, %v1951, 0
      %v2009 = vsel %vm329, %v1952, 0
      %v2012 = vsel %vm329, %v1953, 0
      %v2015 = vsel %vm329, %v1954, 0
      %v2018 = vsel %vm329, %v1955, 0
      %v2021 = vsel %vm329, %v1956, 0
      %v2024 = vsel %vm329, %v1957, 0
      %v2027 = vsel %vm329, %v1958, 0
      %v2030 = vsel %vm329, %v1959, 0
      %v2033 = vsel %vm329, %v1960, 0
      %v2036 = vsel %vm329, %v1961, 0
      %v2039 = vsel %vm329, %v1962, 0
      %v2042 = vsel %vm329, %v1963, 0
      %v2045 = vsel %vm329, %v1964, 0
      %v2048 = vsel %vm329, %v1965, 0
      %v2051 = vsel %vm329, %v1966, 0
      %v2054 = vsel %vm329, %v1967, 0
      %v2057 = vsel %vm329, %v1968, 0
      %v2060 = vsel %vm329, %v1969, 0
      %v2063 = vsel %vm329, %v1970, 0
      %v2066 = vsel %vm329, %v1971, 0
      %v2069 = vsel %vm329, %v1972, 0
      %v2072 = vsel %vm503, %v1974, 0
      %2074 = vmatprep.subr.mxu0 0.0
      %2075 = vmatpush1.msra.mxu0 0.0
      %2076 = vmatprep.subr.mxu0 0.0
      %2077 = vmatpush1.msra.mxu0 0.0
      %2078 = vmatprep.subr.mxu0 0.0
      %2079 = vmatpush1.msra.mxu0 0.0
      %2080 = vmatprep.subr.mxu0 0.0
      %2081 = vmatpush1.msra.mxu0 0.0
      %2082 = vmatprep.subr.mxu0 0.0
      %2083 = vmatpush1.msra.mxu0 0.0
      %2084 = vmatprep.subr.mxu0 0.0
      %2085 = vmatpush1.msra.mxu0 0.0
      %2086 = vmatprep.subr.mxu0 0.0
      %2087 = vmatpush1.msra.mxu0 0.0
      %2088 = vmatprep.subr.mxu0 0.0
      %2089 = vmatpush1.msra.mxu0 0.0
      %2090 = vmatprep.subr.mxu0 0.0
      %2091 = vmatpush1.msra.mxu0 0.0
      %2092 = vmatprep.subr.mxu0 0.0
      %2093 = vmatpush1.msra.mxu0 0.0
      %2094 = vmatprep.subr.mxu0 0.0
      %2095 = vmatpush1.msra.mxu0 0.0
      %2096 = vmatprep.subr.mxu0 0.0
      %2097 = vmatpush1.msra.mxu0 0.0
      %2098 = vmatprep.subr.mxu0 0.0
      %2099 = vmatpush1.msra.mxu0 0.0
      %2100 = vmatprep.subr.mxu0 0.0
      %2101 = vmatpush1.msra.mxu0 0.0
      %2102 = vmatprep.subr.mxu0 0.0
      %2103 = vmatpush1.msra.mxu0 0.0
      %2104 = vmatprep.subr.mxu0 0.0
      %2105 = vmatpush1.msra.mxu0 %v2072
      %2106 = vmatprep.subr.mxu0 0.0
      %2107 = vmatpush2.msra.mxu0 0.0
      %2108 = vmatprep.subr.mxu0 0.0
      %2109 = vmatpush2.msra.mxu0 0.0
      %2110 = vmatprep.subr.mxu0 0.0
      %2111 = vmatpush2.msra.mxu0 0.0
      %2112 = vmatprep.subr.mxu0 0.0
      %2113 = vmatpush2.msra.mxu0 0.0
      %2114 = vmatprep.subr.mxu0 0.0
      %2115 = vmatpush2.msra.mxu0 0.0
      %2116 = vmatprep.subr.mxu0 0.0
      %2117 = vmatpush2.msra.mxu0 0.0
      %2118 = vmatprep.subr.mxu0 0.0
      %2119 = vmatpush2.msra.mxu0 0.0
      %2120 = vmatprep.subr.mxu0 0.0
      %2121 = vmatpush2.msra.mxu0 0.0
      %2122 = vmatprep.subr.mxu0 0.0
      %2123 = vmatpush2.msra.mxu0 0.0
      %2124 = vmatprep.subr.mxu0 0.0
      %2125 = vmatpush2.msra.mxu0 0.0
      %2126 = vmatprep.subr.mxu0 0.0
      %2127 = vmatpush2.msra.mxu0 0.0
      %2128 = vmatprep.subr.mxu0 0.0
      %2129 = vmatpush2.msra.mxu0 0.0
      %2130 = vmatprep.subr.mxu0 0.0
      %2131 = vmatpush2.msra.mxu0 0.0
      %2132 = vmatprep.subr.mxu0 0.0
      %2133 = vmatpush2.msra.mxu0 0.0
      %2134 = vmatprep.subr.mxu0 0.0
      %2135 = vmatpush2.msra.mxu0 0.0
      %2136 = vmatprep.subr.mxu0 0.0
      %2137 = vmatpush2.msra.mxu0 0.0
      %2138 = vmatprep.mubr.f32.mxu0 0.0
      %2139 = vmatmul.mubr.f32.gmra.mxu0 %v1976
      %v2140 = vpop.f32.mrf.mxu0
      %v2141 = vadd.f32 0.0, %v2140
      %v2142 = vpop.f32.mrf.mxu0
      %2143 = vmatprep.mubr.f32.mxu0 0.0
      %2144 = vmatmul.mubr.f32.gmra.mxu0 %v1979
      %v2145 = vpop.f32.mrf.mxu0
      %v2146 = vadd.f32 0.0, %v2145
      %v2147 = vpop.f32.mrf.mxu0
      %2148 = vmatprep.mubr.f32.mxu0 0.0
      %2149 = vmatmul.mubr.f32.gmra.mxu0 %v1982
      %v2150 = vpop.f32.mrf.mxu0
      %v2151 = vadd.f32 0.0, %v2150
      %v2152 = vpop.f32.mrf.mxu0
      %2153 = vmatprep.mubr.f32.mxu0 0.0
      %2154 = vmatmul.mubr.f32.gmra.mxu0 %v1985
      %v2155 = vpop.f32.mrf.mxu0
      %v2156 = vadd.f32 0.0, %v2155
      %v2157 = vpop.f32.mrf.mxu0
      %2158 = vmatprep.mubr.f32.mxu0 0.0
      %2159 = vmatmul.mubr.f32.gmra.mxu0 %v1988
      %v2160 = vpop.f32.mrf.mxu0
      %v2161 = vadd.f32 0.0, %v2160
      %v2162 = vpop.f32.mrf.mxu0
      %2163 = vmatprep.mubr.f32.mxu0 0.0
      %2164 = vmatmul.mubr.f32.gmra.mxu0 %v1991
      %v2165 = vpop.f32.mrf.mxu0
      %v2166 = vadd.f32 0.0, %v2165
      %v2167 = vpop.f32.mrf.mxu0
      %2168 = vmatprep.mubr.f32.mxu0 0.0
      %2169 = vmatmul.mubr.f32.gmra.mxu0 %v1994
      %v2170 = vpop.f32.mrf.mxu0
      %v2171 = vadd.f32 0.0, %v2170
      %v2172 = vpop.f32.mrf.mxu0
      %2173 = vmatprep.mubr.f32.mxu0 0.0
      %2174 = vmatmul.mubr.f32.gmra.mxu0 %v1997
      %v2175 = vpop.f32.mrf.mxu0
      %v2176 = vadd.f32 0.0, %v2175
      %v2177 = vpop.f32.mrf.mxu0
      %2178 = vmatprep.mubr.f32.mxu0 0.0
      %2179 = vmatmul.mubr.f32.gmra.mxu0 %v2000
      %v2180 = vpop.f32.mrf.mxu0
      %v2181 = vadd.f32 0.0, %v2180
      %v2182 = vpop.f32.mrf.mxu0
      %2183 = vmatprep.mubr.f32.mxu0 0.0
      %2184 = vmatmul.mubr.f32.gmra.mxu0 %v2003
      %v2185 = vpop.f32.mrf.mxu0
      %v2186 = vadd.f32 0.0, %v2185
      %v2187 = vpop.f32.mrf.mxu0
      %2188 = vmatprep.mubr.f32.mxu0 0.0
      %2189 = vmatmul.mubr.f32.gmra.mxu0 %v2006
      %v2190 = vpop.f32.mrf.mxu0
      %v2191 = vadd.f32 0.0, %v2190
      %v2192 = vpop.f32.mrf.mxu0
      %2193 = vmatprep.mubr.f32.mxu0 0.0
      %2194 = vmatmul.mubr.f32.gmra.mxu0 %v2009
      %v2195 = vpop.f32.mrf.mxu0
      %v2196 = vadd.f32 0.0, %v2195
      %v2197 = vpop.f32.mrf.mxu0
      %2198 = vmatprep.mubr.f32.mxu0 0.0
      %2199 = vmatmul.mubr.f32.gmra.mxu0 %v2012
      %v2200 = vpop.f32.mrf.mxu0
      %v2201 = vadd.f32 0.0, %v2200
      %v2202 = vpop.f32.mrf.mxu0
      %2203 = vmatprep.mubr.f32.mxu0 0.0
      %2204 = vmatmul.mubr.f32.gmra.mxu0 %v2015
      %v2205 = vpop.f32.mrf.mxu0
      %v2206 = vadd.f32 0.0, %v2205
      %v2207 = vpop.f32.mrf.mxu0
      %2208 = vmatprep.mubr.f32.mxu0 0.0
      %2209 = vmatmul.mubr.f32.gmra.mxu0 %v2018
      %v2210 = vpop.f32.mrf.mxu0
      %v2211 = vadd.f32 0.0, %v2210
      %v2212 = vpop.f32.mrf.mxu0
      %2213 = vmatprep.mubr.f32.mxu0 0.0
      %2214 = vmatmul.mubr.f32.gmra.mxu0 %v2021
      %v2215 = vpop.f32.mrf.mxu0
      %v2216 = vadd.f32 0.0, %v2215
      %v2217 = vpop.f32.mrf.mxu0
      %2218 = vmatprep.mubr.f32.mxu0 0.0
      %2219 = vmatmul.mubr.f32.gmra.mxu0 %v2024
      %v2220 = vpop.f32.mrf.mxu0
      %v2221 = vadd.f32 0.0, %v2220
      %v2222 = vpop.f32.mrf.mxu0
      %2223 = vmatprep.mubr.f32.mxu0 0.0
      %2224 = vmatmul.mubr.f32.gmra.mxu0 %v2027
      %v2225 = vpop.f32.mrf.mxu0
      %v2226 = vadd.f32 0.0, %v2225
      %v2227 = vpop.f32.mrf.mxu0
      %2228 = vmatprep.mubr.f32.mxu0 0.0
      %2229 = vmatmul.mubr.f32.gmra.mxu0 %v2030
      %v2230 = vpop.f32.mrf.mxu0
      %v2231 = vadd.f32 0.0, %v2230
      %v2232 = vpop.f32.mrf.mxu0
      %2233 = vmatprep.mubr.f32.mxu0 0.0
      %2234 = vmatmul.mubr.f32.gmra.mxu0 %v2033
      %v2235 = vpop.f32.mrf.mxu0
      %v2236 = vadd.f32 0.0, %v2235
      %v2237 = vpop.f32.mrf.mxu0
      %2238 = vmatprep.mubr.f32.mxu0 0.0
      %2239 = vmatmul.mubr.f32.gmra.mxu0 %v2036
      %v2240 = vpop.f32.mrf.mxu0
      %v2241 = vadd.f32 0.0, %v2240
      %v2242 = vpop.f32.mrf.mxu0
      %2243 = vmatprep.mubr.f32.mxu0 0.0
      %2244 = vmatmul.mubr.f32.gmra.mxu0 %v2039
      %v2245 = vpop.f32.mrf.mxu0
      %v2246 = vadd.f32 0.0, %v2245
      %v2247 = vpop.f32.mrf.mxu0
      %2248 = vmatprep.mubr.f32.mxu0 0.0
      %2249 = vmatmul.mubr.f32.gmra.mxu0 %v2042
      %v2250 = vpop.f32.mrf.mxu0
      %v2251 = vadd.f32 0.0, %v2250
      %v2252 = vpop.f32.mrf.mxu0
      %2253 = vmatprep.mubr.f32.mxu0 0.0
      %2254 = vmatmul.mubr.f32.gmra.mxu0 %v2045
      %v2255 = vpop.f32.mrf.mxu0
      %v2256 = vadd.f32 0.0, %v2255
      %v2257 = vpop.f32.mrf.mxu0
      %2258 = vmatprep.mubr.f32.mxu0 0.0
      %2259 = vmatmul.mubr.f32.gmra.mxu0 %v2048
      %v2260 = vpop.f32.mrf.mxu0
      %v2261 = vadd.f32 0.0, %v2260
      %v2262 = vpop.f32.mrf.mxu0
      %2263 = vmatprep.mubr.f32.mxu0 0.0
      %2264 = vmatmul.mubr.f32.gmra.mxu0 %v2051
      %v2265 = vpop.f32.mrf.mxu0
      %v2266 = vadd.f32 0.0, %v2265
      %v2267 = vpop.f32.mrf.mxu0
      %2268 = vmatprep.mubr.f32.mxu0 0.0
      %2269 = vmatmul.mubr.f32.gmra.mxu0 %v2054
      %v2270 = vpop.f32.mrf.mxu0
      %v2271 = vadd.f32 0.0, %v2270
      %v2272 = vpop.f32.mrf.mxu0
      %2273 = vmatprep.mubr.f32.mxu0 0.0
      %2274 = vmatmul.mubr.f32.gmra.mxu0 %v2057
      %v2275 = vpop.f32.mrf.mxu0
      %v2276 = vadd.f32 0.0, %v2275
      %v2277 = vpop.f32.mrf.mxu0
      %2278 = vmatprep.mubr.f32.mxu0 0.0
      %2279 = vmatmul.mubr.f32.gmra.mxu0 %v2060
      %v2280 = vpop.f32.mrf.mxu0
      %v2281 = vadd.f32 0.0, %v2280
      %v2282 = vpop.f32.mrf.mxu0
      %2283 = vmatprep.mubr.f32.mxu0 0.0
      %2284 = vmatmul.mubr.f32.gmra.mxu0 %v2063
      %v2285 = vpop.f32.mrf.mxu0
      %v2286 = vadd.f32 0.0, %v2285
      %v2287 = vpop.f32.mrf.mxu0
      %2288 = vmatprep.mubr.f32.mxu0 0.0
      %2289 = vmatmul.mubr.f32.gmra.mxu0 %v2066
      %v2290 = vpop.f32.mrf.mxu0
      %v2291 = vadd.f32 0.0, %v2290
      %v2292 = vpop.f32.mrf.mxu0
      %2293 = vmatprep.mubr.f32.mxu0 0.0
      %2294 = vmatmul.mubr.f32.gmra.mxu0 %v2069
      %v2295 = vpop.f32.mrf.mxu0
      %v2296 = vadd.f32 0.0, %v2295
      %v2297 = vpop.f32.mrf.mxu0
      %2298 = vdwg.mxu0
      %v2299 = vadd.f32 %v1783, %v2141
      %v2300 = vadd.f32 %v1788, %v2146
      %v2301 = vadd.f32 %v1793, %v2151
      %v2302 = vadd.f32 %v1798, %v2156
      %v2303 = vadd.f32 %v1803, %v2161
      %v2304 = vadd.f32 %v1808, %v2166
      %v2305 = vadd.f32 %v1813, %v2171
      %v2306 = vadd.f32 %v1818, %v2176
      %v2307 = vadd.f32 %v1823, %v2181
      %v2308 = vadd.f32 %v1828, %v2186
      %v2309 = vadd.f32 %v1833, %v2191
      %v2310 = vadd.f32 %v1838, %v2196
      %v2311 = vadd.f32 %v1843, %v2201
      %v2312 = vadd.f32 %v1848, %v2206
      %v2313 = vadd.f32 %v1853, %v2211
      %v2314 = vadd.f32 %v1858, %v2216
      %v2315 = vadd.f32 %v1863, %v2221
      %v2316 = vadd.f32 %v1868, %v2226
      %v2317 = vadd.f32 %v1873, %v2231
      %v2318 = vadd.f32 %v1878, %v2236
      %v2319 = vadd.f32 %v1883, %v2241
      %v2320 = vadd.f32 %v1888, %v2246
      %v2321 = vadd.f32 %v1893, %v2251
      %v2322 = vadd.f32 %v1898, %v2256
      %v2323 = vadd.f32 %v1903, %v2261
      %v2324 = vadd.f32 %v1908, %v2266
      %v2325 = vadd.f32 %v1913, %v2271
      %v2326 = vadd.f32 %v1918, %v2276
      %v2327 = vadd.f32 %v1923, %v2281
      %v2328 = vadd.f32 %v1928, %v2286
      %v2329 = vadd.f32 %v1933, %v2291
      %v2330 = vadd.f32 %v1938, %v2296
      %v2331 = vld [vmem:[%s1193 + $0x7] sm:$0xff]
      %v2332 = vld [vmem:[%s1193 + $0xf] sm:$0xff]
      %v2333 = vld [vmem:[%s1193 + $0x27] sm:$0xff]
      %v2334 = vld [vmem:[%s1193 + $0x2f] sm:$0xff]
      %v2335 = vld [vmem:[%s1193 + $0x47] sm:$0xff]
      %v2336 = vld [vmem:[%s1193 + $0x4f] sm:$0xff]
      %v2337 = vld [vmem:[%s1193 + $0x67] sm:$0xff]
      %v2338 = vld [vmem:[%s1193 + $0x6f] sm:$0xff]
      %v2339 = vld [vmem:[%s1193 + $0x87] sm:$0xff]
      %v2340 = vld [vmem:[%s1193 + $0x8f] sm:$0xff]
      %v2341 = vld [vmem:[%s1193 + $0xa7] sm:$0xff]
      %v2342 = vld [vmem:[%s1193 + $0xaf] sm:$0xff]
      %v2343 = vld [vmem:[%s1193 + $0xc7] sm:$0xff]
      %v2344 = vld [vmem:[%s1193 + $0xcf] sm:$0xff]
      %v2345 = vld [vmem:[%s1193 + $0xe7] sm:$0xff]
      %v2346 = vld [vmem:[%s1193 + $0xef] sm:$0xff]
      %v2347 = vld [vmem:[%s1193 + $0x107] sm:$0xff]
      %v2348 = vld [vmem:[%s1193 + $0x10f] sm:$0xff]
      %v2349 = vld [vmem:[%s1193 + $0x127] sm:$0xff]
      %v2350 = vld [vmem:[%s1193 + $0x12f] sm:$0xff]
      %v2351 = vld [vmem:[%s1193 + $0x147] sm:$0xff]
      %v2352 = vld [vmem:[%s1193 + $0x14f] sm:$0xff]
      %v2353 = vld [vmem:[%s1193 + $0x167] sm:$0xff]
      %v2354 = vld [vmem:[%s1193 + $0x16f] sm:$0xff]
      %v2355 = vld [vmem:[%s1193 + $0x187] sm:$0xff]
      %v2356 = vld [vmem:[%s1193 + $0x18f] sm:$0xff]
      %v2357 = vld [vmem:[%s1193 + $0x1a7] sm:$0xff]
      %v2358 = vld [vmem:[%s1193 + $0x1af] sm:$0xff]
      %v2359 = vld [vmem:[%s1193 + $0x1c7] sm:$0xff]
      %v2360 = vld [vmem:[%s1193 + $0x1cf] sm:$0xff]
      %v2361 = vld [vmem:[%s1193 + $0x1e7] sm:$0xff]
      %v2362 = vld [vmem:[%s1193 + $0x1ef] sm:$0xff]
      %s2363 = scalar_lea.vmem %s5, 12
      %v2364 = vld [vmem:[%s2363] sm:$0xf]
      %v2366 = vsel %vm329, %v2331, 0
      %v2369 = vsel %vm329, %v2332, 0
      %v2372 = vsel %vm329, %v2333, 0
      %v2375 = vsel %vm329, %v2334, 0
      %v2378 = vsel %vm329, %v2335, 0
      %v2381 = vsel %vm329, %v2336, 0
      %v2384 = vsel %vm329, %v2337, 0
      %v2387 = vsel %vm329, %v2338, 0
      %v2390 = vsel %vm329, %v2339, 0
      %v2393 = vsel %vm329, %v2340, 0
      %v2396 = vsel %vm329, %v2341, 0
      %v2399 = vsel %vm329, %v2342, 0
      %v2402 = vsel %vm329, %v2343, 0
      %v2405 = vsel %vm329, %v2344, 0
      %v2408 = vsel %vm329, %v2345, 0
      %v2411 = vsel %vm329, %v2346, 0
      %v2414 = vsel %vm329, %v2347, 0
      %v2417 = vsel %vm329, %v2348, 0
      %v2420 = vsel %vm329, %v2349, 0
      %v2423 = vsel %vm329, %v2350, 0
      %v2426 = vsel %vm329, %v2351, 0
      %v2429 = vsel %vm329, %v2352, 0
      %v2432 = vsel %vm329, %v2353, 0
      %v2435 = vsel %vm329, %v2354, 0
      %v2438 = vsel %vm329, %v2355, 0
      %v2441 = vsel %vm329, %v2356, 0
      %v2444 = vsel %vm329, %v2357, 0
      %v2447 = vsel %vm329, %v2358, 0
      %v2450 = vsel %vm329, %v2359, 0
      %v2453 = vsel %vm329, %v2360, 0
      %v2456 = vsel %vm329, %v2361, 0
      %v2459 = vsel %vm329, %v2362, 0
      %v2462 = vsel %vm503, %v2364, 0
      %2464 = vmatprep.subr.mxu0 0.0
      %2465 = vmatpush1.msra.mxu0 0.0
      %2466 = vmatprep.subr.mxu0 0.0
      %2467 = vmatpush1.msra.mxu0 0.0
      %2468 = vmatprep.subr.mxu0 0.0
      %2469 = vmatpush1.msra.mxu0 0.0
      %2470 = vmatprep.subr.mxu0 0.0
      %2471 = vmatpush1.msra.mxu0 0.0
      %2472 = vmatprep.subr.mxu0 0.0
      %2473 = vmatpush1.msra.mxu0 0.0
      %2474 = vmatprep.subr.mxu0 0.0
      %2475 = vmatpush1.msra.mxu0 0.0
      %2476 = vmatprep.subr.mxu0 0.0
      %2477 = vmatpush1.msra.mxu0 0.0
      %2478 = vmatprep.subr.mxu0 0.0
      %2479 = vmatpush1.msra.mxu0 0.0
      %2480 = vmatprep.subr.mxu0 0.0
      %2481 = vmatpush1.msra.mxu0 0.0
      %2482 = vmatprep.subr.mxu0 0.0
      %2483 = vmatpush1.msra.mxu0 0.0
      %2484 = vmatprep.subr.mxu0 0.0
      %2485 = vmatpush1.msra.mxu0 0.0
      %2486 = vmatprep.subr.mxu0 0.0
      %2487 = vmatpush1.msra.mxu0 0.0
      %2488 = vmatprep.subr.mxu0 0.0
      %2489 = vmatpush1.msra.mxu0 0.0
      %2490 = vmatprep.subr.mxu0 0.0
      %2491 = vmatpush1.msra.mxu0 0.0
      %2492 = vmatprep.subr.mxu0 0.0
      %2493 = vmatpush1.msra.mxu0 0.0
      %2494 = vmatprep.subr.mxu0 0.0
      %2495 = vmatpush1.msra.mxu0 %v2462
      %2496 = vmatprep.subr.mxu0 0.0
      %2497 = vmatpush2.msra.mxu0 0.0
      %2498 = vmatprep.subr.mxu0 0.0
      %2499 = vmatpush2.msra.mxu0 0.0
      %2500 = vmatprep.subr.mxu0 0.0
      %2501 = vmatpush2.msra.mxu0 0.0
      %2502 = vmatprep.subr.mxu0 0.0
      %2503 = vmatpush2.msra.mxu0 0.0
      %2504 = vmatprep.subr.mxu0 0.0
      %2505 = vmatpush2.msra.mxu0 0.0
      %2506 = vmatprep.subr.mxu0 0.0
      %2507 = vmatpush2.msra.mxu0 0.0
      %2508 = vmatprep.subr.mxu0 0.0
      %2509 = vmatpush2.msra.mxu0 0.0
      %2510 = vmatprep.subr.mxu0 0.0
      %2511 = vmatpush2.msra.mxu0 0.0
      %2512 = vmatprep.subr.mxu0 0.0
      %2513 = vmatpush2.msra.mxu0 0.0
      %2514 = vmatprep.subr.mxu0 0.0
      %2515 = vmatpush2.msra.mxu0 0.0
      %2516 = vmatprep.subr.mxu0 0.0
      %2517 = vmatpush2.msra.mxu0 0.0
      %2518 = vmatprep.subr.mxu0 0.0
      %2519 = vmatpush2.msra.mxu0 0.0
      %2520 = vmatprep.subr.mxu0 0.0
      %2521 = vmatpush2.msra.mxu0 0.0
      %2522 = vmatprep.subr.mxu0 0.0
      %2523 = vmatpush2.msra.mxu0 0.0
      %2524 = vmatprep.subr.mxu0 0.0
      %2525 = vmatpush2.msra.mxu0 0.0
      %2526 = vmatprep.subr.mxu0 0.0
      %2527 = vmatpush2.msra.mxu0 0.0
      %2528 = vmatprep.mubr.f32.mxu0 0.0
      %2529 = vmatmul.mubr.f32.gmra.mxu0 %v2366
      %v2530 = vpop.f32.mrf.mxu0
      %v2531 = vadd.f32 0.0, %v2530
      %v2532 = vpop.f32.mrf.mxu0
      %2533 = vmatprep.mubr.f32.mxu0 0.0
      %2534 = vmatmul.mubr.f32.gmra.mxu0 %v2369
      %v2535 = vpop.f32.mrf.mxu0
      %v2536 = vadd.f32 0.0, %v2535
      %v2537 = vpop.f32.mrf.mxu0
      %2538 = vmatprep.mubr.f32.mxu0 0.0
      %2539 = vmatmul.mubr.f32.gmra.mxu0 %v2372
      %v2540 = vpop.f32.mrf.mxu0
      %v2541 = vadd.f32 0.0, %v2540
      %v2542 = vpop.f32.mrf.mxu0
      %2543 = vmatprep.mubr.f32.mxu0 0.0
      %2544 = vmatmul.mubr.f32.gmra.mxu0 %v2375
      %v2545 = vpop.f32.mrf.mxu0
      %v2546 = vadd.f32 0.0, %v2545
      %v2547 = vpop.f32.mrf.mxu0
      %2548 = vmatprep.mubr.f32.mxu0 0.0
      %2549 = vmatmul.mubr.f32.gmra.mxu0 %v2378
      %v2550 = vpop.f32.mrf.mxu0
      %v2551 = vadd.f32 0.0, %v2550
      %v2552 = vpop.f32.mrf.mxu0
      %2553 = vmatprep.mubr.f32.mxu0 0.0
      %2554 = vmatmul.mubr.f32.gmra.mxu0 %v2381
      %v2555 = vpop.f32.mrf.mxu0
      %v2556 = vadd.f32 0.0, %v2555
      %v2557 = vpop.f32.mrf.mxu0
      %2558 = vmatprep.mubr.f32.mxu0 0.0
      %2559 = vmatmul.mubr.f32.gmra.mxu0 %v2384
      %v2560 = vpop.f32.mrf.mxu0
      %v2561 = vadd.f32 0.0, %v2560
      %v2562 = vpop.f32.mrf.mxu0
      %2563 = vmatprep.mubr.f32.mxu0 0.0
      %2564 = vmatmul.mubr.f32.gmra.mxu0 %v2387
      %v2565 = vpop.f32.mrf.mxu0
      %v2566 = vadd.f32 0.0, %v2565
      %v2567 = vpop.f32.mrf.mxu0
      %2568 = vmatprep.mubr.f32.mxu0 0.0
      %2569 = vmatmul.mubr.f32.gmra.mxu0 %v2390
      %v2570 = vpop.f32.mrf.mxu0
      %v2571 = vadd.f32 0.0, %v2570
      %v2572 = vpop.f32.mrf.mxu0
      %2573 = vmatprep.mubr.f32.mxu0 0.0
      %2574 = vmatmul.mubr.f32.gmra.mxu0 %v2393
      %v2575 = vpop.f32.mrf.mxu0
      %v2576 = vadd.f32 0.0, %v2575
      %v2577 = vpop.f32.mrf.mxu0
      %2578 = vmatprep.mubr.f32.mxu0 0.0
      %2579 = vmatmul.mubr.f32.gmra.mxu0 %v2396
      %v2580 = vpop.f32.mrf.mxu0
      %v2581 = vadd.f32 0.0, %v2580
      %v2582 = vpop.f32.mrf.mxu0
      %2583 = vmatprep.mubr.f32.mxu0 0.0
      %2584 = vmatmul.mubr.f32.gmra.mxu0 %v2399
      %v2585 = vpop.f32.mrf.mxu0
      %v2586 = vadd.f32 0.0, %v2585
      %v2587 = vpop.f32.mrf.mxu0
      %2588 = vmatprep.mubr.f32.mxu0 0.0
      %2589 = vmatmul.mubr.f32.gmra.mxu0 %v2402
      %v2590 = vpop.f32.mrf.mxu0
      %v2591 = vadd.f32 0.0, %v2590
      %v2592 = vpop.f32.mrf.mxu0
      %2593 = vmatprep.mubr.f32.mxu0 0.0
      %2594 = vmatmul.mubr.f32.gmra.mxu0 %v2405
      %v2595 = vpop.f32.mrf.mxu0
      %v2596 = vadd.f32 0.0, %v2595
      %v2597 = vpop.f32.mrf.mxu0
      %2598 = vmatprep.mubr.f32.mxu0 0.0
      %2599 = vmatmul.mubr.f32.gmra.mxu0 %v2408
      %v2600 = vpop.f32.mrf.mxu0
      %v2601 = vadd.f32 0.0, %v2600
      %v2602 = vpop.f32.mrf.mxu0
      %2603 = vmatprep.mubr.f32.mxu0 0.0
      %2604 = vmatmul.mubr.f32.gmra.mxu0 %v2411
      %v2605 = vpop.f32.mrf.mxu0
      %v2606 = vadd.f32 0.0, %v2605
      %v2607 = vpop.f32.mrf.mxu0
      %2608 = vmatprep.mubr.f32.mxu0 0.0
      %2609 = vmatmul.mubr.f32.gmra.mxu0 %v2414
      %v2610 = vpop.f32.mrf.mxu0
      %v2611 = vadd.f32 0.0, %v2610
      %v2612 = vpop.f32.mrf.mxu0
      %2613 = vmatprep.mubr.f32.mxu0 0.0
      %2614 = vmatmul.mubr.f32.gmra.mxu0 %v2417
      %v2615 = vpop.f32.mrf.mxu0
      %v2616 = vadd.f32 0.0, %v2615
      %v2617 = vpop.f32.mrf.mxu0
      %2618 = vmatprep.mubr.f32.mxu0 0.0
      %2619 = vmatmul.mubr.f32.gmra.mxu0 %v2420
      %v2620 = vpop.f32.mrf.mxu0
      %v2621 = vadd.f32 0.0, %v2620
      %v2622 = vpop.f32.mrf.mxu0
      %2623 = vmatprep.mubr.f32.mxu0 0.0
      %2624 = vmatmul.mubr.f32.gmra.mxu0 %v2423
      %v2625 = vpop.f32.mrf.mxu0
      %v2626 = vadd.f32 0.0, %v2625
      %v2627 = vpop.f32.mrf.mxu0
      %2628 = vmatprep.mubr.f32.mxu0 0.0
      %2629 = vmatmul.mubr.f32.gmra.mxu0 %v2426
      %v2630 = vpop.f32.mrf.mxu0
      %v2631 = vadd.f32 0.0, %v2630
      %v2632 = vpop.f32.mrf.mxu0
      %2633 = vmatprep.mubr.f32.mxu0 0.0
      %2634 = vmatmul.mubr.f32.gmra.mxu0 %v2429
      %v2635 = vpop.f32.mrf.mxu0
      %v2636 = vadd.f32 0.0, %v2635
      %v2637 = vpop.f32.mrf.mxu0
      %2638 = vmatprep.mubr.f32.mxu0 0.0
      %2639 = vmatmul.mubr.f32.gmra.mxu0 %v2432
      %v2640 = vpop.f32.mrf.mxu0
      %v2641 = vadd.f32 0.0, %v2640
      %v2642 = vpop.f32.mrf.mxu0
      %2643 = vmatprep.mubr.f32.mxu0 0.0
      %2644 = vmatmul.mubr.f32.gmra.mxu0 %v2435
      %v2645 = vpop.f32.mrf.mxu0
      %v2646 = vadd.f32 0.0, %v2645
      %v2647 = vpop.f32.mrf.mxu0
      %2648 = vmatprep.mubr.f32.mxu0 0.0
      %2649 = vmatmul.mubr.f32.gmra.mxu0 %v2438
      %v2650 = vpop.f32.mrf.mxu0
      %v2651 = vadd.f32 0.0, %v2650
      %v2652 = vpop.f32.mrf.mxu0
      %2653 = vmatprep.mubr.f32.mxu0 0.0
      %2654 = vmatmul.mubr.f32.gmra.mxu0 %v2441
      %v2655 = vpop.f32.mrf.mxu0
      %v2656 = vadd.f32 0.0, %v2655
      %v2657 = vpop.f32.mrf.mxu0
      %2658 = vmatprep.mubr.f32.mxu0 0.0
      %2659 = vmatmul.mubr.f32.gmra.mxu0 %v2444
      %v2660 = vpop.f32.mrf.mxu0
      %v2661 = vadd.f32 0.0, %v2660
      %v2662 = vpop.f32.mrf.mxu0
      %2663 = vmatprep.mubr.f32.mxu0 0.0
      %2664 = vmatmul.mubr.f32.gmra.mxu0 %v2447
      %v2665 = vpop.f32.mrf.mxu0
      %v2666 = vadd.f32 0.0, %v2665
      %v2667 = vpop.f32.mrf.mxu0
      %2668 = vmatprep.mubr.f32.mxu0 0.0
      %2669 = vmatmul.mubr.f32.gmra.mxu0 %v2450
      %v2670 = vpop.f32.mrf.mxu0
      %v2671 = vadd.f32 0.0, %v2670
      %v2672 = vpop.f32.mrf.mxu0
      %2673 = vmatprep.mubr.f32.mxu0 0.0
      %2674 = vmatmul.mubr.f32.gmra.mxu0 %v2453
      %v2675 = vpop.f32.mrf.mxu0
      %v2676 = vadd.f32 0.0, %v2675
      %v2677 = vpop.f32.mrf.mxu0
      %2678 = vmatprep.mubr.f32.mxu0 0.0
      %2679 = vmatmul.mubr.f32.gmra.mxu0 %v2456
      %v2680 = vpop.f32.mrf.mxu0
      %v2681 = vadd.f32 0.0, %v2680
      %v2682 = vpop.f32.mrf.mxu0
      %2683 = vmatprep.mubr.f32.mxu0 0.0
      %2684 = vmatmul.mubr.f32.gmra.mxu0 %v2459
      %v2685 = vpop.f32.mrf.mxu0
      %v2686 = vadd.f32 0.0, %v2685
      %v2687 = vpop.f32.mrf.mxu0
      %2688 = vdwg.mxu0
      %v2689 = vadd.f32 %v2299, %v2531
      %v2690 = vadd.f32 %v2300, %v2536
      %v2691 = vadd.f32 %v2301, %v2541
      %v2692 = vadd.f32 %v2302, %v2546
      %v2693 = vadd.f32 %v2303, %v2551
      %v2694 = vadd.f32 %v2304, %v2556
      %v2695 = vadd.f32 %v2305, %v2561
      %v2696 = vadd.f32 %v2306, %v2566
      %v2697 = vadd.f32 %v2307, %v2571
      %v2698 = vadd.f32 %v2308, %v2576
      %v2699 = vadd.f32 %v2309, %v2581
      %v2700 = vadd.f32 %v2310, %v2586
      %v2701 = vadd.f32 %v2311, %v2591
      %v2702 = vadd.f32 %v2312, %v2596
      %v2703 = vadd.f32 %v2313, %v2601
      %v2704 = vadd.f32 %v2314, %v2606
      %v2705 = vadd.f32 %v2315, %v2611
      %v2706 = vadd.f32 %v2316, %v2616
      %v2707 = vadd.f32 %v2317, %v2621
      %v2708 = vadd.f32 %v2318, %v2626
      %v2709 = vadd.f32 %v2319, %v2631
      %v2710 = vadd.f32 %v2320, %v2636
      %v2711 = vadd.f32 %v2321, %v2641
      %v2712 = vadd.f32 %v2322, %v2646
      %v2713 = vadd.f32 %v2323, %v2651
      %v2714 = vadd.f32 %v2324, %v2656
      %v2715 = vadd.f32 %v2325, %v2661
      %v2716 = vadd.f32 %v2326, %v2666
      %v2717 = vadd.f32 %v2327, %v2671
      %v2718 = vadd.f32 %v2328, %v2676
      %v2719 = vadd.f32 %v2329, %v2681
      %v2720 = vadd.f32 %v2330, %v2686
      %v2721 = vld [vmem:[%s1193 + $0x8] sm:$0xff]
      %v2722 = vld [vmem:[%s1193 + $0x10] sm:$0xff]
      %v2723 = vld [vmem:[%s1193 + $0x28] sm:$0xff]
      %v2724 = vld [vmem:[%s1193 + $0x30] sm:$0xff]
      %v2725 = vld [vmem:[%s1193 + $0x48] sm:$0xff]
      %v2726 = vld [vmem:[%s1193 + $0x50] sm:$0xff]
      %v2727 = vld [vmem:[%s1193 + $0x68] sm:$0xff]
      %v2728 = vld [vmem:[%s1193 + $0x70] sm:$0xff]
      %v2729 = vld [vmem:[%s1193 + $0x88] sm:$0xff]
      %v2730 = vld [vmem:[%s1193 + $0x90] sm:$0xff]
      %v2731 = vld [vmem:[%s1193 + $0xa8] sm:$0xff]
      %v2732 = vld [vmem:[%s1193 + $0xb0] sm:$0xff]
      %v2733 = vld [vmem:[%s1193 + $0xc8] sm:$0xff]
      %v2734 = vld [vmem:[%s1193 + $0xd0] sm:$0xff]
      %v2735 = vld [vmem:[%s1193 + $0xe8] sm:$0xff]
      %v2736 = vld [vmem:[%s1193 + $0xf0] sm:$0xff]
      %v2737 = vld [vmem:[%s1193 + $0x108] sm:$0xff]
      %v2738 = vld [vmem:[%s1193 + $0x110] sm:$0xff]
      %v2739 = vld [vmem:[%s1193 + $0x128] sm:$0xff]
      %v2740 = vld [vmem:[%s1193 + $0x130] sm:$0xff]
      %v2741 = vld [vmem:[%s1193 + $0x148] sm:$0xff]
      %v2742 = vld [vmem:[%s1193 + $0x150] sm:$0xff]
      %v2743 = vld [vmem:[%s1193 + $0x168] sm:$0xff]
      %v2744 = vld [vmem:[%s1193 + $0x170] sm:$0xff]
      %v2745 = vld [vmem:[%s1193 + $0x188] sm:$0xff]
      %v2746 = vld [vmem:[%s1193 + $0x190] sm:$0xff]
      %v2747 = vld [vmem:[%s1193 + $0x1a8] sm:$0xff]
      %v2748 = vld [vmem:[%s1193 + $0x1b0] sm:$0xff]
      %v2749 = vld [vmem:[%s1193 + $0x1c8] sm:$0xff]
      %v2750 = vld [vmem:[%s1193 + $0x1d0] sm:$0xff]
      %v2751 = vld [vmem:[%s1193 + $0x1e8] sm:$0xff]
      %v2752 = vld [vmem:[%s1193 + $0x1f0] sm:$0xff]
      %s2753 = scalar_lea.vmem %s5, 16
      %v2754 = vld [vmem:[%s2753] sm:$0xf]
      %v2756 = vsel %vm329, %v2721, 0
      %v2759 = vsel %vm329, %v2722, 0
      %v2762 = vsel %vm329, %v2723, 0
      %v2765 = vsel %vm329, %v2724, 0
      %v2768 = vsel %vm329, %v2725, 0
      %v2771 = vsel %vm329, %v2726, 0
      %v2774 = vsel %vm329, %v2727, 0
      %v2777 = vsel %vm329, %v2728, 0
      %v2780 = vsel %vm329, %v2729, 0
      %v2783 = vsel %vm329, %v2730, 0
      %v2786 = vsel %vm329, %v2731, 0
      %v2789 = vsel %vm329, %v2732, 0
      %v2792 = vsel %vm329, %v2733, 0
      %v2795 = vsel %vm329, %v2734, 0
      %v2798 = vsel %vm329, %v2735, 0
      %v2801 = vsel %vm329, %v2736, 0
      %v2804 = vsel %vm329, %v2737, 0
      %v2807 = vsel %vm329, %v2738, 0
      %v2810 = vsel %vm329, %v2739, 0
      %v2813 = vsel %vm329, %v2740, 0
      %v2816 = vsel %vm329, %v2741, 0
      %v2819 = vsel %vm329, %v2742, 0
      %v2822 = vsel %vm329, %v2743, 0
      %v2825 = vsel %vm329, %v2744, 0
      %v2828 = vsel %vm329, %v2745, 0
      %v2831 = vsel %vm329, %v2746, 0
      %v2834 = vsel %vm329, %v2747, 0
      %v2837 = vsel %vm329, %v2748, 0
      %v2840 = vsel %vm329, %v2749, 0
      %v2843 = vsel %vm329, %v2750, 0
      %v2846 = vsel %vm329, %v2751, 0
      %v2849 = vsel %vm329, %v2752, 0
      %v2852 = vsel %vm503, %v2754, 0
      %2854 = vmatprep.subr.mxu0 0.0
      %2855 = vmatpush1.msra.mxu0 0.0
      %2856 = vmatprep.subr.mxu0 0.0
      %2857 = vmatpush1.msra.mxu0 0.0
      %2858 = vmatprep.subr.mxu0 0.0
      %2859 = vmatpush1.msra.mxu0 0.0
      %2860 = vmatprep.subr.mxu0 0.0
      %2861 = vmatpush1.msra.mxu0 0.0
      %2862 = vmatprep.subr.mxu0 0.0
      %2863 = vmatpush1.msra.mxu0 0.0
      %2864 = vmatprep.subr.mxu0 0.0
      %2865 = vmatpush1.msra.mxu0 0.0
      %2866 = vmatprep.subr.mxu0 0.0
      %2867 = vmatpush1.msra.mxu0 0.0
      %2868 = vmatprep.subr.mxu0 0.0
      %2869 = vmatpush1.msra.mxu0 0.0
      %2870 = vmatprep.subr.mxu0 0.0
      %2871 = vmatpush1.msra.mxu0 0.0
      %2872 = vmatprep.subr.mxu0 0.0
      %2873 = vmatpush1.msra.mxu0 0.0
      %2874 = vmatprep.subr.mxu0 0.0
      %2875 = vmatpush1.msra.mxu0 0.0
      %2876 = vmatprep.subr.mxu0 0.0
      %2877 = vmatpush1.msra.mxu0 0.0
      %2878 = vmatprep.subr.mxu0 0.0
      %2879 = vmatpush1.msra.mxu0 0.0
      %2880 = vmatprep.subr.mxu0 0.0
      %2881 = vmatpush1.msra.mxu0 0.0
      %2882 = vmatprep.subr.mxu0 0.0
      %2883 = vmatpush1.msra.mxu0 0.0
      %2884 = vmatprep.subr.mxu0 0.0
      %2885 = vmatpush1.msra.mxu0 %v2852
      %2886 = vmatprep.subr.mxu0 0.0
      %2887 = vmatpush2.msra.mxu0 0.0
      %2888 = vmatprep.subr.mxu0 0.0
      %2889 = vmatpush2.msra.mxu0 0.0
      %2890 = vmatprep.subr.mxu0 0.0
      %2891 = vmatpush2.msra.mxu0 0.0
      %2892 = vmatprep.subr.mxu0 0.0
      %2893 = vmatpush2.msra.mxu0 0.0
      %2894 = vmatprep.subr.mxu0 0.0
      %2895 = vmatpush2.msra.mxu0 0.0
      %2896 = vmatprep.subr.mxu0 0.0
      %2897 = vmatpush2.msra.mxu0 0.0
      %2898 = vmatprep.subr.mxu0 0.0
      %2899 = vmatpush2.msra.mxu0 0.0
      %2900 = vmatprep.subr.mxu0 0.0
      %2901 = vmatpush2.msra.mxu0 0.0
      %2902 = vmatprep.subr.mxu0 0.0
      %2903 = vmatpush2.msra.mxu0 0.0
      %2904 = vmatprep.subr.mxu0 0.0
      %2905 = vmatpush2.msra.mxu0 0.0
      %2906 = vmatprep.subr.mxu0 0.0
      %2907 = vmatpush2.msra.mxu0 0.0
      %2908 = vmatprep.subr.mxu0 0.0
      %2909 = vmatpush2.msra.mxu0 0.0
      %2910 = vmatprep.subr.mxu0 0.0
      %2911 = vmatpush2.msra.mxu0 0.0
      %2912 = vmatprep.subr.mxu0 0.0
      %2913 = vmatpush2.msra.mxu0 0.0
      %2914 = vmatprep.subr.mxu0 0.0
      %2915 = vmatpush2.msra.mxu0 0.0
      %2916 = vmatprep.subr.mxu0 0.0
      %2917 = vmatpush2.msra.mxu0 0.0
      %2918 = vmatprep.mubr.f32.mxu0 0.0
      %2919 = vmatmul.mubr.f32.gmra.mxu0 %v2756
      %v2920 = vpop.f32.mrf.mxu0
      %v2921 = vadd.f32 0.0, %v2920
      %v2922 = vpop.f32.mrf.mxu0
      %2923 = vmatprep.mubr.f32.mxu0 0.0
      %2924 = vmatmul.mubr.f32.gmra.mxu0 %v2759
      %v2925 = vpop.f32.mrf.mxu0
      %v2926 = vadd.f32 0.0, %v2925
      %v2927 = vpop.f32.mrf.mxu0
      %2928 = vmatprep.mubr.f32.mxu0 0.0
      %2929 = vmatmul.mubr.f32.gmra.mxu0 %v2762
      %v2930 = vpop.f32.mrf.mxu0
      %v2931 = vadd.f32 0.0, %v2930
      %v2932 = vpop.f32.mrf.mxu0
      %2933 = vmatprep.mubr.f32.mxu0 0.0
      %2934 = vmatmul.mubr.f32.gmra.mxu0 %v2765
      %v2935 = vpop.f32.mrf.mxu0
      %v2936 = vadd.f32 0.0, %v2935
      %v2937 = vpop.f32.mrf.mxu0
      %2938 = vmatprep.mubr.f32.mxu0 0.0
      %2939 = vmatmul.mubr.f32.gmra.mxu0 %v2768
      %v2940 = vpop.f32.mrf.mxu0
      %v2941 = vadd.f32 0.0, %v2940
      %v2942 = vpop.f32.mrf.mxu0
      %2943 = vmatprep.mubr.f32.mxu0 0.0
      %2944 = vmatmul.mubr.f32.gmra.mxu0 %v2771
      %v2945 = vpop.f32.mrf.mxu0
      %v2946 = vadd.f32 0.0, %v2945
      %v2947 = vpop.f32.mrf.mxu0
      %2948 = vmatprep.mubr.f32.mxu0 0.0
      %2949 = vmatmul.mubr.f32.gmra.mxu0 %v2774
      %v2950 = vpop.f32.mrf.mxu0
      %v2951 = vadd.f32 0.0, %v2950
      %v2952 = vpop.f32.mrf.mxu0
      %2953 = vmatprep.mubr.f32.mxu0 0.0
      %2954 = vmatmul.mubr.f32.gmra.mxu0 %v2777
      %v2955 = vpop.f32.mrf.mxu0
      %v2956 = vadd.f32 0.0, %v2955
      %v2957 = vpop.f32.mrf.mxu0
      %2958 = vmatprep.mubr.f32.mxu0 0.0
      %2959 = vmatmul.mubr.f32.gmra.mxu0 %v2780
      %v2960 = vpop.f32.mrf.mxu0
      %v2961 = vadd.f32 0.0, %v2960
      %v2962 = vpop.f32.mrf.mxu0
      %2963 = vmatprep.mubr.f32.mxu0 0.0
      %2964 = vmatmul.mubr.f32.gmra.mxu0 %v2783
      %v2965 = vpop.f32.mrf.mxu0
      %v2966 = vadd.f32 0.0, %v2965
      %v2967 = vpop.f32.mrf.mxu0
      %2968 = vmatprep.mubr.f32.mxu0 0.0
      %2969 = vmatmul.mubr.f32.gmra.mxu0 %v2786
      %v2970 = vpop.f32.mrf.mxu0
      %v2971 = vadd.f32 0.0, %v2970
      %v2972 = vpop.f32.mrf.mxu0
      %2973 = vmatprep.mubr.f32.mxu0 0.0
      %2974 = vmatmul.mubr.f32.gmra.mxu0 %v2789
      %v2975 = vpop.f32.mrf.mxu0
      %v2976 = vadd.f32 0.0, %v2975
      %v2977 = vpop.f32.mrf.mxu0
      %2978 = vmatprep.mubr.f32.mxu0 0.0
      %2979 = vmatmul.mubr.f32.gmra.mxu0 %v2792
      %v2980 = vpop.f32.mrf.mxu0
      %v2981 = vadd.f32 0.0, %v2980
      %v2982 = vpop.f32.mrf.mxu0
      %2983 = vmatprep.mubr.f32.mxu0 0.0
      %2984 = vmatmul.mubr.f32.gmra.mxu0 %v2795
      %v2985 = vpop.f32.mrf.mxu0
      %v2986 = vadd.f32 0.0, %v2985
      %v2987 = vpop.f32.mrf.mxu0
      %2988 = vmatprep.mubr.f32.mxu0 0.0
      %2989 = vmatmul.mubr.f32.gmra.mxu0 %v2798
      %v2990 = vpop.f32.mrf.mxu0
      %v2991 = vadd.f32 0.0, %v2990
      %v2992 = vpop.f32.mrf.mxu0
      %2993 = vmatprep.mubr.f32.mxu0 0.0
      %2994 = vmatmul.mubr.f32.gmra.mxu0 %v2801
      %v2995 = vpop.f32.mrf.mxu0
      %v2996 = vadd.f32 0.0, %v2995
      %v2997 = vpop.f32.mrf.mxu0
      %2998 = vmatprep.mubr.f32.mxu0 0.0
      %2999 = vmatmul.mubr.f32.gmra.mxu0 %v2804
      %v3000 = vpop.f32.mrf.mxu0
      %v3001 = vadd.f32 0.0, %v3000
      %v3002 = vpop.f32.mrf.mxu0
      %3003 = vmatprep.mubr.f32.mxu0 0.0
      %3004 = vmatmul.mubr.f32.gmra.mxu0 %v2807
      %v3005 = vpop.f32.mrf.mxu0
      %v3006 = vadd.f32 0.0, %v3005
      %v3007 = vpop.f32.mrf.mxu0
      %3008 = vmatprep.mubr.f32.mxu0 0.0
      %3009 = vmatmul.mubr.f32.gmra.mxu0 %v2810
      %v3010 = vpop.f32.mrf.mxu0
      %v3011 = vadd.f32 0.0, %v3010
      %v3012 = vpop.f32.mrf.mxu0
      %3013 = vmatprep.mubr.f32.mxu0 0.0
      %3014 = vmatmul.mubr.f32.gmra.mxu0 %v2813
      %v3015 = vpop.f32.mrf.mxu0
      %v3016 = vadd.f32 0.0, %v3015
      %v3017 = vpop.f32.mrf.mxu0
      %3018 = vmatprep.mubr.f32.mxu0 0.0
      %3019 = vmatmul.mubr.f32.gmra.mxu0 %v2816
      %v3020 = vpop.f32.mrf.mxu0
      %v3021 = vadd.f32 0.0, %v3020
      %v3022 = vpop.f32.mrf.mxu0
      %3023 = vmatprep.mubr.f32.mxu0 0.0
      %3024 = vmatmul.mubr.f32.gmra.mxu0 %v2819
      %v3025 = vpop.f32.mrf.mxu0
      %v3026 = vadd.f32 0.0, %v3025
      %v3027 = vpop.f32.mrf.mxu0
      %3028 = vmatprep.mubr.f32.mxu0 0.0
      %3029 = vmatmul.mubr.f32.gmra.mxu0 %v2822
      %v3030 = vpop.f32.mrf.mxu0
      %v3031 = vadd.f32 0.0, %v3030
      %v3032 = vpop.f32.mrf.mxu0
      %3033 = vmatprep.mubr.f32.mxu0 0.0
      %3034 = vmatmul.mubr.f32.gmra.mxu0 %v2825
      %v3035 = vpop.f32.mrf.mxu0
      %v3036 = vadd.f32 0.0, %v3035
      %v3037 = vpop.f32.mrf.mxu0
      %3038 = vmatprep.mubr.f32.mxu0 0.0
      %3039 = vmatmul.mubr.f32.gmra.mxu0 %v2828
      %v3040 = vpop.f32.mrf.mxu0
      %v3041 = vadd.f32 0.0, %v3040
      %v3042 = vpop.f32.mrf.mxu0
      %3043 = vmatprep.mubr.f32.mxu0 0.0
      %3044 = vmatmul.mubr.f32.gmra.mxu0 %v2831
      %v3045 = vpop.f32.mrf.mxu0
      %v3046 = vadd.f32 0.0, %v3045
      %v3047 = vpop.f32.mrf.mxu0
      %3048 = vmatprep.mubr.f32.mxu0 0.0
      %3049 = vmatmul.mubr.f32.gmra.mxu0 %v2834
      %v3050 = vpop.f32.mrf.mxu0
      %v3051 = vadd.f32 0.0, %v3050
      %v3052 = vpop.f32.mrf.mxu0
      %3053 = vmatprep.mubr.f32.mxu0 0.0
      %3054 = vmatmul.mubr.f32.gmra.mxu0 %v2837
      %v3055 = vpop.f32.mrf.mxu0
      %v3056 = vadd.f32 0.0, %v3055
      %v3057 = vpop.f32.mrf.mxu0
      %3058 = vmatprep.mubr.f32.mxu0 0.0
      %3059 = vmatmul.mubr.f32.gmra.mxu0 %v2840
      %v3060 = vpop.f32.mrf.mxu0
      %v3061 = vadd.f32 0.0, %v3060
      %v3062 = vpop.f32.mrf.mxu0
      %3063 = vmatprep.mubr.f32.mxu0 0.0
      %3064 = vmatmul.mubr.f32.gmra.mxu0 %v2843
      %v3065 = vpop.f32.mrf.mxu0
      %v3066 = vadd.f32 0.0, %v3065
      %v3067 = vpop.f32.mrf.mxu0
      %3068 = vmatprep.mubr.f32.mxu0 0.0
      %3069 = vmatmul.mubr.f32.gmra.mxu0 %v2846
      %v3070 = vpop.f32.mrf.mxu0
      %v3071 = vadd.f32 0.0, %v3070
      %v3072 = vpop.f32.mrf.mxu0
      %3073 = vmatprep.mubr.f32.mxu0 0.0
      %3074 = vmatmul.mubr.f32.gmra.mxu0 %v2849
      %v3075 = vpop.f32.mrf.mxu0
      %v3076 = vadd.f32 0.0, %v3075
      %v3077 = vpop.f32.mrf.mxu0
      %3078 = vdwg.mxu0
      %v3079 = vadd.f32 %v2689, %v2921
      %v3080 = vadd.f32 %v2690, %v2926
      %v3081 = vadd.f32 %v2691, %v2931
      %v3082 = vadd.f32 %v2692, %v2936
      %v3083 = vadd.f32 %v2693, %v2941
      %v3084 = vadd.f32 %v2694, %v2946
      %v3085 = vadd.f32 %v2695, %v2951
      %v3086 = vadd.f32 %v2696, %v2956
      %v3087 = vadd.f32 %v2697, %v2961
      %v3088 = vadd.f32 %v2698, %v2966
      %v3089 = vadd.f32 %v2699, %v2971
      %v3090 = vadd.f32 %v2700, %v2976
      %v3091 = vadd.f32 %v2701, %v2981
      %v3092 = vadd.f32 %v2702, %v2986
      %v3093 = vadd.f32 %v2703, %v2991
      %v3094 = vadd.f32 %v2704, %v2996
      %v3095 = vadd.f32 %v2705, %v3001
      %v3096 = vadd.f32 %v2706, %v3006
      %v3097 = vadd.f32 %v2707, %v3011
      %v3098 = vadd.f32 %v2708, %v3016
      %v3099 = vadd.f32 %v2709, %v3021
      %v3100 = vadd.f32 %v2710, %v3026
      %v3101 = vadd.f32 %v2711, %v3031
      %v3102 = vadd.f32 %v2712, %v3036
      %v3103 = vadd.f32 %v2713, %v3041
      %v3104 = vadd.f32 %v2714, %v3046
      %v3105 = vadd.f32 %v2715, %v3051
      %v3106 = vadd.f32 %v2716, %v3056
      %v3107 = vadd.f32 %v2717, %v3061
      %v3108 = vadd.f32 %v2718, %v3066
      %v3109 = vadd.f32 %v2719, %v3071
      %v3110 = vadd.f32 %v2720, %v3076
      %v3111 = vld [vmem:[%s1193 + $0x9] sm:$0xff]
      %v3112 = vld [vmem:[%s1193 + $0x11] sm:$0xff]
      %v3113 = vld [vmem:[%s1193 + $0x29] sm:$0xff]
      %v3114 = vld [vmem:[%s1193 + $0x31] sm:$0xff]
      %v3115 = vld [vmem:[%s1193 + $0x49] sm:$0xff]
      %v3116 = vld [vmem:[%s1193 + $0x51] sm:$0xff]
      %v3117 = vld [vmem:[%s1193 + $0x69] sm:$0xff]
      %v3118 = vld [vmem:[%s1193 + $0x71] sm:$0xff]
      %v3119 = vld [vmem:[%s1193 + $0x89] sm:$0xff]
      %v3120 = vld [vmem:[%s1193 + $0x91] sm:$0xff]
      %v3121 = vld [vmem:[%s1193 + $0xa9] sm:$0xff]
      %v3122 = vld [vmem:[%s1193 + $0xb1] sm:$0xff]
      %v3123 = vld [vmem:[%s1193 + $0xc9] sm:$0xff]
      %v3124 = vld [vmem:[%s1193 + $0xd1] sm:$0xff]
      %v3125 = vld [vmem:[%s1193 + $0xe9] sm:$0xff]
      %v3126 = vld [vmem:[%s1193 + $0xf1] sm:$0xff]
      %v3127 = vld [vmem:[%s1193 + $0x109] sm:$0xff]
      %v3128 = vld [vmem:[%s1193 + $0x111] sm:$0xff]
      %v3129 = vld [vmem:[%s1193 + $0x129] sm:$0xff]
      %v3130 = vld [vmem:[%s1193 + $0x131] sm:$0xff]
      %v3131 = vld [vmem:[%s1193 + $0x149] sm:$0xff]
      %v3132 = vld [vmem:[%s1193 + $0x151] sm:$0xff]
      %v3133 = vld [vmem:[%s1193 + $0x169] sm:$0xff]
      %v3134 = vld [vmem:[%s1193 + $0x171] sm:$0xff]
      %v3135 = vld [vmem:[%s1193 + $0x189] sm:$0xff]
      %v3136 = vld [vmem:[%s1193 + $0x191] sm:$0xff]
      %v3137 = vld [vmem:[%s1193 + $0x1a9] sm:$0xff]
      %v3138 = vld [vmem:[%s1193 + $0x1b1] sm:$0xff]
      %v3139 = vld [vmem:[%s1193 + $0x1c9] sm:$0xff]
      %v3140 = vld [vmem:[%s1193 + $0x1d1] sm:$0xff]
      %v3141 = vld [vmem:[%s1193 + $0x1e9] sm:$0xff]
      %v3142 = vld [vmem:[%s1193 + $0x1f1] sm:$0xff]
      %s3143 = scalar_lea.vmem %s5, 20
      %v3144 = vld [vmem:[%s3143] sm:$0xf]
      %v3146 = vsel %vm329, %v3111, 0
      %v3149 = vsel %vm329, %v3112, 0
      %v3152 = vsel %vm329, %v3113, 0
      %v3155 = vsel %vm329, %v3114, 0
      %v3158 = vsel %vm329, %v3115, 0
      %v3161 = vsel %vm329, %v3116, 0
      %v3164 = vsel %vm329, %v3117, 0
      %v3167 = vsel %vm329, %v3118, 0
      %v3170 = vsel %vm329, %v3119, 0
      %v3173 = vsel %vm329, %v3120, 0
      %v3176 = vsel %vm329, %v3121, 0
      %v3179 = vsel %vm329, %v3122, 0
      %v3182 = vsel %vm329, %v3123, 0
      %v3185 = vsel %vm329, %v3124, 0
      %v3188 = vsel %vm329, %v3125, 0
      %v3191 = vsel %vm329, %v3126, 0
      %v3194 = vsel %vm329, %v3127, 0
      %v3197 = vsel %vm329, %v3128, 0
      %v3200 = vsel %vm329, %v3129, 0
      %v3203 = vsel %vm329, %v3130, 0
      %v3206 = vsel %vm329, %v3131, 0
      %v3209 = vsel %vm329, %v3132, 0
      %v3212 = vsel %vm329, %v3133, 0
      %v3215 = vsel %vm329, %v3134, 0
      %v3218 = vsel %vm329, %v3135, 0
      %v3221 = vsel %vm329, %v3136, 0
      %v3224 = vsel %vm329, %v3137, 0
      %v3227 = vsel %vm329, %v3138, 0
      %v3230 = vsel %vm329, %v3139, 0
      %v3233 = vsel %vm329, %v3140, 0
      %v3236 = vsel %vm329, %v3141, 0
      %v3239 = vsel %vm329, %v3142, 0
      %v3242 = vsel %vm503, %v3144, 0
      %3244 = vmatprep.subr.mxu0 0.0
      %3245 = vmatpush1.msra.mxu0 0.0
      %3246 = vmatprep.subr.mxu0 0.0
      %3247 = vmatpush1.msra.mxu0 0.0
      %3248 = vmatprep.subr.mxu0 0.0
      %3249 = vmatpush1.msra.mxu0 0.0
      %3250 = vmatprep.subr.mxu0 0.0
      %3251 = vmatpush1.msra.mxu0 0.0
      %3252 = vmatprep.subr.mxu0 0.0
      %3253 = vmatpush1.msra.mxu0 0.0
      %3254 = vmatprep.subr.mxu0 0.0
      %3255 = vmatpush1.msra.mxu0 0.0
      %3256 = vmatprep.subr.mxu0 0.0
      %3257 = vmatpush1.msra.mxu0 0.0
      %3258 = vmatprep.subr.mxu0 0.0
      %3259 = vmatpush1.msra.mxu0 0.0
      %3260 = vmatprep.subr.mxu0 0.0
      %3261 = vmatpush1.msra.mxu0 0.0
      %3262 = vmatprep.subr.mxu0 0.0
      %3263 = vmatpush1.msra.mxu0 0.0
      %3264 = vmatprep.subr.mxu0 0.0
      %3265 = vmatpush1.msra.mxu0 0.0
      %3266 = vmatprep.subr.mxu0 0.0
      %3267 = vmatpush1.msra.mxu0 0.0
      %3268 = vmatprep.subr.mxu0 0.0
      %3269 = vmatpush1.msra.mxu0 0.0
      %3270 = vmatprep.subr.mxu0 0.0
      %3271 = vmatpush1.msra.mxu0 0.0
      %3272 = vmatprep.subr.mxu0 0.0
      %3273 = vmatpush1.msra.mxu0 0.0
      %3274 = vmatprep.subr.mxu0 0.0
      %3275 = vmatpush1.msra.mxu0 %v3242
      %3276 = vmatprep.subr.mxu0 0.0
      %3277 = vmatpush2.msra.mxu0 0.0
      %3278 = vmatprep.subr.mxu0 0.0
      %3279 = vmatpush2.msra.mxu0 0.0
      %3280 = vmatprep.subr.mxu0 0.0
      %3281 = vmatpush2.msra.mxu0 0.0
      %3282 = vmatprep.subr.mxu0 0.0
      %3283 = vmatpush2.msra.mxu0 0.0
      %3284 = vmatprep.subr.mxu0 0.0
      %3285 = vmatpush2.msra.mxu0 0.0
      %3286 = vmatprep.subr.mxu0 0.0
      %3287 = vmatpush2.msra.mxu0 0.0
      %3288 = vmatprep.subr.mxu0 0.0
      %3289 = vmatpush2.msra.mxu0 0.0
      %3290 = vmatprep.subr.mxu0 0.0
      %3291 = vmatpush2.msra.mxu0 0.0
      %3292 = vmatprep.subr.mxu0 0.0
      %3293 = vmatpush2.msra.mxu0 0.0
      %3294 = vmatprep.subr.mxu0 0.0
      %3295 = vmatpush2.msra.mxu0 0.0
      %3296 = vmatprep.subr.mxu0 0.0
      %3297 = vmatpush2.msra.mxu0 0.0
      %3298 = vmatprep.subr.mxu0 0.0
      %3299 = vmatpush2.msra.mxu0 0.0
      %3300 = vmatprep.subr.mxu0 0.0
      %3301 = vmatpush2.msra.mxu0 0.0
      %3302 = vmatprep.subr.mxu0 0.0
      %3303 = vmatpush2.msra.mxu0 0.0
      %3304 = vmatprep.subr.mxu0 0.0
      %3305 = vmatpush2.msra.mxu0 0.0
      %3306 = vmatprep.subr.mxu0 0.0
      %3307 = vmatpush2.msra.mxu0 0.0
      %3308 = vmatprep.mubr.f32.mxu0 0.0
      %3309 = vmatmul.mubr.f32.gmra.mxu0 %v3146
      %v3310 = vpop.f32.mrf.mxu0
      %v3311 = vadd.f32 0.0, %v3310
      %v3312 = vpop.f32.mrf.mxu0
      %3313 = vmatprep.mubr.f32.mxu0 0.0
      %3314 = vmatmul.mubr.f32.gmra.mxu0 %v3149
      %v3315 = vpop.f32.mrf.mxu0
      %v3316 = vadd.f32 0.0, %v3315
      %v3317 = vpop.f32.mrf.mxu0
      %3318 = vmatprep.mubr.f32.mxu0 0.0
      %3319 = vmatmul.mubr.f32.gmra.mxu0 %v3152
      %v3320 = vpop.f32.mrf.mxu0
      %v3321 = vadd.f32 0.0, %v3320
      %v3322 = vpop.f32.mrf.mxu0
      %3323 = vmatprep.mubr.f32.mxu0 0.0
      %3324 = vmatmul.mubr.f32.gmra.mxu0 %v3155
      %v3325 = vpop.f32.mrf.mxu0
      %v3326 = vadd.f32 0.0, %v3325
      %v3327 = vpop.f32.mrf.mxu0
      %3328 = vmatprep.mubr.f32.mxu0 0.0
      %3329 = vmatmul.mubr.f32.gmra.mxu0 %v3158
      %v3330 = vpop.f32.mrf.mxu0
      %v3331 = vadd.f32 0.0, %v3330
      %v3332 = vpop.f32.mrf.mxu0
      %3333 = vmatprep.mubr.f32.mxu0 0.0
      %3334 = vmatmul.mubr.f32.gmra.mxu0 %v3161
      %v3335 = vpop.f32.mrf.mxu0
      %v3336 = vadd.f32 0.0, %v3335
      %v3337 = vpop.f32.mrf.mxu0
      %3338 = vmatprep.mubr.f32.mxu0 0.0
      %3339 = vmatmul.mubr.f32.gmra.mxu0 %v3164
      %v3340 = vpop.f32.mrf.mxu0
      %v3341 = vadd.f32 0.0, %v3340
      %v3342 = vpop.f32.mrf.mxu0
      %3343 = vmatprep.mubr.f32.mxu0 0.0
      %3344 = vmatmul.mubr.f32.gmra.mxu0 %v3167
      %v3345 = vpop.f32.mrf.mxu0
      %v3346 = vadd.f32 0.0, %v3345
      %v3347 = vpop.f32.mrf.mxu0
      %3348 = vmatprep.mubr.f32.mxu0 0.0
      %3349 = vmatmul.mubr.f32.gmra.mxu0 %v3170
      %v3350 = vpop.f32.mrf.mxu0
      %v3351 = vadd.f32 0.0, %v3350
      %v3352 = vpop.f32.mrf.mxu0
      %3353 = vmatprep.mubr.f32.mxu0 0.0
      %3354 = vmatmul.mubr.f32.gmra.mxu0 %v3173
      %v3355 = vpop.f32.mrf.mxu0
      %v3356 = vadd.f32 0.0, %v3355
      %v3357 = vpop.f32.mrf.mxu0
      %3358 = vmatprep.mubr.f32.mxu0 0.0
      %3359 = vmatmul.mubr.f32.gmra.mxu0 %v3176
      %v3360 = vpop.f32.mrf.mxu0
      %v3361 = vadd.f32 0.0, %v3360
      %v3362 = vpop.f32.mrf.mxu0
      %3363 = vmatprep.mubr.f32.mxu0 0.0
      %3364 = vmatmul.mubr.f32.gmra.mxu0 %v3179
      %v3365 = vpop.f32.mrf.mxu0
      %v3366 = vadd.f32 0.0, %v3365
      %v3367 = vpop.f32.mrf.mxu0
      %3368 = vmatprep.mubr.f32.mxu0 0.0
      %3369 = vmatmul.mubr.f32.gmra.mxu0 %v3182
      %v3370 = vpop.f32.mrf.mxu0
      %v3371 = vadd.f32 0.0, %v3370
      %v3372 = vpop.f32.mrf.mxu0
      %3373 = vmatprep.mubr.f32.mxu0 0.0
      %3374 = vmatmul.mubr.f32.gmra.mxu0 %v3185
      %v3375 = vpop.f32.mrf.mxu0
      %v3376 = vadd.f32 0.0, %v3375
      %v3377 = vpop.f32.mrf.mxu0
      %3378 = vmatprep.mubr.f32.mxu0 0.0
      %3379 = vmatmul.mubr.f32.gmra.mxu0 %v3188
      %v3380 = vpop.f32.mrf.mxu0
      %v3381 = vadd.f32 0.0, %v3380
      %v3382 = vpop.f32.mrf.mxu0
      %3383 = vmatprep.mubr.f32.mxu0 0.0
      %3384 = vmatmul.mubr.f32.gmra.mxu0 %v3191
      %v3385 = vpop.f32.mrf.mxu0
      %v3386 = vadd.f32 0.0, %v3385
      %v3387 = vpop.f32.mrf.mxu0
      %3388 = vmatprep.mubr.f32.mxu0 0.0
      %3389 = vmatmul.mubr.f32.gmra.mxu0 %v3194
      %v3390 = vpop.f32.mrf.mxu0
      %v3391 = vadd.f32 0.0, %v3390
      %v3392 = vpop.f32.mrf.mxu0
      %3393 = vmatprep.mubr.f32.mxu0 0.0
      %3394 = vmatmul.mubr.f32.gmra.mxu0 %v3197
      %v3395 = vpop.f32.mrf.mxu0
      %v3396 = vadd.f32 0.0, %v3395
      %v3397 = vpop.f32.mrf.mxu0
      %3398 = vmatprep.mubr.f32.mxu0 0.0
      %3399 = vmatmul.mubr.f32.gmra.mxu0 %v3200
      %v3400 = vpop.f32.mrf.mxu0
      %v3401 = vadd.f32 0.0, %v3400
      %v3402 = vpop.f32.mrf.mxu0
      %3403 = vmatprep.mubr.f32.mxu0 0.0
      %3404 = vmatmul.mubr.f32.gmra.mxu0 %v3203
      %v3405 = vpop.f32.mrf.mxu0
      %v3406 = vadd.f32 0.0, %v3405
      %v3407 = vpop.f32.mrf.mxu0
      %3408 = vmatprep.mubr.f32.mxu0 0.0
      %3409 = vmatmul.mubr.f32.gmra.mxu0 %v3206
      %v3410 = vpop.f32.mrf.mxu0
      %v3411 = vadd.f32 0.0, %v3410
      %v3412 = vpop.f32.mrf.mxu0
      %3413 = vmatprep.mubr.f32.mxu0 0.0
      %3414 = vmatmul.mubr.f32.gmra.mxu0 %v3209
      %v3415 = vpop.f32.mrf.mxu0
      %v3416 = vadd.f32 0.0, %v3415
      %v3417 = vpop.f32.mrf.mxu0
      %3418 = vmatprep.mubr.f32.mxu0 0.0
      %3419 = vmatmul.mubr.f32.gmra.mxu0 %v3212
      %v3420 = vpop.f32.mrf.mxu0
      %v3421 = vadd.f32 0.0, %v3420
      %v3422 = vpop.f32.mrf.mxu0
      %3423 = vmatprep.mubr.f32.mxu0 0.0
      %3424 = vmatmul.mubr.f32.gmra.mxu0 %v3215
      %v3425 = vpop.f32.mrf.mxu0
      %v3426 = vadd.f32 0.0, %v3425
      %v3427 = vpop.f32.mrf.mxu0
      %3428 = vmatprep.mubr.f32.mxu0 0.0
      %3429 = vmatmul.mubr.f32.gmra.mxu0 %v3218
      %v3430 = vpop.f32.mrf.mxu0
      %v3431 = vadd.f32 0.0, %v3430
      %v3432 = vpop.f32.mrf.mxu0
      %3433 = vmatprep.mubr.f32.mxu0 0.0
      %3434 = vmatmul.mubr.f32.gmra.mxu0 %v3221
      %v3435 = vpop.f32.mrf.mxu0
      %v3436 = vadd.f32 0.0, %v3435
      %v3437 = vpop.f32.mrf.mxu0
      %3438 = vmatprep.mubr.f32.mxu0 0.0
      %3439 = vmatmul.mubr.f32.gmra.mxu0 %v3224
      %v3440 = vpop.f32.mrf.mxu0
      %v3441 = vadd.f32 0.0, %v3440
      %v3442 = vpop.f32.mrf.mxu0
      %3443 = vmatprep.mubr.f32.mxu0 0.0
      %3444 = vmatmul.mubr.f32.gmra.mxu0 %v3227
      %v3445 = vpop.f32.mrf.mxu0
      %v3446 = vadd.f32 0.0, %v3445
      %v3447 = vpop.f32.mrf.mxu0
      %3448 = vmatprep.mubr.f32.mxu0 0.0
      %3449 = vmatmul.mubr.f32.gmra.mxu0 %v3230
      %v3450 = vpop.f32.mrf.mxu0
      %v3451 = vadd.f32 0.0, %v3450
      %v3452 = vpop.f32.mrf.mxu0
      %3453 = vmatprep.mubr.f32.mxu0 0.0
      %3454 = vmatmul.mubr.f32.gmra.mxu0 %v3233
      %v3455 = vpop.f32.mrf.mxu0
      %v3456 = vadd.f32 0.0, %v3455
      %v3457 = vpop.f32.mrf.mxu0
      %3458 = vmatprep.mubr.f32.mxu0 0.0
      %3459 = vmatmul.mubr.f32.gmra.mxu0 %v3236
      %v3460 = vpop.f32.mrf.mxu0
      %v3461 = vadd.f32 0.0, %v3460
      %v3462 = vpop.f32.mrf.mxu0
      %3463 = vmatprep.mubr.f32.mxu0 0.0
      %3464 = vmatmul.mubr.f32.gmra.mxu0 %v3239
      %v3465 = vpop.f32.mrf.mxu0
      %v3466 = vadd.f32 0.0, %v3465
      %v3467 = vpop.f32.mrf.mxu0
      %3468 = vdwg.mxu0
      %v3469 = vadd.f32 %v3079, %v3311
      %v3470 = vadd.f32 %v3080, %v3316
      %v3471 = vadd.f32 %v3081, %v3321
      %v3472 = vadd.f32 %v3082, %v3326
      %v3473 = vadd.f32 %v3083, %v3331
      %v3474 = vadd.f32 %v3084, %v3336
      %v3475 = vadd.f32 %v3085, %v3341
      %v3476 = vadd.f32 %v3086, %v3346
      %v3477 = vadd.f32 %v3087, %v3351
      %v3478 = vadd.f32 %v3088, %v3356
      %v3479 = vadd.f32 %v3089, %v3361
      %v3480 = vadd.f32 %v3090, %v3366
      %v3481 = vadd.f32 %v3091, %v3371
      %v3482 = vadd.f32 %v3092, %v3376
      %v3483 = vadd.f32 %v3093, %v3381
      %v3484 = vadd.f32 %v3094, %v3386
      %v3485 = vadd.f32 %v3095, %v3391
      %v3486 = vadd.f32 %v3096, %v3396
      %v3487 = vadd.f32 %v3097, %v3401
      %v3488 = vadd.f32 %v3098, %v3406
      %v3489 = vadd.f32 %v3099, %v3411
      %v3490 = vadd.f32 %v3100, %v3416
      %v3491 = vadd.f32 %v3101, %v3421
      %v3492 = vadd.f32 %v3102, %v3426
      %v3493 = vadd.f32 %v3103, %v3431
      %v3494 = vadd.f32 %v3104, %v3436
      %v3495 = vadd.f32 %v3105, %v3441
      %v3496 = vadd.f32 %v3106, %v3446
      %v3497 = vadd.f32 %v3107, %v3451
      %v3498 = vadd.f32 %v3108, %v3456
      %v3499 = vadd.f32 %v3109, %v3461
      %v3500 = vadd.f32 %v3110, %v3466
      %s3501 = scalar_lea.vmem [#allocation2], 64
      %v3502 = vld [vmem:[%s3501 + $0x7] sm:$0xff]
      %v3503 = vld [vmem:[%s3501 + $0xf] sm:$0xff]
      %v3504 = vld [vmem:[%s3501 + $0x27] sm:$0xff]
      %v3505 = vld [vmem:[%s3501 + $0x2f] sm:$0xff]
      %v3506 = vld [vmem:[%s3501 + $0x47] sm:$0xff]
      %v3507 = vld [vmem:[%s3501 + $0x4f] sm:$0xff]
      %v3508 = vld [vmem:[%s3501 + $0x67] sm:$0xff]
      %v3509 = vld [vmem:[%s3501 + $0x6f] sm:$0xff]
      %v3510 = vld [vmem:[%s3501 + $0x87] sm:$0xff]
      %v3511 = vld [vmem:[%s3501 + $0x8f] sm:$0xff]
      %v3512 = vld [vmem:[%s3501 + $0xa7] sm:$0xff]
      %v3513 = vld [vmem:[%s3501 + $0xaf] sm:$0xff]
      %v3514 = vld [vmem:[%s3501 + $0xc7] sm:$0xff]
      %v3515 = vld [vmem:[%s3501 + $0xcf] sm:$0xff]
      %v3516 = vld [vmem:[%s3501 + $0xe7] sm:$0xff]
      %v3517 = vld [vmem:[%s3501 + $0xef] sm:$0xff]
      %v3518 = vld [vmem:[%s3501 + $0x107] sm:$0xff]
      %v3519 = vld [vmem:[%s3501 + $0x10f] sm:$0xff]
      %v3520 = vld [vmem:[%s3501 + $0x127] sm:$0xff]
      %v3521 = vld [vmem:[%s3501 + $0x12f] sm:$0xff]
      %v3522 = vld [vmem:[%s3501 + $0x147] sm:$0xff]
      %v3523 = vld [vmem:[%s3501 + $0x14f] sm:$0xff]
      %v3524 = vld [vmem:[%s3501 + $0x167] sm:$0xff]
      %v3525 = vld [vmem:[%s3501 + $0x16f] sm:$0xff]
      %v3526 = vld [vmem:[%s3501 + $0x187] sm:$0xff]
      %v3527 = vld [vmem:[%s3501 + $0x18f] sm:$0xff]
      %v3528 = vld [vmem:[%s3501 + $0x1a7] sm:$0xff]
      %v3529 = vld [vmem:[%s3501 + $0x1af] sm:$0xff]
      %v3530 = vld [vmem:[%s3501 + $0x1c7] sm:$0xff]
      %v3531 = vld [vmem:[%s3501 + $0x1cf] sm:$0xff]
      %v3532 = vld [vmem:[%s3501 + $0x1e7] sm:$0xff]
      %v3533 = vld [vmem:[%s3501 + $0x1ef] sm:$0xff]
      %s3534 = scalar_lea.vmem %s5, 24
      %v3535 = vld [vmem:[%s3534] sm:$0xf]
      %v3537 = vsel %vm329, %v3502, 0
      %v3540 = vsel %vm329, %v3503, 0
      %v3543 = vsel %vm329, %v3504, 0
      %v3546 = vsel %vm329, %v3505, 0
      %v3549 = vsel %vm329, %v3506, 0
      %v3552 = vsel %vm329, %v3507, 0
      %v3555 = vsel %vm329, %v3508, 0
      %v3558 = vsel %vm329, %v3509, 0
      %v3561 = vsel %vm329, %v3510, 0
      %v3564 = vsel %vm329, %v3511, 0
      %v3567 = vsel %vm329, %v3512, 0
      %v3570 = vsel %vm329, %v3513, 0
      %v3573 = vsel %vm329, %v3514, 0
      %v3576 = vsel %vm329, %v3515, 0
      %v3579 = vsel %vm329, %v3516, 0
      %v3582 = vsel %vm329, %v3517, 0
      %v3585 = vsel %vm329, %v3518, 0
      %v3588 = vsel %vm329, %v3519, 0
      %v3591 = vsel %vm329, %v3520, 0
      %v3594 = vsel %vm329, %v3521, 0
      %v3597 = vsel %vm329, %v3522, 0
      %v3600 = vsel %vm329, %v3523, 0
      %v3603 = vsel %vm329, %v3524, 0
      %v3606 = vsel %vm329, %v3525, 0
      %v3609 = vsel %vm329, %v3526, 0
      %v3612 = vsel %vm329, %v3527, 0
      %v3615 = vsel %vm329, %v3528, 0
      %v3618 = vsel %vm329, %v3529, 0
      %v3621 = vsel %vm329, %v3530, 0
      %v3624 = vsel %vm329, %v3531, 0
      %v3627 = vsel %vm329, %v3532, 0
      %v3630 = vsel %vm329, %v3533, 0
      %v3633 = vsel %vm503, %v3535, 0
      %3635 = vmatprep.subr.mxu0 0.0
      %3636 = vmatpush1.msra.mxu0 0.0
      %3637 = vmatprep.subr.mxu0 0.0
      %3638 = vmatpush1.msra.mxu0 0.0
      %3639 = vmatprep.subr.mxu0 0.0
      %3640 = vmatpush1.msra.mxu0 0.0
      %3641 = vmatprep.subr.mxu0 0.0
      %3642 = vmatpush1.msra.mxu0 0.0
      %3643 = vmatprep.subr.mxu0 0.0
      %3644 = vmatpush1.msra.mxu0 0.0
      %3645 = vmatprep.subr.mxu0 0.0
      %3646 = vmatpush1.msra.mxu0 0.0
      %3647 = vmatprep.subr.mxu0 0.0
      %3648 = vmatpush1.msra.mxu0 0.0
      %3649 = vmatprep.subr.mxu0 0.0
      %3650 = vmatpush1.msra.mxu0 0.0
      %3651 = vmatprep.subr.mxu0 0.0
      %3652 = vmatpush1.msra.mxu0 0.0
      %3653 = vmatprep.subr.mxu0 0.0
      %3654 = vmatpush1.msra.mxu0 0.0
      %3655 = vmatprep.subr.mxu0 0.0
      %3656 = vmatpush1.msra.mxu0 0.0
      %3657 = vmatprep.subr.mxu0 0.0
      %3658 = vmatpush1.msra.mxu0 0.0
      %3659 = vmatprep.subr.mxu0 0.0
      %3660 = vmatpush1.msra.mxu0 0.0
      %3661 = vmatprep.subr.mxu0 0.0
      %3662 = vmatpush1.msra.mxu0 0.0
      %3663 = vmatprep.subr.mxu0 0.0
      %3664 = vmatpush1.msra.mxu0 0.0
      %3665 = vmatprep.subr.mxu0 0.0
      %3666 = vmatpush1.msra.mxu0 %v3633
      %3667 = vmatprep.subr.mxu0 0.0
      %3668 = vmatpush2.msra.mxu0 0.0
      %3669 = vmatprep.subr.mxu0 0.0
      %3670 = vmatpush2.msra.mxu0 0.0
      %3671 = vmatprep.subr.mxu0 0.0
      %3672 = vmatpush2.msra.mxu0 0.0
      %3673 = vmatprep.subr.mxu0 0.0
      %3674 = vmatpush2.msra.mxu0 0.0
      %3675 = vmatprep.subr.mxu0 0.0
      %3676 = vmatpush2.msra.mxu0 0.0
      %3677 = vmatprep.subr.mxu0 0.0
      %3678 = vmatpush2.msra.mxu0 0.0
      %3679 = vmatprep.subr.mxu0 0.0
      %3680 = vmatpush2.msra.mxu0 0.0
      %3681 = vmatprep.subr.mxu0 0.0
      %3682 = vmatpush2.msra.mxu0 0.0
      %3683 = vmatprep.subr.mxu0 0.0
      %3684 = vmatpush2.msra.mxu0 0.0
      %3685 = vmatprep.subr.mxu0 0.0
      %3686 = vmatpush2.msra.mxu0 0.0
      %3687 = vmatprep.subr.mxu0 0.0
      %3688 = vmatpush2.msra.mxu0 0.0
      %3689 = vmatprep.subr.mxu0 0.0
      %3690 = vmatpush2.msra.mxu0 0.0
      %3691 = vmatprep.subr.mxu0 0.0
      %3692 = vmatpush2.msra.mxu0 0.0
      %3693 = vmatprep.subr.mxu0 0.0
      %3694 = vmatpush2.msra.mxu0 0.0
      %3695 = vmatprep.subr.mxu0 0.0
      %3696 = vmatpush2.msra.mxu0 0.0
      %3697 = vmatprep.subr.mxu0 0.0
      %3698 = vmatpush2.msra.mxu0 0.0
      %3699 = vmatprep.mubr.f32.mxu0 0.0
      %3700 = vmatmul.mubr.f32.gmra.mxu0 %v3537
      %v3701 = vpop.f32.mrf.mxu0
      %v3702 = vadd.f32 0.0, %v3701
      %v3703 = vpop.f32.mrf.mxu0
      %3704 = vmatprep.mubr.f32.mxu0 0.0
      %3705 = vmatmul.mubr.f32.gmra.mxu0 %v3540
      %v3706 = vpop.f32.mrf.mxu0
      %v3707 = vadd.f32 0.0, %v3706
      %v3708 = vpop.f32.mrf.mxu0
      %3709 = vmatprep.mubr.f32.mxu0 0.0
      %3710 = vmatmul.mubr.f32.gmra.mxu0 %v3543
      %v3711 = vpop.f32.mrf.mxu0
      %v3712 = vadd.f32 0.0, %v3711
      %v3713 = vpop.f32.mrf.mxu0
      %3714 = vmatprep.mubr.f32.mxu0 0.0
      %3715 = vmatmul.mubr.f32.gmra.mxu0 %v3546
      %v3716 = vpop.f32.mrf.mxu0
      %v3717 = vadd.f32 0.0, %v3716
      %v3718 = vpop.f32.mrf.mxu0
      %3719 = vmatprep.mubr.f32.mxu0 0.0
      %3720 = vmatmul.mubr.f32.gmra.mxu0 %v3549
      %v3721 = vpop.f32.mrf.mxu0
      %v3722 = vadd.f32 0.0, %v3721
      %v3723 = vpop.f32.mrf.mxu0
      %3724 = vmatprep.mubr.f32.mxu0 0.0
      %3725 = vmatmul.mubr.f32.gmra.mxu0 %v3552
      %v3726 = vpop.f32.mrf.mxu0
      %v3727 = vadd.f32 0.0, %v3726
      %v3728 = vpop.f32.mrf.mxu0
      %3729 = vmatprep.mubr.f32.mxu0 0.0
      %3730 = vmatmul.mubr.f32.gmra.mxu0 %v3555
      %v3731 = vpop.f32.mrf.mxu0
      %v3732 = vadd.f32 0.0, %v3731
      %v3733 = vpop.f32.mrf.mxu0
      %3734 = vmatprep.mubr.f32.mxu0 0.0
      %3735 = vmatmul.mubr.f32.gmra.mxu0 %v3558
      %v3736 = vpop.f32.mrf.mxu0
      %v3737 = vadd.f32 0.0, %v3736
      %v3738 = vpop.f32.mrf.mxu0
      %3739 = vmatprep.mubr.f32.mxu0 0.0
      %3740 = vmatmul.mubr.f32.gmra.mxu0 %v3561
      %v3741 = vpop.f32.mrf.mxu0
      %v3742 = vadd.f32 0.0, %v3741
      %v3743 = vpop.f32.mrf.mxu0
      %3744 = vmatprep.mubr.f32.mxu0 0.0
      %3745 = vmatmul.mubr.f32.gmra.mxu0 %v3564
      %v3746 = vpop.f32.mrf.mxu0
      %v3747 = vadd.f32 0.0, %v3746
      %v3748 = vpop.f32.mrf.mxu0
      %3749 = vmatprep.mubr.f32.mxu0 0.0
      %3750 = vmatmul.mubr.f32.gmra.mxu0 %v3567
      %v3751 = vpop.f32.mrf.mxu0
      %v3752 = vadd.f32 0.0, %v3751
      %v3753 = vpop.f32.mrf.mxu0
      %3754 = vmatprep.mubr.f32.mxu0 0.0
      %3755 = vmatmul.mubr.f32.gmra.mxu0 %v3570
      %v3756 = vpop.f32.mrf.mxu0
      %v3757 = vadd.f32 0.0, %v3756
      %v3758 = vpop.f32.mrf.mxu0
      %3759 = vmatprep.mubr.f32.mxu0 0.0
      %3760 = vmatmul.mubr.f32.gmra.mxu0 %v3573
      %v3761 = vpop.f32.mrf.mxu0
      %v3762 = vadd.f32 0.0, %v3761
      %v3763 = vpop.f32.mrf.mxu0
      %3764 = vmatprep.mubr.f32.mxu0 0.0
      %3765 = vmatmul.mubr.f32.gmra.mxu0 %v3576
      %v3766 = vpop.f32.mrf.mxu0
      %v3767 = vadd.f32 0.0, %v3766
      %v3768 = vpop.f32.mrf.mxu0
      %3769 = vmatprep.mubr.f32.mxu0 0.0
      %3770 = vmatmul.mubr.f32.gmra.mxu0 %v3579
      %v3771 = vpop.f32.mrf.mxu0
      %v3772 = vadd.f32 0.0, %v3771
      %v3773 = vpop.f32.mrf.mxu0
      %3774 = vmatprep.mubr.f32.mxu0 0.0
      %3775 = vmatmul.mubr.f32.gmra.mxu0 %v3582
      %v3776 = vpop.f32.mrf.mxu0
      %v3777 = vadd.f32 0.0, %v3776
      %v3778 = vpop.f32.mrf.mxu0
      %3779 = vmatprep.mubr.f32.mxu0 0.0
      %3780 = vmatmul.mubr.f32.gmra.mxu0 %v3585
      %v3781 = vpop.f32.mrf.mxu0
      %v3782 = vadd.f32 0.0, %v3781
      %v3783 = vpop.f32.mrf.mxu0
      %3784 = vmatprep.mubr.f32.mxu0 0.0
      %3785 = vmatmul.mubr.f32.gmra.mxu0 %v3588
      %v3786 = vpop.f32.mrf.mxu0
      %v3787 = vadd.f32 0.0, %v3786
      %v3788 = vpop.f32.mrf.mxu0
      %3789 = vmatprep.mubr.f32.mxu0 0.0
      %3790 = vmatmul.mubr.f32.gmra.mxu0 %v3591
      %v3791 = vpop.f32.mrf.mxu0
      %v3792 = vadd.f32 0.0, %v3791
      %v3793 = vpop.f32.mrf.mxu0
      %3794 = vmatprep.mubr.f32.mxu0 0.0
      %3795 = vmatmul.mubr.f32.gmra.mxu0 %v3594
      %v3796 = vpop.f32.mrf.mxu0
      %v3797 = vadd.f32 0.0, %v3796
      %v3798 = vpop.f32.mrf.mxu0
      %3799 = vmatprep.mubr.f32.mxu0 0.0
      %3800 = vmatmul.mubr.f32.gmra.mxu0 %v3597
      %v3801 = vpop.f32.mrf.mxu0
      %v3802 = vadd.f32 0.0, %v3801
      %v3803 = vpop.f32.mrf.mxu0
      %3804 = vmatprep.mubr.f32.mxu0 0.0
      %3805 = vmatmul.mubr.f32.gmra.mxu0 %v3600
      %v3806 = vpop.f32.mrf.mxu0
      %v3807 = vadd.f32 0.0, %v3806
      %v3808 = vpop.f32.mrf.mxu0
      %3809 = vmatprep.mubr.f32.mxu0 0.0
      %3810 = vmatmul.mubr.f32.gmra.mxu0 %v3603
      %v3811 = vpop.f32.mrf.mxu0
      %v3812 = vadd.f32 0.0, %v3811
      %v3813 = vpop.f32.mrf.mxu0
      %3814 = vmatprep.mubr.f32.mxu0 0.0
      %3815 = vmatmul.mubr.f32.gmra.mxu0 %v3606
      %v3816 = vpop.f32.mrf.mxu0
      %v3817 = vadd.f32 0.0, %v3816
      %v3818 = vpop.f32.mrf.mxu0
      %3819 = vmatprep.mubr.f32.mxu0 0.0
      %3820 = vmatmul.mubr.f32.gmra.mxu0 %v3609
      %v3821 = vpop.f32.mrf.mxu0
      %v3822 = vadd.f32 0.0, %v3821
      %v3823 = vpop.f32.mrf.mxu0
      %3824 = vmatprep.mubr.f32.mxu0 0.0
      %3825 = vmatmul.mubr.f32.gmra.mxu0 %v3612
      %v3826 = vpop.f32.mrf.mxu0
      %v3827 = vadd.f32 0.0, %v3826
      %v3828 = vpop.f32.mrf.mxu0
      %3829 = vmatprep.mubr.f32.mxu0 0.0
      %3830 = vmatmul.mubr.f32.gmra.mxu0 %v3615
      %v3831 = vpop.f32.mrf.mxu0
      %v3832 = vadd.f32 0.0, %v3831
      %v3833 = vpop.f32.mrf.mxu0
      %3834 = vmatprep.mubr.f32.mxu0 0.0
      %3835 = vmatmul.mubr.f32.gmra.mxu0 %v3618
      %v3836 = vpop.f32.mrf.mxu0
      %v3837 = vadd.f32 0.0, %v3836
      %v3838 = vpop.f32.mrf.mxu0
      %3839 = vmatprep.mubr.f32.mxu0 0.0
      %3840 = vmatmul.mubr.f32.gmra.mxu0 %v3621
      %v3841 = vpop.f32.mrf.mxu0
      %v3842 = vadd.f32 0.0, %v3841
      %v3843 = vpop.f32.mrf.mxu0
      %3844 = vmatprep.mubr.f32.mxu0 0.0
      %3845 = vmatmul.mubr.f32.gmra.mxu0 %v3624
      %v3846 = vpop.f32.mrf.mxu0
      %v3847 = vadd.f32 0.0, %v3846
      %v3848 = vpop.f32.mrf.mxu0
      %3849 = vmatprep.mubr.f32.mxu0 0.0
      %3850 = vmatmul.mubr.f32.gmra.mxu0 %v3627
      %v3851 = vpop.f32.mrf.mxu0
      %v3852 = vadd.f32 0.0, %v3851
      %v3853 = vpop.f32.mrf.mxu0
      %3854 = vmatprep.mubr.f32.mxu0 0.0
      %3855 = vmatmul.mubr.f32.gmra.mxu0 %v3630
      %v3856 = vpop.f32.mrf.mxu0
      %v3857 = vadd.f32 0.0, %v3856
      %v3858 = vpop.f32.mrf.mxu0
      %3859 = vdwg.mxu0
      %v3860 = vadd.f32 %v3469, %v3702
      %v3861 = vadd.f32 %v3470, %v3707
      %v3862 = vadd.f32 %v3471, %v3712
      %v3863 = vadd.f32 %v3472, %v3717
      %v3864 = vadd.f32 %v3473, %v3722
      %v3865 = vadd.f32 %v3474, %v3727
      %v3866 = vadd.f32 %v3475, %v3732
      %v3867 = vadd.f32 %v3476, %v3737
      %v3868 = vadd.f32 %v3477, %v3742
      %v3869 = vadd.f32 %v3478, %v3747
      %v3870 = vadd.f32 %v3479, %v3752
      %v3871 = vadd.f32 %v3480, %v3757
      %v3872 = vadd.f32 %v3481, %v3762
      %v3873 = vadd.f32 %v3482, %v3767
      %v3874 = vadd.f32 %v3483, %v3772
      %v3875 = vadd.f32 %v3484, %v3777
      %v3876 = vadd.f32 %v3485, %v3782
      %v3877 = vadd.f32 %v3486, %v3787
      %v3878 = vadd.f32 %v3487, %v3792
      %v3879 = vadd.f32 %v3488, %v3797
      %v3880 = vadd.f32 %v3489, %v3802
      %v3881 = vadd.f32 %v3490, %v3807
      %v3882 = vadd.f32 %v3491, %v3812
      %v3883 = vadd.f32 %v3492, %v3817
      %v3884 = vadd.f32 %v3493, %v3822
      %v3885 = vadd.f32 %v3494, %v3827
      %v3886 = vadd.f32 %v3495, %v3832
      %v3887 = vadd.f32 %v3496, %v3837
      %v3888 = vadd.f32 %v3497, %v3842
      %v3889 = vadd.f32 %v3498, %v3847
      %v3890 = vadd.f32 %v3499, %v3852
      %v3891 = vadd.f32 %v3500, %v3857
      %v3892 = vld [vmem:[%s3501 + $0x8] sm:$0xff]
      %v3893 = vld [vmem:[%s3501 + $0x10] sm:$0xff]
      %v3894 = vld [vmem:[%s3501 + $0x28] sm:$0xff]
      %v3895 = vld [vmem:[%s3501 + $0x30] sm:$0xff]
      %v3896 = vld [vmem:[%s3501 + $0x48] sm:$0xff]
      %v3897 = vld [vmem:[%s3501 + $0x50] sm:$0xff]
      %v3898 = vld [vmem:[%s3501 + $0x68] sm:$0xff]
      %v3899 = vld [vmem:[%s3501 + $0x70] sm:$0xff]
      %v3900 = vld [vmem:[%s3501 + $0x88] sm:$0xff]
      %v3901 = vld [vmem:[%s3501 + $0x90] sm:$0xff]
      %v3902 = vld [vmem:[%s3501 + $0xa8] sm:$0xff]
      %v3903 = vld [vmem:[%s3501 + $0xb0] sm:$0xff]
      %v3904 = vld [vmem:[%s3501 + $0xc8] sm:$0xff]
      %v3905 = vld [vmem:[%s3501 + $0xd0] sm:$0xff]
      %v3906 = vld [vmem:[%s3501 + $0xe8] sm:$0xff]
      %v3907 = vld [vmem:[%s3501 + $0xf0] sm:$0xff]
      %v3908 = vld [vmem:[%s3501 + $0x108] sm:$0xff]
      %v3909 = vld [vmem:[%s3501 + $0x110] sm:$0xff]
      %v3910 = vld [vmem:[%s3501 + $0x128] sm:$0xff]
      %v3911 = vld [vmem:[%s3501 + $0x130] sm:$0xff]
      %v3912 = vld [vmem:[%s3501 + $0x148] sm:$0xff]
      %v3913 = vld [vmem:[%s3501 + $0x150] sm:$0xff]
      %v3914 = vld [vmem:[%s3501 + $0x168] sm:$0xff]
      %v3915 = vld [vmem:[%s3501 + $0x170] sm:$0xff]
      %v3916 = vld [vmem:[%s3501 + $0x188] sm:$0xff]
      %v3917 = vld [vmem:[%s3501 + $0x190] sm:$0xff]
      %v3918 = vld [vmem:[%s3501 + $0x1a8] sm:$0xff]
      %v3919 = vld [vmem:[%s3501 + $0x1b0] sm:$0xff]
      %v3920 = vld [vmem:[%s3501 + $0x1c8] sm:$0xff]
      %v3921 = vld [vmem:[%s3501 + $0x1d0] sm:$0xff]
      %v3922 = vld [vmem:[%s3501 + $0x1e8] sm:$0xff]
      %v3923 = vld [vmem:[%s3501 + $0x1f0] sm:$0xff]
      %s3924 = scalar_lea.vmem %s5, 28
      %v3925 = vld [vmem:[%s3924] sm:$0xf]
      %v3927 = vsel %vm329, %v3892, 0
      %v3930 = vsel %vm329, %v3893, 0
      %v3933 = vsel %vm329, %v3894, 0
      %v3936 = vsel %vm329, %v3895, 0
      %v3939 = vsel %vm329, %v3896, 0
      %v3942 = vsel %vm329, %v3897, 0
      %v3945 = vsel %vm329, %v3898, 0
      %v3948 = vsel %vm329, %v3899, 0
      %v3951 = vsel %vm329, %v3900, 0
      %v3954 = vsel %vm329, %v3901, 0
      %v3957 = vsel %vm329, %v3902, 0
      %v3960 = vsel %vm329, %v3903, 0
      %v3963 = vsel %vm329, %v3904, 0
      %v3966 = vsel %vm329, %v3905, 0
      %v3969 = vsel %vm329, %v3906, 0
      %v3972 = vsel %vm329, %v3907, 0
      %v3975 = vsel %vm329, %v3908, 0
      %v3978 = vsel %vm329, %v3909, 0
      %v3981 = vsel %vm329, %v3910, 0
      %v3984 = vsel %vm329, %v3911, 0
      %v3987 = vsel %vm329, %v3912, 0
      %v3990 = vsel %vm329, %v3913, 0
      %v3993 = vsel %vm329, %v3914, 0
      %v3996 = vsel %vm329, %v3915, 0
      %v3999 = vsel %vm329, %v3916, 0
      %v4002 = vsel %vm329, %v3917, 0
      %v4005 = vsel %vm329, %v3918, 0
      %v4008 = vsel %vm329, %v3919, 0
      %v4011 = vsel %vm329, %v3920, 0
      %v4014 = vsel %vm329, %v3921, 0
      %v4017 = vsel %vm329, %v3922, 0
      %v4020 = vsel %vm329, %v3923, 0
      %v4023 = vsel %vm503, %v3925, 0
      %4025 = vmatprep.subr.mxu0 0.0
      %4026 = vmatpush1.msra.mxu0 0.0
      %4027 = vmatprep.subr.mxu0 0.0
      %4028 = vmatpush1.msra.mxu0 0.0
      %4029 = vmatprep.subr.mxu0 0.0
      %4030 = vmatpush1.msra.mxu0 0.0
      %4031 = vmatprep.subr.mxu0 0.0
      %4032 = vmatpush1.msra.mxu0 0.0
      %4033 = vmatprep.subr.mxu0 0.0
      %4034 = vmatpush1.msra.mxu0 0.0
      %4035 = vmatprep.subr.mxu0 0.0
      %4036 = vmatpush1.msra.mxu0 0.0
      %4037 = vmatprep.subr.mxu0 0.0
      %4038 = vmatpush1.msra.mxu0 0.0
      %4039 = vmatprep.subr.mxu0 0.0
      %4040 = vmatpush1.msra.mxu0 0.0
      %4041 = vmatprep.subr.mxu0 0.0
      %4042 = vmatpush1.msra.mxu0 0.0
      %4043 = vmatprep.subr.mxu0 0.0
      %4044 = vmatpush1.msra.mxu0 0.0
      %4045 = vmatprep.subr.mxu0 0.0
      %4046 = vmatpush1.msra.mxu0 0.0
      %4047 = vmatprep.subr.mxu0 0.0
      %4048 = vmatpush1.msra.mxu0 0.0
      %4049 = vmatprep.subr.mxu0 0.0
      %4050 = vmatpush1.msra.mxu0 0.0
      %4051 = vmatprep.subr.mxu0 0.0
      %4052 = vmatpush1.msra.mxu0 0.0
      %4053 = vmatprep.subr.mxu0 0.0
      %4054 = vmatpush1.msra.mxu0 0.0
      %4055 = vmatprep.subr.mxu0 0.0
      %4056 = vmatpush1.msra.mxu0 %v4023
      %4057 = vmatprep.subr.mxu0 0.0
      %4058 = vmatpush2.msra.mxu0 0.0
      %4059 = vmatprep.subr.mxu0 0.0
      %4060 = vmatpush2.msra.mxu0 0.0
      %4061 = vmatprep.subr.mxu0 0.0
      %4062 = vmatpush2.msra.mxu0 0.0
      %4063 = vmatprep.subr.mxu0 0.0
      %4064 = vmatpush2.msra.mxu0 0.0
      %4065 = vmatprep.subr.mxu0 0.0
      %4066 = vmatpush2.msra.mxu0 0.0
      %4067 = vmatprep.subr.mxu0 0.0
      %4068 = vmatpush2.msra.mxu0 0.0
      %4069 = vmatprep.subr.mxu0 0.0
      %4070 = vmatpush2.msra.mxu0 0.0
      %4071 = vmatprep.subr.mxu0 0.0
      %4072 = vmatpush2.msra.mxu0 0.0
      %4073 = vmatprep.subr.mxu0 0.0
      %4074 = vmatpush2.msra.mxu0 0.0
      %4075 = vmatprep.subr.mxu0 0.0
      %4076 = vmatpush2.msra.mxu0 0.0
      %4077 = vmatprep.subr.mxu0 0.0
      %4078 = vmatpush2.msra.mxu0 0.0
      %4079 = vmatprep.subr.mxu0 0.0
      %4080 = vmatpush2.msra.mxu0 0.0
      %4081 = vmatprep.subr.mxu0 0.0
      %4082 = vmatpush2.msra.mxu0 0.0
      %4083 = vmatprep.subr.mxu0 0.0
      %4084 = vmatpush2.msra.mxu0 0.0
      %4085 = vmatprep.subr.mxu0 0.0
      %4086 = vmatpush2.msra.mxu0 0.0
      %4087 = vmatprep.subr.mxu0 0.0
      %4088 = vmatpush2.msra.mxu0 0.0
      %4089 = vmatprep.mubr.f32.mxu0 0.0
      %4090 = vmatmul.mubr.f32.gmra.mxu0 %v3927
      %v4091 = vpop.f32.mrf.mxu0
      %v4092 = vadd.f32 0.0, %v4091
      %v4093 = vpop.f32.mrf.mxu0
      %4094 = vmatprep.mubr.f32.mxu0 0.0
      %4095 = vmatmul.mubr.f32.gmra.mxu0 %v3930
      %v4096 = vpop.f32.mrf.mxu0
      %v4097 = vadd.f32 0.0, %v4096
      %v4098 = vpop.f32.mrf.mxu0
      %4099 = vmatprep.mubr.f32.mxu0 0.0
      %4100 = vmatmul.mubr.f32.gmra.mxu0 %v3933
      %v4101 = vpop.f32.mrf.mxu0
      %v4102 = vadd.f32 0.0, %v4101
      %v4103 = vpop.f32.mrf.mxu0
      %4104 = vmatprep.mubr.f32.mxu0 0.0
      %4105 = vmatmul.mubr.f32.gmra.mxu0 %v3936
      %v4106 = vpop.f32.mrf.mxu0
      %v4107 = vadd.f32 0.0, %v4106
      %v4108 = vpop.f32.mrf.mxu0
      %4109 = vmatprep.mubr.f32.mxu0 0.0
      %4110 = vmatmul.mubr.f32.gmra.mxu0 %v3939
      %v4111 = vpop.f32.mrf.mxu0
      %v4112 = vadd.f32 0.0, %v4111
      %v4113 = vpop.f32.mrf.mxu0
      %4114 = vmatprep.mubr.f32.mxu0 0.0
      %4115 = vmatmul.mubr.f32.gmra.mxu0 %v3942
      %v4116 = vpop.f32.mrf.mxu0
      %v4117 = vadd.f32 0.0, %v4116
      %v4118 = vpop.f32.mrf.mxu0
      %4119 = vmatprep.mubr.f32.mxu0 0.0
      %4120 = vmatmul.mubr.f32.gmra.mxu0 %v3945
      %v4121 = vpop.f32.mrf.mxu0
      %v4122 = vadd.f32 0.0, %v4121
      %v4123 = vpop.f32.mrf.mxu0
      %4124 = vmatprep.mubr.f32.mxu0 0.0
      %4125 = vmatmul.mubr.f32.gmra.mxu0 %v3948
      %v4126 = vpop.f32.mrf.mxu0
      %v4127 = vadd.f32 0.0, %v4126
      %v4128 = vpop.f32.mrf.mxu0
      %4129 = vmatprep.mubr.f32.mxu0 0.0
      %4130 = vmatmul.mubr.f32.gmra.mxu0 %v3951
      %v4131 = vpop.f32.mrf.mxu0
      %v4132 = vadd.f32 0.0, %v4131
      %v4133 = vpop.f32.mrf.mxu0
      %4134 = vmatprep.mubr.f32.mxu0 0.0
      %4135 = vmatmul.mubr.f32.gmra.mxu0 %v3954
      %v4136 = vpop.f32.mrf.mxu0
      %v4137 = vadd.f32 0.0, %v4136
      %v4138 = vpop.f32.mrf.mxu0
      %4139 = vmatprep.mubr.f32.mxu0 0.0
      %4140 = vmatmul.mubr.f32.gmra.mxu0 %v3957
      %v4141 = vpop.f32.mrf.mxu0
      %v4142 = vadd.f32 0.0, %v4141
      %v4143 = vpop.f32.mrf.mxu0
      %4144 = vmatprep.mubr.f32.mxu0 0.0
      %4145 = vmatmul.mubr.f32.gmra.mxu0 %v3960
      %v4146 = vpop.f32.mrf.mxu0
      %v4147 = vadd.f32 0.0, %v4146
      %v4148 = vpop.f32.mrf.mxu0
      %4149 = vmatprep.mubr.f32.mxu0 0.0
      %4150 = vmatmul.mubr.f32.gmra.mxu0 %v3963
      %v4151 = vpop.f32.mrf.mxu0
      %v4152 = vadd.f32 0.0, %v4151
      %v4153 = vpop.f32.mrf.mxu0
      %4154 = vmatprep.mubr.f32.mxu0 0.0
      %4155 = vmatmul.mubr.f32.gmra.mxu0 %v3966
      %v4156 = vpop.f32.mrf.mxu0
      %v4157 = vadd.f32 0.0, %v4156
      %v4158 = vpop.f32.mrf.mxu0
      %4159 = vmatprep.mubr.f32.mxu0 0.0
      %4160 = vmatmul.mubr.f32.gmra.mxu0 %v3969
      %v4161 = vpop.f32.mrf.mxu0
      %v4162 = vadd.f32 0.0, %v4161
      %v4163 = vpop.f32.mrf.mxu0
      %4164 = vmatprep.mubr.f32.mxu0 0.0
      %4165 = vmatmul.mubr.f32.gmra.mxu0 %v3972
      %v4166 = vpop.f32.mrf.mxu0
      %v4167 = vadd.f32 0.0, %v4166
      %v4168 = vpop.f32.mrf.mxu0
      %4169 = vmatprep.mubr.f32.mxu0 0.0
      %4170 = vmatmul.mubr.f32.gmra.mxu0 %v3975
      %v4171 = vpop.f32.mrf.mxu0
      %v4172 = vadd.f32 0.0, %v4171
      %v4173 = vpop.f32.mrf.mxu0
      %4174 = vmatprep.mubr.f32.mxu0 0.0
      %4175 = vmatmul.mubr.f32.gmra.mxu0 %v3978
      %v4176 = vpop.f32.mrf.mxu0
      %v4177 = vadd.f32 0.0, %v4176
      %v4178 = vpop.f32.mrf.mxu0
      %4179 = vmatprep.mubr.f32.mxu0 0.0
      %4180 = vmatmul.mubr.f32.gmra.mxu0 %v3981
      %v4181 = vpop.f32.mrf.mxu0
      %v4182 = vadd.f32 0.0, %v4181
      %v4183 = vpop.f32.mrf.mxu0
      %4184 = vmatprep.mubr.f32.mxu0 0.0
      %4185 = vmatmul.mubr.f32.gmra.mxu0 %v3984
      %v4186 = vpop.f32.mrf.mxu0
      %v4187 = vadd.f32 0.0, %v4186
      %v4188 = vpop.f32.mrf.mxu0
      %4189 = vmatprep.mubr.f32.mxu0 0.0
      %4190 = vmatmul.mubr.f32.gmra.mxu0 %v3987
      %v4191 = vpop.f32.mrf.mxu0
      %v4192 = vadd.f32 0.0, %v4191
      %v4193 = vpop.f32.mrf.mxu0
      %4194 = vmatprep.mubr.f32.mxu0 0.0
      %4195 = vmatmul.mubr.f32.gmra.mxu0 %v3990
      %v4196 = vpop.f32.mrf.mxu0
      %v4197 = vadd.f32 0.0, %v4196
      %v4198 = vpop.f32.mrf.mxu0
      %4199 = vmatprep.mubr.f32.mxu0 0.0
      %4200 = vmatmul.mubr.f32.gmra.mxu0 %v3993
      %v4201 = vpop.f32.mrf.mxu0
      %v4202 = vadd.f32 0.0, %v4201
      %v4203 = vpop.f32.mrf.mxu0
      %4204 = vmatprep.mubr.f32.mxu0 0.0
      %4205 = vmatmul.mubr.f32.gmra.mxu0 %v3996
      %v4206 = vpop.f32.mrf.mxu0
      %v4207 = vadd.f32 0.0, %v4206
      %v4208 = vpop.f32.mrf.mxu0
      %4209 = vmatprep.mubr.f32.mxu0 0.0
      %4210 = vmatmul.mubr.f32.gmra.mxu0 %v3999
      %v4211 = vpop.f32.mrf.mxu0
      %v4212 = vadd.f32 0.0, %v4211
      %v4213 = vpop.f32.mrf.mxu0
      %4214 = vmatprep.mubr.f32.mxu0 0.0
      %4215 = vmatmul.mubr.f32.gmra.mxu0 %v4002
      %v4216 = vpop.f32.mrf.mxu0
      %v4217 = vadd.f32 0.0, %v4216
      %v4218 = vpop.f32.mrf.mxu0
      %4219 = vmatprep.mubr.f32.mxu0 0.0
      %4220 = vmatmul.mubr.f32.gmra.mxu0 %v4005
      %v4221 = vpop.f32.mrf.mxu0
      %v4222 = vadd.f32 0.0, %v4221
      %v4223 = vpop.f32.mrf.mxu0
      %4224 = vmatprep.mubr.f32.mxu0 0.0
      %4225 = vmatmul.mubr.f32.gmra.mxu0 %v4008
      %v4226 = vpop.f32.mrf.mxu0
      %v4227 = vadd.f32 0.0, %v4226
      %v4228 = vpop.f32.mrf.mxu0
      %4229 = vmatprep.mubr.f32.mxu0 0.0
      %4230 = vmatmul.mubr.f32.gmra.mxu0 %v4011
      %v4231 = vpop.f32.mrf.mxu0
      %v4232 = vadd.f32 0.0, %v4231
      %v4233 = vpop.f32.mrf.mxu0
      %4234 = vmatprep.mubr.f32.mxu0 0.0
      %4235 = vmatmul.mubr.f32.gmra.mxu0 %v4014
      %v4236 = vpop.f32.mrf.mxu0
      %v4237 = vadd.f32 0.0, %v4236
      %v4238 = vpop.f32.mrf.mxu0
      %4239 = vmatprep.mubr.f32.mxu0 0.0
      %4240 = vmatmul.mubr.f32.gmra.mxu0 %v4017
      %v4241 = vpop.f32.mrf.mxu0
      %v4242 = vadd.f32 0.0, %v4241
      %v4243 = vpop.f32.mrf.mxu0
      %4244 = vmatprep.mubr.f32.mxu0 0.0
      %4245 = vmatmul.mubr.f32.gmra.mxu0 %v4020
      %v4246 = vpop.f32.mrf.mxu0
      %v4247 = vadd.f32 0.0, %v4246
      %v4248 = vpop.f32.mrf.mxu0
      %4249 = vdwg.mxu0
      %v4250 = vadd.f32 %v3860, %v4092
      %v4251 = vadd.f32 %v3861, %v4097
      %v4252 = vadd.f32 %v3862, %v4102
      %v4253 = vadd.f32 %v3863, %v4107
      %v4254 = vadd.f32 %v3864, %v4112
      %v4255 = vadd.f32 %v3865, %v4117
      %v4256 = vadd.f32 %v3866, %v4122
      %v4257 = vadd.f32 %v3867, %v4127
      %v4258 = vadd.f32 %v3868, %v4132
      %v4259 = vadd.f32 %v3869, %v4137
      %v4260 = vadd.f32 %v3870, %v4142
      %v4261 = vadd.f32 %v3871, %v4147
      %v4262 = vadd.f32 %v3872, %v4152
      %v4263 = vadd.f32 %v3873, %v4157
      %v4264 = vadd.f32 %v3874, %v4162
      %v4265 = vadd.f32 %v3875, %v4167
      %v4266 = vadd.f32 %v3876, %v4172
      %v4267 = vadd.f32 %v3877, %v4177
      %v4268 = vadd.f32 %v3878, %v4182
      %v4269 = vadd.f32 %v3879, %v4187
      %v4270 = vadd.f32 %v3880, %v4192
      %v4271 = vadd.f32 %v3881, %v4197
      %v4272 = vadd.f32 %v3882, %v4202
      %v4273 = vadd.f32 %v3883, %v4207
      %v4274 = vadd.f32 %v3884, %v4212
      %v4275 = vadd.f32 %v3885, %v4217
      %v4276 = vadd.f32 %v3886, %v4222
      %v4277 = vadd.f32 %v3887, %v4227
      %v4278 = vadd.f32 %v3888, %v4232
      %v4279 = vadd.f32 %v3889, %v4237
      %v4280 = vadd.f32 %v3890, %v4242
      %v4281 = vadd.f32 %v3891, %v4247
      %v4282 = vld [vmem:[%s3501 + $0x9] sm:$0xff]
      %v4283 = vld [vmem:[%s3501 + $0x11] sm:$0xff]
      %v4284 = vld [vmem:[%s3501 + $0x29] sm:$0xff]
      %v4285 = vld [vmem:[%s3501 + $0x31] sm:$0xff]
      %v4286 = vld [vmem:[%s3501 + $0x49] sm:$0xff]
      %v4287 = vld [vmem:[%s3501 + $0x51] sm:$0xff]
      %v4288 = vld [vmem:[%s3501 + $0x69] sm:$0xff]
      %v4289 = vld [vmem:[%s3501 + $0x71] sm:$0xff]
      %v4290 = vld [vmem:[%s3501 + $0x89] sm:$0xff]
      %v4291 = vld [vmem:[%s3501 + $0x91] sm:$0xff]
      %v4292 = vld [vmem:[%s3501 + $0xa9] sm:$0xff]
      %v4293 = vld [vmem:[%s3501 + $0xb1] sm:$0xff]
      %v4294 = vld [vmem:[%s3501 + $0xc9] sm:$0xff]
      %v4295 = vld [vmem:[%s3501 + $0xd1] sm:$0xff]
      %v4296 = vld [vmem:[%s3501 + $0xe9] sm:$0xff]
      %v4297 = vld [vmem:[%s3501 + $0xf1] sm:$0xff]
      %v4298 = vld [vmem:[%s3501 + $0x109] sm:$0xff]
      %v4299 = vld [vmem:[%s3501 + $0x111] sm:$0xff]
      %v4300 = vld [vmem:[%s3501 + $0x129] sm:$0xff]
      %v4301 = vld [vmem:[%s3501 + $0x131] sm:$0xff]
      %v4302 = vld [vmem:[%s3501 + $0x149] sm:$0xff]
      %v4303 = vld [vmem:[%s3501 + $0x151] sm:$0xff]
      %v4304 = vld [vmem:[%s3501 + $0x169] sm:$0xff]
      %v4305 = vld [vmem:[%s3501 + $0x171] sm:$0xff]
      %v4306 = vld [vmem:[%s3501 + $0x189] sm:$0xff]
      %v4307 = vld [vmem:[%s3501 + $0x191] sm:$0xff]
      %v4308 = vld [vmem:[%s3501 + $0x1a9] sm:$0xff]
      %v4309 = vld [vmem:[%s3501 + $0x1b1] sm:$0xff]
      %v4310 = vld [vmem:[%s3501 + $0x1c9] sm:$0xff]
      %v4311 = vld [vmem:[%s3501 + $0x1d1] sm:$0xff]
      %v4312 = vld [vmem:[%s3501 + $0x1e9] sm:$0xff]
      %v4313 = vld [vmem:[%s3501 + $0x1f1] sm:$0xff]
      %s4314 = scalar_lea.vmem %s5, 32
      %v4315 = vld [vmem:[%s4314] sm:$0xf]
      %v4317 = vsel %vm329, %v4282, 0
      %v4320 = vsel %vm329, %v4283, 0
      %v4323 = vsel %vm329, %v4284, 0
      %v4326 = vsel %vm329, %v4285, 0
      %v4329 = vsel %vm329, %v4286, 0
      %v4332 = vsel %vm329, %v4287, 0
      %v4335 = vsel %vm329, %v4288, 0
      %v4338 = vsel %vm329, %v4289, 0
      %v4341 = vsel %vm329, %v4290, 0
      %v4344 = vsel %vm329, %v4291, 0
      %v4347 = vsel %vm329, %v4292, 0
      %v4350 = vsel %vm329, %v4293, 0
      %v4353 = vsel %vm329, %v4294, 0
      %v4356 = vsel %vm329, %v4295, 0
      %v4359 = vsel %vm329, %v4296, 0
      %v4362 = vsel %vm329, %v4297, 0
      %v4365 = vsel %vm329, %v4298, 0
      %v4368 = vsel %vm329, %v4299, 0
      %v4371 = vsel %vm329, %v4300, 0
      %v4374 = vsel %vm329, %v4301, 0
      %v4377 = vsel %vm329, %v4302, 0
      %v4380 = vsel %vm329, %v4303, 0
      %v4383 = vsel %vm329, %v4304, 0
      %v4386 = vsel %vm329, %v4305, 0
      %v4389 = vsel %vm329, %v4306, 0
      %v4392 = vsel %vm329, %v4307, 0
      %v4395 = vsel %vm329, %v4308, 0
      %v4398 = vsel %vm329, %v4309, 0
      %v4401 = vsel %vm329, %v4310, 0
      %v4404 = vsel %vm329, %v4311, 0
      %v4407 = vsel %vm329, %v4312, 0
      %v4410 = vsel %vm329, %v4313, 0
      %v4413 = vsel %vm503, %v4315, 0
      %4415 = vmatprep.subr.mxu0 0.0
      %4416 = vmatpush1.msra.mxu0 0.0
      %4417 = vmatprep.subr.mxu0 0.0
      %4418 = vmatpush1.msra.mxu0 0.0
      %4419 = vmatprep.subr.mxu0 0.0
      %4420 = vmatpush1.msra.mxu0 0.0
      %4421 = vmatprep.subr.mxu0 0.0
      %4422 = vmatpush1.msra.mxu0 0.0
      %4423 = vmatprep.subr.mxu0 0.0
      %4424 = vmatpush1.msra.mxu0 0.0
      %4425 = vmatprep.subr.mxu0 0.0
      %4426 = vmatpush1.msra.mxu0 0.0
      %4427 = vmatprep.subr.mxu0 0.0
      %4428 = vmatpush1.msra.mxu0 0.0
      %4429 = vmatprep.subr.mxu0 0.0
      %4430 = vmatpush1.msra.mxu0 0.0
      %4431 = vmatprep.subr.mxu0 0.0
      %4432 = vmatpush1.msra.mxu0 0.0
      %4433 = vmatprep.subr.mxu0 0.0
      %4434 = vmatpush1.msra.mxu0 0.0
      %4435 = vmatprep.subr.mxu0 0.0
      %4436 = vmatpush1.msra.mxu0 0.0
      %4437 = vmatprep.subr.mxu0 0.0
      %4438 = vmatpush1.msra.mxu0 0.0
      %4439 = vmatprep.subr.mxu0 0.0
      %4440 = vmatpush1.msra.mxu0 0.0
      %4441 = vmatprep.subr.mxu0 0.0
      %4442 = vmatpush1.msra.mxu0 0.0
      %4443 = vmatprep.subr.mxu0 0.0
      %4444 = vmatpush1.msra.mxu0 0.0
      %4445 = vmatprep.subr.mxu0 0.0
      %4446 = vmatpush1.msra.mxu0 %v4413
      %4447 = vmatprep.subr.mxu0 0.0
      %4448 = vmatpush2.msra.mxu0 0.0
      %4449 = vmatprep.subr.mxu0 0.0
      %4450 = vmatpush2.msra.mxu0 0.0
      %4451 = vmatprep.subr.mxu0 0.0
      %4452 = vmatpush2.msra.mxu0 0.0
      %4453 = vmatprep.subr.mxu0 0.0
      %4454 = vmatpush2.msra.mxu0 0.0
      %4455 = vmatprep.subr.mxu0 0.0
      %4456 = vmatpush2.msra.mxu0 0.0
      %4457 = vmatprep.subr.mxu0 0.0
      %4458 = vmatpush2.msra.mxu0 0.0
      %4459 = vmatprep.subr.mxu0 0.0
      %4460 = vmatpush2.msra.mxu0 0.0
      %4461 = vmatprep.subr.mxu0 0.0
      %4462 = vmatpush2.msra.mxu0 0.0
      %4463 = vmatprep.subr.mxu0 0.0
      %4464 = vmatpush2.msra.mxu0 0.0
      %4465 = vmatprep.subr.mxu0 0.0
      %4466 = vmatpush2.msra.mxu0 0.0
      %4467 = vmatprep.subr.mxu0 0.0
      %4468 = vmatpush2.msra.mxu0 0.0
      %4469 = vmatprep.subr.mxu0 0.0
      %4470 = vmatpush2.msra.mxu0 0.0
      %4471 = vmatprep.subr.mxu0 0.0
      %4472 = vmatpush2.msra.mxu0 0.0
      %4473 = vmatprep.subr.mxu0 0.0
      %4474 = vmatpush2.msra.mxu0 0.0
      %4475 = vmatprep.subr.mxu0 0.0
      %4476 = vmatpush2.msra.mxu0 0.0
      %4477 = vmatprep.subr.mxu0 0.0
      %4478 = vmatpush2.msra.mxu0 0.0
      %4479 = vmatprep.mubr.f32.mxu0 0.0
      %4480 = vmatmul.mubr.f32.gmra.mxu0 %v4317
      %v4481 = vpop.f32.mrf.mxu0
      %v4482 = vadd.f32 0.0, %v4481
      %v4483 = vpop.f32.mrf.mxu0
      %4484 = vmatprep.mubr.f32.mxu0 0.0
      %4485 = vmatmul.mubr.f32.gmra.mxu0 %v4320
      %v4486 = vpop.f32.mrf.mxu0
      %v4487 = vadd.f32 0.0, %v4486
      %v4488 = vpop.f32.mrf.mxu0
      %4489 = vmatprep.mubr.f32.mxu0 0.0
      %4490 = vmatmul.mubr.f32.gmra.mxu0 %v4323
      %v4491 = vpop.f32.mrf.mxu0
      %v4492 = vadd.f32 0.0, %v4491
      %v4493 = vpop.f32.mrf.mxu0
      %4494 = vmatprep.mubr.f32.mxu0 0.0
      %4495 = vmatmul.mubr.f32.gmra.mxu0 %v4326
      %v4496 = vpop.f32.mrf.mxu0
      %v4497 = vadd.f32 0.0, %v4496
      %v4498 = vpop.f32.mrf.mxu0
      %4499 = vmatprep.mubr.f32.mxu0 0.0
      %4500 = vmatmul.mubr.f32.gmra.mxu0 %v4329
      %v4501 = vpop.f32.mrf.mxu0
      %v4502 = vadd.f32 0.0, %v4501
      %v4503 = vpop.f32.mrf.mxu0
      %4504 = vmatprep.mubr.f32.mxu0 0.0
      %4505 = vmatmul.mubr.f32.gmra.mxu0 %v4332
      %v4506 = vpop.f32.mrf.mxu0
      %v4507 = vadd.f32 0.0, %v4506
      %v4508 = vpop.f32.mrf.mxu0
      %4509 = vmatprep.mubr.f32.mxu0 0.0
      %4510 = vmatmul.mubr.f32.gmra.mxu0 %v4335
      %v4511 = vpop.f32.mrf.mxu0
      %v4512 = vadd.f32 0.0, %v4511
      %v4513 = vpop.f32.mrf.mxu0
      %4514 = vmatprep.mubr.f32.mxu0 0.0
      %4515 = vmatmul.mubr.f32.gmra.mxu0 %v4338
      %v4516 = vpop.f32.mrf.mxu0
      %v4517 = vadd.f32 0.0, %v4516
      %v4518 = vpop.f32.mrf.mxu0
      %4519 = vmatprep.mubr.f32.mxu0 0.0
      %4520 = vmatmul.mubr.f32.gmra.mxu0 %v4341
      %v4521 = vpop.f32.mrf.mxu0
      %v4522 = vadd.f32 0.0, %v4521
      %v4523 = vpop.f32.mrf.mxu0
      %4524 = vmatprep.mubr.f32.mxu0 0.0
      %4525 = vmatmul.mubr.f32.gmra.mxu0 %v4344
      %v4526 = vpop.f32.mrf.mxu0
      %v4527 = vadd.f32 0.0, %v4526
      %v4528 = vpop.f32.mrf.mxu0
      %4529 = vmatprep.mubr.f32.mxu0 0.0
      %4530 = vmatmul.mubr.f32.gmra.mxu0 %v4347
      %v4531 = vpop.f32.mrf.mxu0
      %v4532 = vadd.f32 0.0, %v4531
      %v4533 = vpop.f32.mrf.mxu0
      %4534 = vmatprep.mubr.f32.mxu0 0.0
      %4535 = vmatmul.mubr.f32.gmra.mxu0 %v4350
      %v4536 = vpop.f32.mrf.mxu0
      %v4537 = vadd.f32 0.0, %v4536
      %v4538 = vpop.f32.mrf.mxu0
      %4539 = vmatprep.mubr.f32.mxu0 0.0
      %4540 = vmatmul.mubr.f32.gmra.mxu0 %v4353
      %v4541 = vpop.f32.mrf.mxu0
      %v4542 = vadd.f32 0.0, %v4541
      %v4543 = vpop.f32.mrf.mxu0
      %4544 = vmatprep.mubr.f32.mxu0 0.0
      %4545 = vmatmul.mubr.f32.gmra.mxu0 %v4356
      %v4546 = vpop.f32.mrf.mxu0
      %v4547 = vadd.f32 0.0, %v4546
      %v4548 = vpop.f32.mrf.mxu0
      %4549 = vmatprep.mubr.f32.mxu0 0.0
      %4550 = vmatmul.mubr.f32.gmra.mxu0 %v4359
      %v4551 = vpop.f32.mrf.mxu0
      %v4552 = vadd.f32 0.0, %v4551
      %v4553 = vpop.f32.mrf.mxu0
      %4554 = vmatprep.mubr.f32.mxu0 0.0
      %4555 = vmatmul.mubr.f32.gmra.mxu0 %v4362
      %v4556 = vpop.f32.mrf.mxu0
      %v4557 = vadd.f32 0.0, %v4556
      %v4558 = vpop.f32.mrf.mxu0
      %4559 = vmatprep.mubr.f32.mxu0 0.0
      %4560 = vmatmul.mubr.f32.gmra.mxu0 %v4365
      %v4561 = vpop.f32.mrf.mxu0
      %v4562 = vadd.f32 0.0, %v4561
      %v4563 = vpop.f32.mrf.mxu0
      %4564 = vmatprep.mubr.f32.mxu0 0.0
      %4565 = vmatmul.mubr.f32.gmra.mxu0 %v4368
      %v4566 = vpop.f32.mrf.mxu0
      %v4567 = vadd.f32 0.0, %v4566
      %v4568 = vpop.f32.mrf.mxu0
      %4569 = vmatprep.mubr.f32.mxu0 0.0
      %4570 = vmatmul.mubr.f32.gmra.mxu0 %v4371
      %v4571 = vpop.f32.mrf.mxu0
      %v4572 = vadd.f32 0.0, %v4571
      %v4573 = vpop.f32.mrf.mxu0
      %4574 = vmatprep.mubr.f32.mxu0 0.0
      %4575 = vmatmul.mubr.f32.gmra.mxu0 %v4374
      %v4576 = vpop.f32.mrf.mxu0
      %v4577 = vadd.f32 0.0, %v4576
      %v4578 = vpop.f32.mrf.mxu0
      %4579 = vmatprep.mubr.f32.mxu0 0.0
      %4580 = vmatmul.mubr.f32.gmra.mxu0 %v4377
      %v4581 = vpop.f32.mrf.mxu0
      %v4582 = vadd.f32 0.0, %v4581
      %v4583 = vpop.f32.mrf.mxu0
      %4584 = vmatprep.mubr.f32.mxu0 0.0
      %4585 = vmatmul.mubr.f32.gmra.mxu0 %v4380
      %v4586 = vpop.f32.mrf.mxu0
      %v4587 = vadd.f32 0.0, %v4586
      %v4588 = vpop.f32.mrf.mxu0
      %4589 = vmatprep.mubr.f32.mxu0 0.0
      %4590 = vmatmul.mubr.f32.gmra.mxu0 %v4383
      %v4591 = vpop.f32.mrf.mxu0
      %v4592 = vadd.f32 0.0, %v4591
      %v4593 = vpop.f32.mrf.mxu0
      %4594 = vmatprep.mubr.f32.mxu0 0.0
      %4595 = vmatmul.mubr.f32.gmra.mxu0 %v4386
      %v4596 = vpop.f32.mrf.mxu0
      %v4597 = vadd.f32 0.0, %v4596
      %v4598 = vpop.f32.mrf.mxu0
      %4599 = vmatprep.mubr.f32.mxu0 0.0
      %4600 = vmatmul.mubr.f32.gmra.mxu0 %v4389
      %v4601 = vpop.f32.mrf.mxu0
      %v4602 = vadd.f32 0.0, %v4601
      %v4603 = vpop.f32.mrf.mxu0
      %4604 = vmatprep.mubr.f32.mxu0 0.0
      %4605 = vmatmul.mubr.f32.gmra.mxu0 %v4392
      %v4606 = vpop.f32.mrf.mxu0
      %v4607 = vadd.f32 0.0, %v4606
      %v4608 = vpop.f32.mrf.mxu0
      %4609 = vmatprep.mubr.f32.mxu0 0.0
      %4610 = vmatmul.mubr.f32.gmra.mxu0 %v4395
      %v4611 = vpop.f32.mrf.mxu0
      %v4612 = vadd.f32 0.0, %v4611
      %v4613 = vpop.f32.mrf.mxu0
      %4614 = vmatprep.mubr.f32.mxu0 0.0
      %4615 = vmatmul.mubr.f32.gmra.mxu0 %v4398
      %v4616 = vpop.f32.mrf.mxu0
      %v4617 = vadd.f32 0.0, %v4616
      %v4618 = vpop.f32.mrf.mxu0
      %4619 = vmatprep.mubr.f32.mxu0 0.0
      %4620 = vmatmul.mubr.f32.gmra.mxu0 %v4401
      %v4621 = vpop.f32.mrf.mxu0
      %v4622 = vadd.f32 0.0, %v4621
      %v4623 = vpop.f32.mrf.mxu0
      %4624 = vmatprep.mubr.f32.mxu0 0.0
      %4625 = vmatmul.mubr.f32.gmra.mxu0 %v4404
      %v4626 = vpop.f32.mrf.mxu0
      %v4627 = vadd.f32 0.0, %v4626
      %v4628 = vpop.f32.mrf.mxu0
      %4629 = vmatprep.mubr.f32.mxu0 0.0
      %4630 = vmatmul.mubr.f32.gmra.mxu0 %v4407
      %v4631 = vpop.f32.mrf.mxu0
      %v4632 = vadd.f32 0.0, %v4631
      %v4633 = vpop.f32.mrf.mxu0
      %4634 = vmatprep.mubr.f32.mxu0 0.0
      %4635 = vmatmul.mubr.f32.gmra.mxu0 %v4410
      %v4636 = vpop.f32.mrf.mxu0
      %v4637 = vadd.f32 0.0, %v4636
      %v4638 = vpop.f32.mrf.mxu0
      %4639 = vdwg.mxu0
      %v4640 = vadd.f32 %v4250, %v4482
      %v4641 = vadd.f32 %v4251, %v4487
      %v4642 = vadd.f32 %v4252, %v4492
      %v4643 = vadd.f32 %v4253, %v4497
      %v4644 = vadd.f32 %v4254, %v4502
      %v4645 = vadd.f32 %v4255, %v4507
      %v4646 = vadd.f32 %v4256, %v4512
      %v4647 = vadd.f32 %v4257, %v4517
      %v4648 = vadd.f32 %v4258, %v4522
      %v4649 = vadd.f32 %v4259, %v4527
      %v4650 = vadd.f32 %v4260, %v4532
      %v4651 = vadd.f32 %v4261, %v4537
      %v4652 = vadd.f32 %v4262, %v4542
      %v4653 = vadd.f32 %v4263, %v4547
      %v4654 = vadd.f32 %v4264, %v4552
      %v4655 = vadd.f32 %v4265, %v4557
      %v4656 = vadd.f32 %v4266, %v4562
      %v4657 = vadd.f32 %v4267, %v4567
      %v4658 = vadd.f32 %v4268, %v4572
      %v4659 = vadd.f32 %v4269, %v4577
      %v4660 = vadd.f32 %v4270, %v4582
      %v4661 = vadd.f32 %v4271, %v4587
      %v4662 = vadd.f32 %v4272, %v4592
      %v4663 = vadd.f32 %v4273, %v4597
      %v4664 = vadd.f32 %v4274, %v4602
      %v4665 = vadd.f32 %v4275, %v4607
      %v4666 = vadd.f32 %v4276, %v4612
      %v4667 = vadd.f32 %v4277, %v4617
      %v4668 = vadd.f32 %v4278, %v4622
      %v4669 = vadd.f32 %v4279, %v4627
      %v4670 = vadd.f32 %v4280, %v4632
      %v4671 = vadd.f32 %v4281, %v4637
      %v4672 = vld [vmem:[%s287] sm:$0x1]
      %v4674 = vlaneseq
      %v4675 = vshrl.u32 %v4674, 7
      %v4676 = vsub.s32 0, %v4675
      %v4677 = vrot.slane %v4672, %v4676
      %v4679 = vadd.f32 %v4640, %v4677
      %v4680 = vadd.f32 %v4641, %v4677
      %v4681 = vadd.f32 %v4642, %v4677
      %v4682 = vadd.f32 %v4643, %v4677
      %v4683 = vadd.f32 %v4644, %v4677
      %v4684 = vadd.f32 %v4645, %v4677
      %v4685 = vadd.f32 %v4646, %v4677
      %v4686 = vadd.f32 %v4647, %v4677
      %v4687 = vadd.f32 %v4648, %v4677
      %v4688 = vadd.f32 %v4649, %v4677
      %v4689 = vadd.f32 %v4650, %v4677
      %v4690 = vadd.f32 %v4651, %v4677
      %v4691 = vadd.f32 %v4652, %v4677
      %v4692 = vadd.f32 %v4653, %v4677
      %v4693 = vadd.f32 %v4654, %v4677
      %v4694 = vadd.f32 %v4655, %v4677
      %v4695 = vadd.f32 %v4656, %v4677
      %v4696 = vadd.f32 %v4657, %v4677
      %v4697 = vadd.f32 %v4658, %v4677
      %v4698 = vadd.f32 %v4659, %v4677
      %v4699 = vadd.f32 %v4660, %v4677
      %v4700 = vadd.f32 %v4661, %v4677
      %v4701 = vadd.f32 %v4662, %v4677
      %v4702 = vadd.f32 %v4663, %v4677
      %v4703 = vadd.f32 %v4664, %v4677
      %v4704 = vadd.f32 %v4665, %v4677
      %v4705 = vadd.f32 %v4666, %v4677
      %v4706 = vadd.f32 %v4667, %v4677
      %v4707 = vadd.f32 %v4668, %v4677
      %v4708 = vadd.f32 %v4669, %v4677
      %v4709 = vadd.f32 %v4670, %v4677
      %v4710 = vadd.f32 %v4671, %v4677
      %vm4711 = vcmask 64512
      %4712 = vst.msk [vmem:[%s292] sm:$0xff] %vm4711, %v4679
      %4713 = vst.msk [vmem:[%s292 + $0x8] sm:$0xff] %vm4711, %v4680
      %4714 = vst.msk [vmem:[%s292 + $0x10] sm:$0xff] %vm4711, %v4681
      %4715 = vst.msk [vmem:[%s292 + $0x18] sm:$0xff] %vm4711, %v4682
      %4716 = vst.msk [vmem:[%s292 + $0x20] sm:$0xff] %vm4711, %v4683
      %4717 = vst.msk [vmem:[%s292 + $0x28] sm:$0xff] %vm4711, %v4684
      %4718 = vst.msk [vmem:[%s292 + $0x30] sm:$0xff] %vm4711, %v4685
      %4719 = vst.msk [vmem:[%s292 + $0x38] sm:$0xff] %vm4711, %v4686
      %4720 = vst.msk [vmem:[%s292 + $0x40] sm:$0xff] %vm4711, %v4687
      %4721 = vst.msk [vmem:[%s292 + $0x48] sm:$0xff] %vm4711, %v4688
      %4722 = vst.msk [vmem:[%s292 + $0x50] sm:$0xff] %vm4711, %v4689
      %4723 = vst.msk [vmem:[%s292 + $0x58] sm:$0xff] %vm4711, %v4690
      %4724 = vst.msk [vmem:[%s292 + $0x60] sm:$0xff] %vm4711, %v4691
      %4725 = vst.msk [vmem:[%s292 + $0x68] sm:$0xff] %vm4711, %v4692
      %4726 = vst.msk [vmem:[%s292 + $0x70] sm:$0xff] %vm4711, %v4693
      %4727 = vst.msk [vmem:[%s292 + $0x78] sm:$0xff] %vm4711, %v4694
      %4728 = vst.msk [vmem:[%s292 + $0x80] sm:$0xff] %vm4711, %v4695
      %4729 = vst.msk [vmem:[%s292 + $0x88] sm:$0xff] %vm4711, %v4696
      %4730 = vst.msk [vmem:[%s292 + $0x90] sm:$0xff] %vm4711, %v4697
      %4731 = vst.msk [vmem:[%s292 + $0x98] sm:$0xff] %vm4711, %v4698
      %4732 = vst.msk [vmem:[%s292 + $0xa0] sm:$0xff] %vm4711, %v4699
      %4733 = vst.msk [vmem:[%s292 + $0xa8] sm:$0xff] %vm4711, %v4700
      %4734 = vst.msk [vmem:[%s292 + $0xb0] sm:$0xff] %vm4711, %v4701
      %4735 = vst.msk [vmem:[%s292 + $0xb8] sm:$0xff] %vm4711, %v4702
      %4736 = vst.msk [vmem:[%s292 + $0xc0] sm:$0xff] %vm4711, %v4703
      %4737 = vst.msk [vmem:[%s292 + $0xc8] sm:$0xff] %vm4711, %v4704
      %4738 = vst.msk [vmem:[%s292 + $0xd0] sm:$0xff] %vm4711, %v4705
      %4739 = vst.msk [vmem:[%s292 + $0xd8] sm:$0xff] %vm4711, %v4706
      %4740 = vst.msk [vmem:[%s292 + $0xe0] sm:$0xff] %vm4711, %v4707
      %4741 = vst.msk [vmem:[%s292 + $0xe8] sm:$0xff] %vm4711, %v4708
      %4742 = vst.msk [vmem:[%s292 + $0xf0] sm:$0xff] %vm4711, %v4709
      %4743 = vst.msk [vmem:[%s292 + $0xf8] sm:$0xff] %vm4711, %v4710
      %p4744 = scmp.lt.s32.totalorder %s18, 7
      %s4745 = scalar_select %p4744, %s18, 7
      %s4746 = smul.addr %s4745, 32
      %s4747 = smul.addr %s4746, 8
      %s4748 = scalar_lea.vmem %s7, %s4747
      // Predicated region
      $region49: #{tpu_custom_call.1} parent=47 // pred_check
        %p4749 = pneg %p193
      $region50: #{tpu_custom_call.1} parent=47 // pred_check_branch
        %4751 = sbr.rel (%p4749) target = $region52
      $region51: #{tpu_custom_call.1} parent=47 // pred_region
        _
      $region52: #{tpu_custom_call.1} parent=47 // pred_fallthru
        _
    $region48: #{tpu_custom_call.1} parent=5 // pred_fallthru
      _
    %p4752 = scmp.le.s32.totalorder 2, %s13
    // Predicated region
    $region53: #{tpu_custom_call.1} parent=5 // pred_check
      %p4753 = pneg %p4752
    $region54: #{tpu_custom_call.1} parent=5 // pred_check_branch
      %4755 = sbr.rel (%p4753) target = $region56
    $region55: #{tpu_custom_call.1} parent=5 // pred_region
      %s4756 = ssub.s32 %s13, 2
      // Predicated region
      $region57: #{tpu_custom_call.1} parent=55 // pred_check
        %p4757 = pneg %p199
      $region58: #{tpu_custom_call.1} parent=55 // pred_check_branch
        %4759 = sbr.rel (%p4757) target = $region60
      $region59: #{tpu_custom_call.1} parent=55 // pred_region
        %p4760 = scmp.lt.s32.totalorder %s19, 7
        %s4761 = scalar_select %p4760, %s19, 7
        %s4762 = smul.addr %s4761, 32
        %s4763 = smul.addr %s4762, 8
        %s4764 = scalar_lea.vmem %s7, %s4763
      $region60: #{tpu_custom_call.1} parent=55 // pred_fallthru
        _
    $region56: #{tpu_custom_call.1} parent=5 // pred_fallthru
      _
  $region6: #{tpu_custom_call.1} parent=0 // loop_footer
    %s17 = sadd.s32 1, %s13
  $region7: #{tpu_custom_call.1} parent=0 // loop_footer_branch
    %12 = sbr.rel target = $region3
  $region8: #{tpu_custom_call.1} parent=0 // loop_exit
    _

</llo_original>
